<compile_context>
chip_gen: v7x
topology: tpu7x:2x2x1
jax: 0.10.0
libtpu: 0.0.40
codegen_flags: <defaults>
</compile_context>

<pallas_src>
import jax
import jax.numpy as jnp
from jax import lax
from jax.experimental import pallas as pl
from jax.experimental.pallas import tpu as pltpu

# Small, module-consistent shapes.
BATCH = 2
SEQ = 8
INPUT_SIZE = 16      # X_train.shape[2]
HIDDEN = 128         # hidden_size in the PyTorch module
NUM_LAYERS = 2
NUM_CLASSES = 4
LANES = 128          # lane-dense FC output width


def eeg_lstm_kernel(x_ref, wih0_ref, b0_ref, wbig_ref, b1_ref,
                    wfc_ref, bfc_ref, out_ref, proj_ref):
    """Whole forward pass in one kernel invocation.

    x_ref:    (T*Bp, Fp)  time-major input, batch padded to 8 sublanes, F padded to 128 lanes
    wih0_ref: (Fp, 4H)    layer-0 input->gates weights (transposed, gate cols [i,f,o,g])
    b0_ref:   (1, 4H)     layer-0 combined bias (b_ih + b_hh), gate order [i,f,o,g]
    wbig_ref: (2H, 8H)    wavefront-fused recurrent weight [[W_hh0^T, W_ih1^T],[0, W_hh1^T]]
    b1_ref:   (1, 4H)     layer-1 combined bias, gate order [i,f,o,g]
    wfc_ref:  (H, 128)    FC weight, zero-padded to 128 output lanes
    bfc_ref:  (1, 128)
    out_ref:  (Bp, 128)   lane-dense output slab; wrapper slices [:B, :C]
    proj_ref: (T*Bp, 4H)  VMEM scratch: precomputed layer-0 input projection (+ bias)
    """
    H = HIDDEN
    Bp = out_ref.shape[0]
    T = x_ref.shape[0] // Bp

    # Layer-0 input projection for all timesteps in one lane-dense matmul
    # (off the serial chain).  Bias folded in here.
    proj_ref[...] = (
        jnp.dot(x_ref[...], wih0_ref[...], preferred_element_type=jnp.float32)
        + b0_ref[...])

    # Hoist the small bias broadcast out of the loop (broadcast_in_dim is not CSE'd).
    # The large weights are read at their point of use: they exceed the vreg file,
    # so they stream VMEM -> MXU per push rather than being pinned live.
    b1 = jnp.broadcast_to(b1_ref[...], (Bp, 4 * H))

    def gates_to_hc(gates, c_prev):
        # Gate columns are pre-permuted to [i, f, o, g]: sigmoid on the first 3H
        # lanes, tanh on the last H lanes (instead of whole-slab sigmoid AND tanh).
        sig = jax.nn.sigmoid(gates[:, 0:3 * H])
        i = sig[:, 0 * H:1 * H]
        f = sig[:, 1 * H:2 * H]
        o = sig[:, 2 * H:3 * H]
        g = jnp.tanh(gates[:, 3 * H:4 * H])
        c_new = f * c_prev + i * g
        h_new = o * jnp.tanh(c_new)
        return h_new, c_new

    z = jnp.zeros((Bp, H), jnp.float32)

    # Peeled step 0, layer 0: h0 = c0 = 0 => gates are just the input projection
    # (the h @ W_hh0 matmul is skipped entirely).
    h0, c0 = gates_to_hc(proj_ref[pl.ds(0, Bp), :], z)
    h1, c1 = z, z

    # Wavefront recurrence: one fused (Bp,2H)@(2H,8H) matmul per step produces
    #   m[:, 4H:] -> layer-1 gates at step t   (h0(t)@W_ih1 + h1(t-1)@W_hh1)
    #   m[:, :4H] -> layer-0 recurrent term for step t+1 (h0(t)@W_hh0)
    # Static Python loop (T=8): all proj slices are static, sublane-aligned loads.
    for t in range(T):
        xh = jnp.concatenate([h0, h1], axis=-1)          # (Bp, 2H), lane aligned
        m = jnp.dot(xh, wbig_ref[...], preferred_element_type=jnp.float32)
        # Layer 1 at step t (inter-layer dropout is identity in eval mode).
        g1 = m[:, 4 * H:] + b1
        h1, c1 = gates_to_hc(g1, c1)
        if t + 1 < T:
            # Layer 0 at step t+1 (the last step's layer-0 half is simply unused).
            start = (t + 1) * Bp                          # Python int: static slice
            g0 = proj_ref[pl.ds(start, Bp), :] + m[:, :4 * H]
            h0, c0 = gates_to_hc(g0, c0)

    # fc head: Dropout (identity, eval) + Linear on the last timestep of layer 2,
    # into a lane-dense 128-wide slab (unmasked vector stores).
    out_ref[...] = (
        jnp.dot(h1, wfc_ref[...], preferred_element_type=jnp.float32)
        + bfc_ref[...])


def eeg_lstm_forward(x, params):
    """x: (B, T, F) float32, batch_first like PyTorch. Returns (B, NUM_CLASSES)."""
    (wih0, whh0, bih0, bhh0,
     wih1, whh1, bih1, bhh1,
     wfc, bfc) = params

    H = HIDDEN
    B, T, F = x.shape
    Bp = ((B + 7) // 8) * 8                        # pad batch to sublane width
    Fp = ((F + 127) // 128) * 128                  # pad features to lane width

    x_pad = jnp.zeros((Bp, T, Fp), jnp.float32).at[:B, :, :F].set(x.astype(jnp.float32))
    x_tbf = jnp.transpose(x_pad, (1, 0, 2)).reshape(T * Bp, Fp)   # time-major, flat

    # Permute PyTorch gate order [i, f, g, o] -> [i, f, o, g] (rows of 4H-dim axis),
    # so the kernel can apply sigmoid/tanh to two contiguous lane-aligned slabs.
    def perm_gates(w):
        return jnp.concatenate(
            [w[0 * H:1 * H], w[1 * H:2 * H], w[3 * H:4 * H], w[2 * H:3 * H]], axis=0)

    wih0p = perm_gates(wih0)
    whh0p = perm_gates(whh0)
    b0p = perm_gates(bih0 + bhh0)
    wih1p = perm_gates(wih1)
    whh1p = perm_gates(whh1)
    b1p = perm_gates(bih1 + bhh1)

    # Layer-0 input weight: (Fp, 4H) with zero-padded feature rows.
    wih0_t = jnp.zeros((Fp, 4 * H), jnp.float32).at[:F, :].set(wih0p.T)

    # Wavefront-fused recurrent weight: (2H, 8H) = [[W_hh0^T, W_ih1^T], [0, W_hh1^T]].
    # Columns [:4H] give h0@W_hh0 (next step's layer-0 term); columns [4H:] give
    # layer-1 gates for the current step.
    top = jnp.concatenate([whh0p.T, wih1p.T], axis=1)                         # (H, 8H)
    bot = jnp.concatenate([jnp.zeros((H, 4 * H), jnp.float32), whh1p.T], axis=1)
    wbig = jnp.concatenate([top, bot], axis=0)                                # (2H, 8H)

    # Lane-dense FC head: pad the NUM_CLASSES-wide output to 128 lanes.
    wfc_pad = jnp.zeros((H, LANES), jnp.float32).at[:, :NUM_CLASSES].set(wfc.T)
    bfc_pad = jnp.zeros((1, LANES), jnp.float32).at[:, :NUM_CLASSES].set(bfc)

    args = (
        x_tbf,
        wih0_t, b0p.reshape(1, -1),
        wbig, b1p.reshape(1, -1),
        wfc_pad, bfc_pad,
    )

    vmem = pl.BlockSpec(memory_space=pltpu.MemorySpace.VMEM)
    out = pl.pallas_call(
        eeg_lstm_kernel,
        out_shape=jax.ShapeDtypeStruct((Bp, LANES), jnp.float32),
        in_specs=[vmem] * len(args),
        out_specs=vmem,
        scratch_shapes=[pltpu.VMEM((T * Bp, 4 * H), jnp.float32)],
    )(*args)
    return out[:B, :NUM_CLASSES]


def reference_forward(x, params):
    """Pure-JAX reference matching torch.nn.LSTM semantics (eval mode)."""
    (wih0, whh0, bih0, bhh0,
     wih1, whh1, bih1, bhh1,
     wfc, bfc) = params
    B, T, F = x.shape
    H = HIDDEN

    def lstm_cell(x_t, h, c, wih, whh, bih, bhh):
        gates = x_t @ wih.T + bih + h @ whh.T + bhh
        i = jax.nn.sigmoid(gates[:, 0 * H:1 * H])
        f = jax.nn.sigmoid(gates[:, 1 * H:2 * H])
        g = jnp.tanh(gates[:, 2 * H:3 * H])
        o = jax.nn.sigmoid(gates[:, 3 * H:4 * H])
        c_new = f * c + i * g
        h_new = o * jnp.tanh(c_new)
        return h_new, c_new

    def step(carry, x_t):
        h0, c0, h1, c1 = carry
        h0, c0 = lstm_cell(x_t, h0, c0, wih0, whh0, bih0, bhh0)
        h1, c1 = lstm_cell(h0, h1, c1, wih1, whh1, bih1, bhh1)
        return (h0, c0, h1, c1), h1

    init = tuple(jnp.zeros((B, H), jnp.float32) for _ in range(4))
    (_, _, h1, _), _ = lax.scan(step, init, jnp.transpose(x, (1, 0, 2)))
    return h1 @ wfc.T + bfc


def make_params(key):
    """Deterministic PyTorch-style init: U(-1/sqrt(H), 1/sqrt(H))."""
    k = 1.0 / jnp.sqrt(jnp.float32(HIDDEN))
    keys = jax.random.split(key, 10)

    def u(kk, shape):
        return jax.random.uniform(kk, shape, jnp.float32, -k, k)

    wih0 = u(keys[0], (4 * HIDDEN, INPUT_SIZE))
    whh0 = u(keys[1], (4 * HIDDEN, HIDDEN))
    bih0 = u(keys[2], (4 * HIDDEN,))
    bhh0 = u(keys[3], (4 * HIDDEN,))
    wih1 = u(keys[4], (4 * HIDDEN, HIDDEN))
    whh1 = u(keys[5], (4 * HIDDEN, HIDDEN))
    bih1 = u(keys[6], (4 * HIDDEN,))
    bhh1 = u(keys[7], (4 * HIDDEN,))
    wfc = u(keys[8], (NUM_CLASSES, HIDDEN))
    bfc = u(keys[9], (NUM_CLASSES,))
    return (wih0, whh0, bih0, bhh0, wih1, whh1, bih1, bhh1, wfc, bfc)


if __name__ == "__main__":
    root = jax.random.PRNGKey(0)
    kx, kp = jax.random.split(root)

    x = jax.random.normal(kx, (BATCH, SEQ, INPUT_SIZE), jnp.float32)
    params = make_params(kp)

    out = eeg_lstm_forward(x, params)
    out = jax.block_until_ready(out)

    ref = reference_forward(x, params)
    assert out.shape == (BATCH, NUM_CLASSES)
    assert jnp.allclose(out, ref, rtol=1e-5, atol=1e-5), (out, ref)

    print("KERNEL_OK")
</pallas_src>

<mosaic_0001>
module attributes {stable_mosaic.version = 11 : i64} {
  func.func @eeg_lstm_kernel(%arg0: memref<64x128xf32, #tpu.memory_space<vmem>>, %arg1: memref<128x512xf32, #tpu.memory_space<vmem>>, %arg2: memref<1x512xf32, #tpu.memory_space<vmem>>, %arg3: memref<256x1024xf32, #tpu.memory_space<vmem>>, %arg4: memref<1x512xf32, #tpu.memory_space<vmem>>, %arg5: memref<128x128xf32, #tpu.memory_space<vmem>>, %arg6: memref<1x128xf32, #tpu.memory_space<vmem>>, %arg7: memref<8x128xf32, #tpu.memory_space<vmem>>, %arg8: memref<64x512xf32, #tpu.memory_space<vmem>>) attributes {dimension_semantics = [], scalar_prefetch = 0 : i64, scratch_operands = 1 : i64, tpu.core_type = #tpu.core_type<tc>} {
    %c0 = arith.constant 0 : index
    %c0_0 = arith.constant 0 : index
    %0 = vector.load %arg0[%c0, %c0_0] : memref<64x128xf32, #tpu.memory_space<vmem>>, vector<64x128xf32>
    %c0_1 = arith.constant 0 : index
    %c0_2 = arith.constant 0 : index
    %1 = vector.load %arg1[%c0_1, %c0_2] : memref<128x512xf32, #tpu.memory_space<vmem>>, vector<128x512xf32>
    %cst = arith.constant dense<0.000000e+00> : vector<64x512xf32>
    %2 = tpu.matmul %0, %1, %cst {dimension_numbers = #tpu.dot_dimension_numbers<[1], [0], [0], [1], [0, 0, 1, 1], [], []>} : vector<64x128xf32>, vector<128x512xf32>, vector<64x512xf32> -> vector<64x512xf32>
    %c0_3 = arith.constant 0 : index
    %c0_4 = arith.constant 0 : index
    %3 = vector.load %arg2[%c0_3, %c0_4] : memref<1x512xf32, #tpu.memory_space<vmem>>, vector<1x512xf32>
    %4 = vector.broadcast %3 : vector<1x512xf32> to vector<64x512xf32>
    %5 = arith.addf %2, %4 : vector<64x512xf32>
    %c0_5 = arith.constant 0 : index
    %c0_6 = arith.constant 0 : index
    %6 = vector.load %arg8[%c0_5, %c0_6] : memref<64x512xf32, #tpu.memory_space<vmem>>, vector<64x512xf32>
    tpu.vector_store %arg8[%c0_5, %c0_6], %5 {strides = array<i32>} : memref<64x512xf32, #tpu.memory_space<vmem>>, vector<64x512xf32>,
    %c0_7 = arith.constant 0 : index
    %c0_8 = arith.constant 0 : index
    %7 = vector.load %arg4[%c0_7, %c0_8] : memref<1x512xf32, #tpu.memory_space<vmem>>, vector<1x512xf32>
    %8 = vector.shape_cast %7 : vector<1x512xf32> to vector<1x512xf32>
    %9 = vector.broadcast %8 : vector<1x512xf32> to vector<8x512xf32>
    %cst_9 = arith.constant 0.000000e+00 : f32
    %10 = vector.broadcast %cst_9 : f32 to vector<8x128xf32>
    %c0_10 = arith.constant 0 : index
    %c0_11 = arith.constant 0 : index
    %11 = vector.load %arg8[%c0_10, %c0_11] : memref<64x512xf32, #tpu.memory_space<vmem>>, vector<8x512xf32>
    %12 = vector.extract_strided_slice %11 {offsets = [0, 0], sizes = [8, 384], strides = [1, 1]} : vector<8x512xf32> to vector<8x384xf32>
    %13 = arith.negf %12 : vector<8x384xf32>
    %14 = math.exp %13 : vector<8x384xf32>
    %cst_12 = arith.constant 1.000000e+00 : f32
    %15 = vector.broadcast %cst_12 : f32 to vector<8x384xf32>
    %16 = arith.addf %15, %14 : vector<8x384xf32>
    %17 = arith.divf %15, %16 : vector<8x384xf32>
    %18 = vector.extract_strided_slice %17 {offsets = [0, 0], sizes = [8, 128], strides = [1, 1]} : vector<8x384xf32> to vector<8x128xf32>
    %19 = vector.extract_strided_slice %17 {offsets = [0, 128], sizes = [8, 128], strides = [1, 1]} : vector<8x384xf32> to vector<8x128xf32>
    %20 = vector.extract_strided_slice %17 {offsets = [0, 256], sizes = [8, 128], strides = [1, 1]} : vector<8x384xf32> to vector<8x128xf32>
    %21 = vector.extract_strided_slice %11 {offsets = [0, 384], sizes = [8, 128], strides = [1, 1]} : vector<8x512xf32> to vector<8x128xf32>
    %22 = math.tanh %21 : vector<8x128xf32>
    %23 = arith.mulf %19, %10 : vector<8x128xf32>
    %24 = arith.mulf %18, %22 : vector<8x128xf32>
    %25 = arith.addf %23, %24 : vector<8x128xf32>
    %26 = math.tanh %25 : vector<8x128xf32>
    %27 = arith.mulf %20, %26 : vector<8x128xf32>
    %28 = tpu.concatenate %27, %10 in 1 : vector<8x128xf32>, vector<8x128xf32> -> vector<8x256xf32>
    %c0_13 = arith.constant 0 : index
    %c0_14 = arith.constant 0 : index
    %29 = vector.load %arg3[%c0_13, %c0_14] : memref<256x1024xf32, #tpu.memory_space<vmem>>, vector<256x1024xf32>
    %cst_15 = arith.constant dense<0.000000e+00> : vector<8x1024xf32>
    %30 = tpu.matmul %28, %29, %cst_15 {dimension_numbers = #tpu.dot_dimension_numbers<[1], [0], [0], [1], [0, 0, 1, 1], [], []>} : vector<8x256xf32>, vector<256x1024xf32>, vector<8x1024xf32> -> vector<8x1024xf32>
    %31 = vector.extract_strided_slice %30 {offsets = [0, 512], sizes = [8, 512], strides = [1, 1]} : vector<8x1024xf32> to vector<8x512xf32>
    %32 = arith.addf %31, %9 : vector<8x512xf32>
    %33 = vector.extract_strided_slice %32 {offsets = [0, 0], sizes = [8, 384], strides = [1, 1]} : vector<8x512xf32> to vector<8x384xf32>
    %34 = arith.negf %33 : vector<8x384xf32>
    %35 = math.exp %34 : vector<8x384xf32>
    %cst_16 = arith.constant 1.000000e+00 : f32
    %36 = vector.broadcast %cst_16 : f32 to vector<8x384xf32>
    %37 = arith.addf %36, %35 : vector<8x384xf32>
    %38 = arith.divf %36, %37 : vector<8x384xf32>
    %39 = vector.extract_strided_slice %38 {offsets = [0, 0], sizes = [8, 128], strides = [1, 1]} : vector<8x384xf32> to vector<8x128xf32>
    %40 = vector.extract_strided_slice %38 {offsets = [0, 128], sizes = [8, 128], strides = [1, 1]} : vector<8x384xf32> to vector<8x128xf32>
    %41 = vector.extract_strided_slice %38 {offsets = [0, 256], sizes = [8, 128], strides = [1, 1]} : vector<8x384xf32> to vector<8x128xf32>
    %42 = vector.extract_strided_slice %32 {offsets = [0, 384], sizes = [8, 128], strides = [1, 1]} : vector<8x512xf32> to vector<8x128xf32>
    %43 = math.tanh %42 : vector<8x128xf32>
    %44 = arith.mulf %40, %10 : vector<8x128xf32>
    %45 = arith.mulf %39, %43 : vector<8x128xf32>
    %46 = arith.addf %44, %45 : vector<8x128xf32>
    %47 = math.tanh %46 : vector<8x128xf32>
    %48 = arith.mulf %41, %47 : vector<8x128xf32>
    %c8 = arith.constant 8 : index
    %c0_17 = arith.constant 0 : index
    %49 = vector.load %arg8[%c8, %c0_17] : memref<64x512xf32, #tpu.memory_space<vmem>>, vector<8x512xf32>
    %50 = vector.extract_strided_slice %30 {offsets = [0, 0], sizes = [8, 512], strides = [1, 1]} : vector<8x1024xf32> to vector<8x512xf32>
    %51 = arith.addf %49, %50 : vector<8x512xf32>
    %52 = vector.extract_strided_slice %51 {offsets = [0, 0], sizes = [8, 384], strides = [1, 1]} : vector<8x512xf32> to vector<8x384xf32>
    %53 = arith.negf %52 : vector<8x384xf32>
    %54 = math.exp %53 : vector<8x384xf32>
    %cst_18 = arith.constant 1.000000e+00 : f32
    %55 = vector.broadcast %cst_18 : f32 to vector<8x384xf32>
    %56 = arith.addf %55, %54 : vector<8x384xf32>
    %57 = arith.divf %55, %56 : vector<8x384xf32>
    %58 = vector.extract_strided_slice %57 {offsets = [0, 0], sizes = [8, 128], strides = [1, 1]} : vector<8x384xf32> to vector<8x128xf32>
    %59 = vector.extract_strided_slice %57 {offsets = [0, 128], sizes = [8, 128], strides = [1, 1]} : vector<8x384xf32> to vector<8x128xf32>
    %60 = vector.extract_strided_slice %57 {offsets = [0, 256], sizes = [8, 128], strides = [1, 1]} : vector<8x384xf32> to vector<8x128xf32>
    %61 = vector.extract_strided_slice %51 {offsets = [0, 384], sizes = [8, 128], strides = [1, 1]} : vector<8x512xf32> to vector<8x128xf32>
    %62 = math.tanh %61 : vector<8x128xf32>
    %63 = arith.mulf %59, %25 : vector<8x128xf32>
    %64 = arith.mulf %58, %62 : vector<8x128xf32>
    %65 = arith.addf %63, %64 : vector<8x128xf32>
    %66 = math.tanh %65 : vector<8x128xf32>
    %67 = arith.mulf %60, %66 : vector<8x128xf32>
    %68 = tpu.concatenate %67, %48 in 1 : vector<8x128xf32>, vector<8x128xf32> -> vector<8x256xf32>
    %c0_19 = arith.constant 0 : index
    %c0_20 = arith.constant 0 : index
    %69 = vector.load %arg3[%c0_19, %c0_20] : memref<256x1024xf32, #tpu.memory_space<vmem>>, vector<256x1024xf32>
    %cst_21 = arith.constant dense<0.000000e+00> : vector<8x1024xf32>
    %70 = tpu.matmul %68, %69, %cst_21 {dimension_numbers = #tpu.dot_dimension_numbers<[1], [0], [0], [1], [0, 0, 1, 1], [], []>} : vector<8x256xf32>, vector<256x1024xf32>, vector<8x1024xf32> -> vector<8x1024xf32>
    %71 = vector.extract_strided_slice %70 {offsets = [0, 512], sizes = [8, 512], strides = [1, 1]} : vector<8x1024xf32> to vector<8x512xf32>
    %72 = arith.addf %71, %9 : vector<8x512xf32>
    %73 = vector.extract_strided_slice %72 {offsets = [0, 0], sizes = [8, 384], strides = [1, 1]} : vector<8x512xf32> to vector<8x384xf32>
    %74 = arith.negf %73 : vector<8x384xf32>
    %75 = math.exp %74 : vector<8x384xf32>
    %cst_22 = arith.constant 1.000000e+00 : f32
    %76 = vector.broadcast %cst_22 : f32 to vector<8x384xf32>
    %77 = arith.addf %76, %75 : vector<8x384xf32>
    %78 = arith.divf %76, %77 : vector<8x384xf32>
    %79 = vector.extract_strided_slice %78 {offsets = [0, 0], sizes = [8, 128], strides = [1, 1]} : vector<8x384xf32> to vector<8x128xf32>
    %80 = vector.extract_strided_slice %78 {offsets = [0, 128], sizes = [8, 128], strides = [1, 1]} : vector<8x384xf32> to vector<8x128xf32>
    %81 = vector.extract_strided_slice %78 {offsets = [0, 256], sizes = [8, 128], strides = [1, 1]} : vector<8x384xf32> to vector<8x128xf32>
    %82 = vector.extract_strided_slice %72 {offsets = [0, 384], sizes = [8, 128], strides = [1, 1]} : vector<8x512xf32> to vector<8x128xf32>
    %83 = math.tanh %82 : vector<8x128xf32>
    %84 = arith.mulf %80, %46 : vector<8x128xf32>
    %85 = arith.mulf %79, %83 : vector<8x128xf32>
    %86 = arith.addf %84, %85 : vector<8x128xf32>
    %87 = math.tanh %86 : vector<8x128xf32>
    %88 = arith.mulf %81, %87 : vector<8x128xf32>
    %c16 = arith.constant 16 : index
    %c0_23 = arith.constant 0 : index
    %89 = vector.load %arg8[%c16, %c0_23] : memref<64x512xf32, #tpu.memory_space<vmem>>, vector<8x512xf32>
    %90 = vector.extract_strided_slice %70 {offsets = [0, 0], sizes = [8, 512], strides = [1, 1]} : vector<8x1024xf32> to vector<8x512xf32>
    %91 = arith.addf %89, %90 : vector<8x512xf32>
    %92 = vector.extract_strided_slice %91 {offsets = [0, 0], sizes = [8, 384], strides = [1, 1]} : vector<8x512xf32> to vector<8x384xf32>
    %93 = arith.negf %92 : vector<8x384xf32>
    %94 = math.exp %93 : vector<8x384xf32>
    %cst_24 = arith.constant 1.000000e+00 : f32
    %95 = vector.broadcast %cst_24 : f32 to vector<8x384xf32>
    %96 = arith.addf %95, %94 : vector<8x384xf32>
    %97 = arith.divf %95, %96 : vector<8x384xf32>
    %98 = vector.extract_strided_slice %97 {offsets = [0, 0], sizes = [8, 128], strides = [1, 1]} : vector<8x384xf32> to vector<8x128xf32>
    %99 = vector.extract_strided_slice %97 {offsets = [0, 128], sizes = [8, 128], strides = [1, 1]} : vector<8x384xf32> to vector<8x128xf32>
    %100 = vector.extract_strided_slice %97 {offsets = [0, 256], sizes = [8, 128], strides = [1, 1]} : vector<8x384xf32> to vector<8x128xf32>
    %101 = vector.extract_strided_slice %91 {offsets = [0, 384], sizes = [8, 128], strides = [1, 1]} : vector<8x512xf32> to vector<8x128xf32>
    %102 = math.tanh %101 : vector<8x128xf32>
    %103 = arith.mulf %99, %65 : vector<8x128xf32>
    %104 = arith.mulf %98, %102 : vector<8x128xf32>
    %105 = arith.addf %103, %104 : vector<8x128xf32>
    %106 = math.tanh %105 : vector<8x128xf32>
    %107 = arith.mulf %100, %106 : vector<8x128xf32>
    %108 = tpu.concatenate %107, %88 in 1 : vector<8x128xf32>, vector<8x128xf32> -> vector<8x256xf32>
    %c0_25 = arith.constant 0 : index
    %c0_26 = arith.constant 0 : index
    %109 = vector.load %arg3[%c0_25, %c0_26] : memref<256x1024xf32, #tpu.memory_space<vmem>>, vector<256x1024xf32>
    %cst_27 = arith.constant dense<0.000000e+00> : vector<8x1024xf32>
    %110 = tpu.matmul %108, %109, %cst_27 {dimension_numbers = #tpu.dot_dimension_numbers<[1], [0], [0], [1], [0, 0, 1, 1], [], []>} : vector<8x256xf32>, vector<256x1024xf32>, vector<8x1024xf32> -> vector<8x1024xf32>
    %111 = vector.extract_strided_slice %110 {offsets = [0, 512], sizes = [8, 512], strides = [1, 1]} : vector<8x1024xf32> to vector<8x512xf32>
    %112 = arith.addf %111, %9 : vector<8x512xf32>
    %113 = vector.extract_strided_slice %112 {offsets = [0, 0], sizes = [8, 384], strides = [1, 1]} : vector<8x512xf32> to vector<8x384xf32>
    %114 = arith.negf %113 : vector<8x384xf32>
    %115 = math.exp %114 : vector<8x384xf32>
    %cst_28 = arith.constant 1.000000e+00 : f32
    %116 = vector.broadcast %cst_28 : f32 to vector<8x384xf32>
    %117 = arith.addf %116, %115 : vector<8x384xf32>
    %118 = arith.divf %116, %117 : vector<8x384xf32>
    %119 = vector.extract_strided_slice %118 {offsets = [0, 0], sizes = [8, 128], strides = [1, 1]} : vector<8x384xf32> to vector<8x128xf32>
    %120 = vector.extract_strided_slice %118 {offsets = [0, 128], sizes = [8, 128], strides = [1, 1]} : vector<8x384xf32> to vector<8x128xf32>
    %121 = vector.extract_strided_slice %118 {offsets = [0, 256], sizes = [8, 128], strides = [1, 1]} : vector<8x384xf32> to vector<8x128xf32>
    %122 = vector.extract_strided_slice %112 {offsets = [0, 384], sizes = [8, 128], strides = [1, 1]} : vector<8x512xf32> to vector<8x128xf32>
    %123 = math.tanh %122 : vector<8x128xf32>
    %124 = arith.mulf %120, %86 : vector<8x128xf32>
    %125 = arith.mulf %119, %123 : vector<8x128xf32>
    %126 = arith.addf %124, %125 : vector<8x128xf32>
    %127 = math.tanh %126 : vector<8x128xf32>
    %128 = arith.mulf %121, %127 : vector<8x128xf32>
    %c24 = arith.constant 24 : index
    %c0_29 = arith.constant 0 : index
    %129 = vector.load %arg8[%c24, %c0_29] : memref<64x512xf32, #tpu.memory_space<vmem>>, vector<8x512xf32>
    %130 = vector.extract_strided_slice %110 {offsets = [0, 0], sizes = [8, 512], strides = [1, 1]} : vector<8x1024xf32> to vector<8x512xf32>
    %131 = arith.addf %129, %130 : vector<8x512xf32>
    %132 = vector.extract_strided_slice %131 {offsets = [0, 0], sizes = [8, 384], strides = [1, 1]} : vector<8x512xf32> to vector<8x384xf32>
    %133 = arith.negf %132 : vector<8x384xf32>
    %134 = math.exp %133 : vector<8x384xf32>
    %cst_30 = arith.constant 1.000000e+00 : f32
    %135 = vector.broadcast %cst_30 : f32 to vector<8x384xf32>
    %136 = arith.addf %135, %134 : vector<8x384xf32>
    %137 = arith.divf %135, %136 : vector<8x384xf32>
    %138 = vector.extract_strided_slice %137 {offsets = [0, 0], sizes = [8, 128], strides = [1, 1]} : vector<8x384xf32> to vector<8x128xf32>
    %139 = vector.extract_strided_slice %137 {offsets = [0, 128], sizes = [8, 128], strides = [1, 1]} : vector<8x384xf32> to vector<8x128xf32>
    %140 = vector.extract_strided_slice %137 {offsets = [0, 256], sizes = [8, 128], strides = [1, 1]} : vector<8x384xf32> to vector<8x128xf32>
    %141 = vector.extract_strided_slice %131 {offsets = [0, 384], sizes = [8, 128], strides = [1, 1]} : vector<8x512xf32> to vector<8x128xf32>
    %142 = math.tanh %141 : vector<8x128xf32>
    %143 = arith.mulf %139, %105 : vector<8x128xf32>
    %144 = arith.mulf %138, %142 : vector<8x128xf32>
    %145 = arith.addf %143, %144 : vector<8x128xf32>
    %146 = math.tanh %145 : vector<8x128xf32>
    %147 = arith.mulf %140, %146 : vector<8x128xf32>
    %148 = tpu.concatenate %147, %128 in 1 : vector<8x128xf32>, vector<8x128xf32> -> vector<8x256xf32>
    %c0_31 = arith.constant 0 : index
    %c0_32 = arith.constant 0 : index
    %149 = vector.load %arg3[%c0_31, %c0_32] : memref<256x1024xf32, #tpu.memory_space<vmem>>, vector<256x1024xf32>
    %cst_33 = arith.constant dense<0.000000e+00> : vector<8x1024xf32>
    %150 = tpu.matmul %148, %149, %cst_33 {dimension_numbers = #tpu.dot_dimension_numbers<[1], [0], [0], [1], [0, 0, 1, 1], [], []>} : vector<8x256xf32>, vector<256x1024xf32>, vector<8x1024xf32> -> vector<8x1024xf32>
    %151 = vector.extract_strided_slice %150 {offsets = [0, 512], sizes = [8, 512], strides = [1, 1]} : vector<8x1024xf32> to vector<8x512xf32>
    %152 = arith.addf %151, %9 : vector<8x512xf32>
    %153 = vector.extract_strided_slice %152 {offsets = [0, 0], sizes = [8, 384], strides = [1, 1]} : vector<8x512xf32> to vector<8x384xf32>
    %154 = arith.negf %153 : vector<8x384xf32>
    %155 = math.exp %154 : vector<8x384xf32>
    %cst_34 = arith.constant 1.000000e+00 : f32
    %156 = vector.broadcast %cst_34 : f32 to vector<8x384xf32>
    %157 = arith.addf %156, %155 : vector<8x384xf32>
    %158 = arith.divf %156, %157 : vector<8x384xf32>
    %159 = vector.extract_strided_slice %158 {offsets = [0, 0], sizes = [8, 128], strides = [1, 1]} : vector<8x384xf32> to vector<8x128xf32>
    %160 = vector.extract_strided_slice %158 {offsets = [0, 128], sizes = [8, 128], strides = [1, 1]} : vector<8x384xf32> to vector<8x128xf32>
    %161 = vector.extract_strided_slice %158 {offsets = [0, 256], sizes = [8, 128], strides = [1, 1]} : vector<8x384xf32> to vector<8x128xf32>
    %162 = vector.extract_strided_slice %152 {offsets = [0, 384], sizes = [8, 128], strides = [1, 1]} : vector<8x512xf32> to vector<8x128xf32>
    %163 = math.tanh %162 : vector<8x128xf32>
    %164 = arith.mulf %160, %126 : vector<8x128xf32>
    %165 = arith.mulf %159, %163 : vector<8x128xf32>
    %166 = arith.addf %164, %165 : vector<8x128xf32>
    %167 = math.tanh %166 : vector<8x128xf32>
    %168 = arith.mulf %161, %167 : vector<8x128xf32>
    %c32 = arith.constant 32 : index
    %c0_35 = arith.constant 0 : index
    %169 = vector.load %arg8[%c32, %c0_35] : memref<64x512xf32, #tpu.memory_space<vmem>>, vector<8x512xf32>
    %170 = vector.extract_strided_slice %150 {offsets = [0, 0], sizes = [8, 512], strides = [1, 1]} : vector<8x1024xf32> to vector<8x512xf32>
    %171 = arith.addf %169, %170 : vector<8x512xf32>
    %172 = vector.extract_strided_slice %171 {offsets = [0, 0], sizes = [8, 384], strides = [1, 1]} : vector<8x512xf32> to vector<8x384xf32>
    %173 = arith.negf %172 : vector<8x384xf32>
    %174 = math.exp %173 : vector<8x384xf32>
    %cst_36 = arith.constant 1.000000e+00 : f32
    %175 = vector.broadcast %cst_36 : f32 to vector<8x384xf32>
    %176 = arith.addf %175, %174 : vector<8x384xf32>
    %177 = arith.divf %175, %176 : vector<8x384xf32>
    %178 = vector.extract_strided_slice %177 {offsets = [0, 0], sizes = [8, 128], strides = [1, 1]} : vector<8x384xf32> to vector<8x128xf32>
    %179 = vector.extract_strided_slice %177 {offsets = [0, 128], sizes = [8, 128], strides = [1, 1]} : vector<8x384xf32> to vector<8x128xf32>
    %180 = vector.extract_strided_slice %177 {offsets = [0, 256], sizes = [8, 128], strides = [1, 1]} : vector<8x384xf32> to vector<8x128xf32>
    %181 = vector.extract_strided_slice %171 {offsets = [0, 384], sizes = [8, 128], strides = [1, 1]} : vector<8x512xf32> to vector<8x128xf32>
    %182 = math.tanh %181 : vector<8x128xf32>
    %183 = arith.mulf %179, %145 : vector<8x128xf32>
    %184 = arith.mulf %178, %182 : vector<8x128xf32>
    %185 = arith.addf %183, %184 : vector<8x128xf32>
    %186 = math.tanh %185 : vector<8x128xf32>
    %187 = arith.mulf %180, %186 : vector<8x128xf32>
    %188 = tpu.concatenate %187, %168 in 1 : vector<8x128xf32>, vector<8x128xf32> -> vector<8x256xf32>
    %c0_37 = arith.constant 0 : index
    %c0_38 = arith.constant 0 : index
    %189 = vector.load %arg3[%c0_37, %c0_38] : memref<256x1024xf32, #tpu.memory_space<vmem>>, vector<256x1024xf32>
    %cst_39 = arith.constant dense<0.000000e+00> : vector<8x1024xf32>
    %190 = tpu.matmul %188, %189, %cst_39 {dimension_numbers = #tpu.dot_dimension_numbers<[1], [0], [0], [1], [0, 0, 1, 1], [], []>} : vector<8x256xf32>, vector<256x1024xf32>, vector<8x1024xf32> -> vector<8x1024xf32>
    %191 = vector.extract_strided_slice %190 {offsets = [0, 512], sizes = [8, 512], strides = [1, 1]} : vector<8x1024xf32> to vector<8x512xf32>
    %192 = arith.addf %191, %9 : vector<8x512xf32>
    %193 = vector.extract_strided_slice %192 {offsets = [0, 0], sizes = [8, 384], strides = [1, 1]} : vector<8x512xf32> to vector<8x384xf32>
    %194 = arith.negf %193 : vector<8x384xf32>
    %195 = math.exp %194 : vector<8x384xf32>
    %cst_40 = arith.constant 1.000000e+00 : f32
    %196 = vector.broadcast %cst_40 : f32 to vector<8x384xf32>
    %197 = arith.addf %196, %195 : vector<8x384xf32>
    %198 = arith.divf %196, %197 : vector<8x384xf32>
    %199 = vector.extract_strided_slice %198 {offsets = [0, 0], sizes = [8, 128], strides = [1, 1]} : vector<8x384xf32> to vector<8x128xf32>
    %200 = vector.extract_strided_slice %198 {offsets = [0, 128], sizes = [8, 128], strides = [1, 1]} : vector<8x384xf32> to vector<8x128xf32>
    %201 = vector.extract_strided_slice %198 {offsets = [0, 256], sizes = [8, 128], strides = [1, 1]} : vector<8x384xf32> to vector<8x128xf32>
    %202 = vector.extract_strided_slice %192 {offsets = [0, 384], sizes = [8, 128], strides = [1, 1]} : vector<8x512xf32> to vector<8x128xf32>
    %203 = math.tanh %202 : vector<8x128xf32>
    %204 = arith.mulf %200, %166 : vector<8x128xf32>
    %205 = arith.mulf %199, %203 : vector<8x128xf32>
    %206 = arith.addf %204, %205 : vector<8x128xf32>
    %207 = math.tanh %206 : vector<8x128xf32>
    %208 = arith.mulf %201, %207 : vector<8x128xf32>
    %c40 = arith.constant 40 : index
    %c0_41 = arith.constant 0 : index
    %209 = vector.load %arg8[%c40, %c0_41] : memref<64x512xf32, #tpu.memory_space<vmem>>, vector<8x512xf32>
    %210 = vector.extract_strided_slice %190 {offsets = [0, 0], sizes = [8, 512], strides = [1, 1]} : vector<8x1024xf32> to vector<8x512xf32>
    %211 = arith.addf %209, %210 : vector<8x512xf32>
    %212 = vector.extract_strided_slice %211 {offsets = [0, 0], sizes = [8, 384], strides = [1, 1]} : vector<8x512xf32> to vector<8x384xf32>
    %213 = arith.negf %212 : vector<8x384xf32>
    %214 = math.exp %213 : vector<8x384xf32>
    %cst_42 = arith.constant 1.000000e+00 : f32
    %215 = vector.broadcast %cst_42 : f32 to vector<8x384xf32>
    %216 = arith.addf %215, %214 : vector<8x384xf32>
    %217 = arith.divf %215, %216 : vector<8x384xf32>
    %218 = vector.extract_strided_slice %217 {offsets = [0, 0], sizes = [8, 128], strides = [1, 1]} : vector<8x384xf32> to vector<8x128xf32>
    %219 = vector.extract_strided_slice %217 {offsets = [0, 128], sizes = [8, 128], strides = [1, 1]} : vector<8x384xf32> to vector<8x128xf32>
    %220 = vector.extract_strided_slice %217 {offsets = [0, 256], sizes = [8, 128], strides = [1, 1]} : vector<8x384xf32> to vector<8x128xf32>
    %221 = vector.extract_strided_slice %211 {offsets = [0, 384], sizes = [8, 128], strides = [1, 1]} : vector<8x512xf32> to vector<8x128xf32>
    %222 = math.tanh %221 : vector<8x128xf32>
    %223 = arith.mulf %219, %185 : vector<8x128xf32>
    %224 = arith.mulf %218, %222 : vector<8x128xf32>
    %225 = arith.addf %223, %224 : vector<8x128xf32>
    %226 = math.tanh %225 : vector<8x128xf32>
    %227 = arith.mulf %220, %226 : vector<8x128xf32>
    %228 = tpu.concatenate %227, %208 in 1 : vector<8x128xf32>, vector<8x128xf32> -> vector<8x256xf32>
    %c0_43 = arith.constant 0 : index
    %c0_44 = arith.constant 0 : index
    %229 = vector.load %arg3[%c0_43, %c0_44] : memref<256x1024xf32, #tpu.memory_space<vmem>>, vector<256x1024xf32>
    %cst_45 = arith.constant dense<0.000000e+00> : vector<8x1024xf32>
    %230 = tpu.matmul %228, %229, %cst_45 {dimension_numbers = #tpu.dot_dimension_numbers<[1], [0], [0], [1], [0, 0, 1, 1], [], []>} : vector<8x256xf32>, vector<256x1024xf32>, vector<8x1024xf32> -> vector<8x1024xf32>
    %231 = vector.extract_strided_slice %230 {offsets = [0, 512], sizes = [8, 512], strides = [1, 1]} : vector<8x1024xf32> to vector<8x512xf32>
    %232 = arith.addf %231, %9 : vector<8x512xf32>
    %233 = vector.extract_strided_slice %232 {offsets = [0, 0], sizes = [8, 384], strides = [1, 1]} : vector<8x512xf32> to vector<8x384xf32>
    %234 = arith.negf %233 : vector<8x384xf32>
    %235 = math.exp %234 : vector<8x384xf32>
    %cst_46 = arith.constant 1.000000e+00 : f32
    %236 = vector.broadcast %cst_46 : f32 to vector<8x384xf32>
    %237 = arith.addf %236, %235 : vector<8x384xf32>
    %238 = arith.divf %236, %237 : vector<8x384xf32>
    %239 = vector.extract_strided_slice %238 {offsets = [0, 0], sizes = [8, 128], strides = [1, 1]} : vector<8x384xf32> to vector<8x128xf32>
    %240 = vector.extract_strided_slice %238 {offsets = [0, 128], sizes = [8, 128], strides = [1, 1]} : vector<8x384xf32> to vector<8x128xf32>
    %241 = vector.extract_strided_slice %238 {offsets = [0, 256], sizes = [8, 128], strides = [1, 1]} : vector<8x384xf32> to vector<8x128xf32>
    %242 = vector.extract_strided_slice %232 {offsets = [0, 384], sizes = [8, 128], strides = [1, 1]} : vector<8x512xf32> to vector<8x128xf32>
    %243 = math.tanh %242 : vector<8x128xf32>
    %244 = arith.mulf %240, %206 : vector<8x128xf32>
    %245 = arith.mulf %239, %243 : vector<8x128xf32>
    %246 = arith.addf %244, %245 : vector<8x128xf32>
    %247 = math.tanh %246 : vector<8x128xf32>
    %248 = arith.mulf %241, %247 : vector<8x128xf32>
    %c48 = arith.constant 48 : index
    %c0_47 = arith.constant 0 : index
    %249 = vector.load %arg8[%c48, %c0_47] : memref<64x512xf32, #tpu.memory_space<vmem>>, vector<8x512xf32>
    %250 = vector.extract_strided_slice %230 {offsets = [0, 0], sizes = [8, 512], strides = [1, 1]} : vector<8x1024xf32> to vector<8x512xf32>
    %251 = arith.addf %249, %250 : vector<8x512xf32>
    %252 = vector.extract_strided_slice %251 {offsets = [0, 0], sizes = [8, 384], strides = [1, 1]} : vector<8x512xf32> to vector<8x384xf32>
    %253 = arith.negf %252 : vector<8x384xf32>
    %254 = math.exp %253 : vector<8x384xf32>
    %cst_48 = arith.constant 1.000000e+00 : f32
    %255 = vector.broadcast %cst_48 : f32 to vector<8x384xf32>
    %256 = arith.addf %255, %254 : vector<8x384xf32>
    %257 = arith.divf %255, %256 : vector<8x384xf32>
    %258 = vector.extract_strided_slice %257 {offsets = [0, 0], sizes = [8, 128], strides = [1, 1]} : vector<8x384xf32> to vector<8x128xf32>
    %259 = vector.extract_strided_slice %257 {offsets = [0, 128], sizes = [8, 128], strides = [1, 1]} : vector<8x384xf32> to vector<8x128xf32>
    %260 = vector.extract_strided_slice %257 {offsets = [0, 256], sizes = [8, 128], strides = [1, 1]} : vector<8x384xf32> to vector<8x128xf32>
    %261 = vector.extract_strided_slice %251 {offsets = [0, 384], sizes = [8, 128], strides = [1, 1]} : vector<8x512xf32> to vector<8x128xf32>
    %262 = math.tanh %261 : vector<8x128xf32>
    %263 = arith.mulf %259, %225 : vector<8x128xf32>
    %264 = arith.mulf %258, %262 : vector<8x128xf32>
    %265 = arith.addf %263, %264 : vector<8x128xf32>
    %266 = math.tanh %265 : vector<8x128xf32>
    %267 = arith.mulf %260, %266 : vector<8x128xf32>
    %268 = tpu.concatenate %267, %248 in 1 : vector<8x128xf32>, vector<8x128xf32> -> vector<8x256xf32>
    %c0_49 = arith.constant 0 : index
    %c0_50 = arith.constant 0 : index
    %269 = vector.load %arg3[%c0_49, %c0_50] : memref<256x1024xf32, #tpu.memory_space<vmem>>, vector<256x1024xf32>
    %cst_51 = arith.constant dense<0.000000e+00> : vector<8x1024xf32>
    %270 = tpu.matmul %268, %269, %cst_51 {dimension_numbers = #tpu.dot_dimension_numbers<[1], [0], [0], [1], [0, 0, 1, 1], [], []>} : vector<8x256xf32>, vector<256x1024xf32>, vector<8x1024xf32> -> vector<8x1024xf32>
    %271 = vector.extract_strided_slice %270 {offsets = [0, 512], sizes = [8, 512], strides = [1, 1]} : vector<8x1024xf32> to vector<8x512xf32>
    %272 = arith.addf %271, %9 : vector<8x512xf32>
    %273 = vector.extract_strided_slice %272 {offsets = [0, 0], sizes = [8, 384], strides = [1, 1]} : vector<8x512xf32> to vector<8x384xf32>
    %274 = arith.negf %273 : vector<8x384xf32>
    %275 = math.exp %274 : vector<8x384xf32>
    %cst_52 = arith.constant 1.000000e+00 : f32
    %276 = vector.broadcast %cst_52 : f32 to vector<8x384xf32>
    %277 = arith.addf %276, %275 : vector<8x384xf32>
    %278 = arith.divf %276, %277 : vector<8x384xf32>
    %279 = vector.extract_strided_slice %278 {offsets = [0, 0], sizes = [8, 128], strides = [1, 1]} : vector<8x384xf32> to vector<8x128xf32>
    %280 = vector.extract_strided_slice %278 {offsets = [0, 128], sizes = [8, 128], strides = [1, 1]} : vector<8x384xf32> to vector<8x128xf32>
    %281 = vector.extract_strided_slice %278 {offsets = [0, 256], sizes = [8, 128], strides = [1, 1]} : vector<8x384xf32> to vector<8x128xf32>
    %282 = vector.extract_strided_slice %272 {offsets = [0, 384], sizes = [8, 128], strides = [1, 1]} : vector<8x512xf32> to vector<8x128xf32>
    %283 = math.tanh %282 : vector<8x128xf32>
    %284 = arith.mulf %280, %246 : vector<8x128xf32>
    %285 = arith.mulf %279, %283 : vector<8x128xf32>
    %286 = arith.addf %284, %285 : vector<8x128xf32>
    %287 = math.tanh %286 : vector<8x128xf32>
    %288 = arith.mulf %281, %287 : vector<8x128xf32>
    %c56 = arith.constant 56 : index
    %c0_53 = arith.constant 0 : index
    %289 = vector.load %arg8[%c56, %c0_53] : memref<64x512xf32, #tpu.memory_space<vmem>>, vector<8x512xf32>
    %290 = vector.extract_strided_slice %270 {offsets = [0, 0], sizes = [8, 512], strides = [1, 1]} : vector<8x1024xf32> to vector<8x512xf32>
    %291 = arith.addf %289, %290 : vector<8x512xf32>
    %292 = vector.extract_strided_slice %291 {offsets = [0, 0], sizes = [8, 384], strides = [1, 1]} : vector<8x512xf32> to vector<8x384xf32>
    %293 = arith.negf %292 : vector<8x384xf32>
    %294 = math.exp %293 : vector<8x384xf32>
    %cst_54 = arith.constant 1.000000e+00 : f32
    %295 = vector.broadcast %cst_54 : f32 to vector<8x384xf32>
    %296 = arith.addf %295, %294 : vector<8x384xf32>
    %297 = arith.divf %295, %296 : vector<8x384xf32>
    %298 = vector.extract_strided_slice %297 {offsets = [0, 0], sizes = [8, 128], strides = [1, 1]} : vector<8x384xf32> to vector<8x128xf32>
    %299 = vector.extract_strided_slice %297 {offsets = [0, 128], sizes = [8, 128], strides = [1, 1]} : vector<8x384xf32> to vector<8x128xf32>
    %300 = vector.extract_strided_slice %297 {offsets = [0, 256], sizes = [8, 128], strides = [1, 1]} : vector<8x384xf32> to vector<8x128xf32>
    %301 = vector.extract_strided_slice %291 {offsets = [0, 384], sizes = [8, 128], strides = [1, 1]} : vector<8x512xf32> to vector<8x128xf32>
    %302 = math.tanh %301 : vector<8x128xf32>
    %303 = arith.mulf %299, %265 : vector<8x128xf32>
    %304 = arith.mulf %298, %302 : vector<8x128xf32>
    %305 = arith.addf %303, %304 : vector<8x128xf32>
    %306 = math.tanh %305 : vector<8x128xf32>
    %307 = arith.mulf %300, %306 : vector<8x128xf32>
    %308 = tpu.concatenate %307, %288 in 1 : vector<8x128xf32>, vector<8x128xf32> -> vector<8x256xf32>
    %c0_55 = arith.constant 0 : index
    %c0_56 = arith.constant 0 : index
    %309 = vector.load %arg3[%c0_55, %c0_56] : memref<256x1024xf32, #tpu.memory_space<vmem>>, vector<256x1024xf32>
    %cst_57 = arith.constant dense<0.000000e+00> : vector<8x1024xf32>
    %310 = tpu.matmul %308, %309, %cst_57 {dimension_numbers = #tpu.dot_dimension_numbers<[1], [0], [0], [1], [0, 0, 1, 1], [], []>} : vector<8x256xf32>, vector<256x1024xf32>, vector<8x1024xf32> -> vector<8x1024xf32>
    %311 = vector.extract_strided_slice %310 {offsets = [0, 512], sizes = [8, 512], strides = [1, 1]} : vector<8x1024xf32> to vector<8x512xf32>
    %312 = arith.addf %311, %9 : vector<8x512xf32>
    %313 = vector.extract_strided_slice %312 {offsets = [0, 0], sizes = [8, 384], strides = [1, 1]} : vector<8x512xf32> to vector<8x384xf32>
    %314 = arith.negf %313 : vector<8x384xf32>
    %315 = math.exp %314 : vector<8x384xf32>
    %cst_58 = arith.constant 1.000000e+00 : f32
    %316 = vector.broadcast %cst_58 : f32 to vector<8x384xf32>
    %317 = arith.addf %316, %315 : vector<8x384xf32>
    %318 = arith.divf %316, %317 : vector<8x384xf32>
    %319 = vector.extract_strided_slice %318 {offsets = [0, 0], sizes = [8, 128], strides = [1, 1]} : vector<8x384xf32> to vector<8x128xf32>
    %320 = vector.extract_strided_slice %318 {offsets = [0, 128], sizes = [8, 128], strides = [1, 1]} : vector<8x384xf32> to vector<8x128xf32>
    %321 = vector.extract_strided_slice %318 {offsets = [0, 256], sizes = [8, 128], strides = [1, 1]} : vector<8x384xf32> to vector<8x128xf32>
    %322 = vector.extract_strided_slice %312 {offsets = [0, 384], sizes = [8, 128], strides = [1, 1]} : vector<8x512xf32> to vector<8x128xf32>
    %323 = math.tanh %322 : vector<8x128xf32>
    %324 = arith.mulf %320, %286 : vector<8x128xf32>
    %325 = arith.mulf %319, %323 : vector<8x128xf32>
    %326 = arith.addf %324, %325 : vector<8x128xf32>
    %327 = math.tanh %326 : vector<8x128xf32>
    %328 = arith.mulf %321, %327 : vector<8x128xf32>
    %c0_59 = arith.constant 0 : index
    %c0_60 = arith.constant 0 : index
    %329 = vector.load %arg5[%c0_59, %c0_60] : memref<128x128xf32, #tpu.memory_space<vmem>>, vector<128x128xf32>
    %cst_61 = arith.constant dense<0.000000e+00> : vector<8x128xf32>
    %330 = tpu.matmul %328, %329, %cst_61 {dimension_numbers = #tpu.dot_dimension_numbers<[1], [0], [0], [1], [0, 0, 1, 1], [], []>} : vector<8x128xf32>, vector<128x128xf32>, vector<8x128xf32> -> vector<8x128xf32>
    %c0_62 = arith.constant 0 : index
    %c0_63 = arith.constant 0 : index
    %331 = vector.load %arg6[%c0_62, %c0_63] : memref<1x128xf32, #tpu.memory_space<vmem>>, vector<1x128xf32>
    %332 = vector.broadcast %331 : vector<1x128xf32> to vector<8x128xf32>
    %333 = arith.addf %330, %332 : vector<8x128xf32>
    %c0_64 = arith.constant 0 : index
    %c0_65 = arith.constant 0 : index
    %334 = vector.load %arg7[%c0_64, %c0_65] : memref<8x128xf32, #tpu.memory_space<vmem>>, vector<8x128xf32>
    tpu.vector_store %arg7[%c0_64, %c0_65], %333 {strides = array<i32>} : memref<8x128xf32, #tpu.memory_space<vmem>>, vector<8x128xf32>,
    return
  }
}

</mosaic_0001>

<llo_original>
// kernel: tpu_custom_call.1
$region0: #{tpu_custom_call.1}
  #allocation0 [shape = 'u32[]', space=smem, size = 0x4, offset = 0x4, fixed_abs, tag = 'smem constant byte address 0x4 - core index']
  #allocation1 [shape = 'u32[144,128]{1,0:T(1,128)}', space=vmem, size = 0x12000, scoped, tag = 'internal scratch']
  #allocation2 [shape = 'f32[64,512]{1,0:T(8,128)}', space=vmem, size = 0x20000, scoped, tag = 'scratch operand']
  %s0 = inlined_call_operand.hbm [shape: f32[64,128], index: 0, kind: input, shape index: {}]
  %s1 = inlined_call_operand.hbm [shape: f32[128,512], index: 1, kind: input, shape index: {}]
  %s2 = inlined_call_operand.vmem [shape: f32[1,512], index: 2, kind: input, shape index: {}]
  %s3 = inlined_call_operand.hbm [shape: f32[256,1024], index: 3, kind: input, shape index: {}]
  %s4 = inlined_call_operand.vmem [shape: f32[1,512], index: 4, kind: input, shape index: {}]
  %s5 = inlined_call_operand.hbm [shape: f32[128,128], index: 5, kind: input, shape index: {}]
  %s6 = inlined_call_operand.vmem [shape: f32[1,128], index: 6, kind: input, shape index: {}]
  %s7 = inlined_call_operand.hbm [shape: f32[8,128], index: 7, kind: output, shape index: {}]
  %s8 = sld [smem:[#allocation0]]
  $region54: #{tpu_custom_call.1} parent=0
    _
  %s10 = ssub.s32 1, %s8
  %s11 = scalar_select 0, %s10, %s8
  $region1: #{tpu_custom_call.1} parent=0
    #allocation3 [shape = 'u8[32768]{0}', space=vmem, size = 0x8000, scoped, tag = 'input window, operand 0, single buffered']
    #allocation4 [shape = 's32[1]{0}', space=sflag, size = 0x4, scoped, tag = 'scoped memory for tpu_custom_call.1']
    #allocation5 [shape = 's32[1]{0}', space=sflag, size = 0x4, scoped, tag = 'scoped memory for tpu_custom_call.1']
    #allocation6 [shape = 'u8[262144]{0}', space=vmem, size = 0x40000, scoped, tag = 'input window, operand 1, single buffered']
    #allocation7 [shape = 's32[1]{0}', space=sflag, size = 0x4, scoped, tag = 'scoped memory for tpu_custom_call.1']
    #allocation8 [shape = 'u8[1048576]{0}', space=vmem, size = 0x100000, scoped, tag = 'input window, operand 3, single buffered']
    #allocation9 [shape = 'u8[65536]{0}', space=vmem, size = 0x10000, scoped, tag = 'input window, operand 5, single buffered']
    #allocation10 [shape = 's32[1]{0}', space=sflag, size = 0x4, scoped, tag = 'scoped memory for tpu_custom_call.1']
    #allocation11 [shape = 'u8[4096]{0}', space=vmem, size = 0x1000, scoped, tag = 'output window, operand 0, single buffered']
    %12 = vsyncpa [#allocation4], 0
    %13 = vsyncpa [#allocation7], 0
    %14 = vsyncpa [#allocation10], 0
    %15 = vsyncpa [#allocation5], 0
    // Predicated region
    $region2: #{tpu_custom_call.1} parent=1 // pred_check
      _
    $region3: #{tpu_custom_call.1} parent=1 // pred_check_branch
      %17 = sbr.rel (0) target = $region5
    $region4: #{tpu_custom_call.1} parent=1 // pred_region
      %s19 = ssub.s32 1024, 1024
      %20 = vsyncadd [#allocation4], %s19
      %s21 = sshll.u32 [#allocation3], 4
      %s22 = int_to_ptr.vmem [resolvable:$true] %s21
      %27 = dma.hbm_to_vmem [thread:$0]  %s0, 1024, %s22, [#allocation4], 128, 128, 8
    $region5: #{tpu_custom_call.1} parent=1 // pred_fallthru
      _
    // Predicated region
    $region6: #{tpu_custom_call.1} parent=1 // pred_check
      _
    $region7: #{tpu_custom_call.1} parent=1 // pred_check_branch
      %29 = sbr.rel (0) target = $region9
    $region8: #{tpu_custom_call.1} parent=1 // pred_region
      %s31 = ssub.s32 8192, 8192
      %32 = vsyncadd [#allocation7], %s31
      %s33 = sshll.u32 [#allocation6], 4
      %s34 = int_to_ptr.vmem [resolvable:$true] %s33
      %39 = dma.hbm_to_vmem [thread:$0]  %s1, 8192, %s34, [#allocation7], 512, 512, 32
    $region9: #{tpu_custom_call.1} parent=1 // pred_fallthru
      _
    // Predicated region
    $region10: #{tpu_custom_call.1} parent=1 // pred_check
      _
    $region11: #{tpu_custom_call.1} parent=1 // pred_check_branch
      %41 = sbr.rel (0) target = $region13
    $region12: #{tpu_custom_call.1} parent=1 // pred_region
      _
    $region13: #{tpu_custom_call.1} parent=1 // pred_fallthru
      _
    // Predicated region
    $region14: #{tpu_custom_call.1} parent=1 // pred_check
      _
    $region15: #{tpu_custom_call.1} parent=1 // pred_check_branch
      %43 = sbr.rel (0) target = $region17
    $region16: #{tpu_custom_call.1} parent=1 // pred_region
      %s45 = ssub.s32 32768, 32768
      %46 = vsyncadd [#allocation7], %s45
      %s47 = sshll.u32 [#allocation8], 4
      %s48 = int_to_ptr.vmem [resolvable:$true] %s47
      %53 = dma.hbm_to_vmem [thread:$0]  %s3, 32768, %s48, [#allocation7], 1024, 1024, 64
    $region17: #{tpu_custom_call.1} parent=1 // pred_fallthru
      _
    // Predicated region
    $region18: #{tpu_custom_call.1} parent=1 // pred_check
      _
    $region19: #{tpu_custom_call.1} parent=1 // pred_check_branch
      %55 = sbr.rel (0) target = $region21
    $region20: #{tpu_custom_call.1} parent=1 // pred_region
      _
    $region21: #{tpu_custom_call.1} parent=1 // pred_fallthru
      _
    // Predicated region
    $region22: #{tpu_custom_call.1} parent=1 // pred_check
      _
    $region23: #{tpu_custom_call.1} parent=1 // pred_check_branch
      %57 = sbr.rel (0) target = $region25
    $region24: #{tpu_custom_call.1} parent=1 // pred_region
      %s59 = ssub.s32 2048, 2048
      %60 = vsyncadd [#allocation10], %s59
      %s61 = sshll.u32 [#allocation9], 4
      %s62 = int_to_ptr.vmem [resolvable:$true] %s61
      %67 = dma.hbm_to_vmem [thread:$0]  %s5, 2048, %s62, [#allocation10], 128, 128, 8
    $region25: #{tpu_custom_call.1} parent=1 // pred_fallthru
      _
    // Predicated region
    $region26: #{tpu_custom_call.1} parent=1 // pred_check
      _
    $region27: #{tpu_custom_call.1} parent=1 // pred_check_branch
      %69 = sbr.rel (0) target = $region29
    $region28: #{tpu_custom_call.1} parent=1 // pred_region
      _
    $region29: #{tpu_custom_call.1} parent=1 // pred_fallthru
      _
    // Predicated region
    $region30: #{tpu_custom_call.1} parent=1 // pred_check
      _
    $region31: #{tpu_custom_call.1} parent=1 // pred_check_branch
      %71 = sbr.rel (0) target = $region33
    $region32: #{tpu_custom_call.1} parent=1 // pred_region
      %72 = dma.done [#allocation4], 1024
    $region33: #{tpu_custom_call.1} parent=1 // pred_fallthru
      _
    // Predicated region
    $region34: #{tpu_custom_call.1} parent=1 // pred_check
      _
    $region35: #{tpu_custom_call.1} parent=1 // pred_check_branch
      %74 = sbr.rel (0) target = $region37
    $region36: #{tpu_custom_call.1} parent=1 // pred_region
      %75 = dma.done [#allocation7], 8192
    $region37: #{tpu_custom_call.1} parent=1 // pred_fallthru
      _
    // Predicated region
    $region38: #{tpu_custom_call.1} parent=1 // pred_check
      _
    $region39: #{tpu_custom_call.1} parent=1 // pred_check_branch
      %77 = sbr.rel (0) target = $region41
    $region40: #{tpu_custom_call.1} parent=1 // pred_region
      %78 = dma.done [#allocation7], 32768
    $region41: #{tpu_custom_call.1} parent=1 // pred_fallthru
      _
    // Predicated region
    $region42: #{tpu_custom_call.1} parent=1 // pred_check
      _
    $region43: #{tpu_custom_call.1} parent=1 // pred_check_branch
      %80 = sbr.rel (0) target = $region45
    $region44: #{tpu_custom_call.1} parent=1 // pred_region
      %81 = dma.done [#allocation10], 2048
    $region45: #{tpu_custom_call.1} parent=1 // pred_fallthru
      _
    %v82 = vld [vmem:[#allocation3] sm:$0xff]
    %v83 = vld [vmem:[#allocation3 + $0x8] sm:$0xff]
    %v84 = vld [vmem:[#allocation3 + $0x10] sm:$0xff]
    %v85 = vld [vmem:[#allocation3 + $0x18] sm:$0xff]
    %v86 = vld [vmem:[#allocation3 + $0x20] sm:$0xff]
    %v87 = vld [vmem:[#allocation3 + $0x28] sm:$0xff]
    %v88 = vld [vmem:[#allocation3 + $0x30] sm:$0xff]
    %v89 = vld [vmem:[#allocation3 + $0x38] sm:$0xff]
    %v90 = vld [vmem:[#allocation6] sm:$0xff]
    %v91 = vld [vmem:[#allocation6 + $0x8] sm:$0xff]
    %v92 = vld [vmem:[#allocation6 + $0x10] sm:$0xff]
    %v93 = vld [vmem:[#allocation6 + $0x18] sm:$0xff]
    %v94 = vld [vmem:[#allocation6 + $0x20] sm:$0xff]
    %v95 = vld [vmem:[#allocation6 + $0x28] sm:$0xff]
    %v96 = vld [vmem:[#allocation6 + $0x30] sm:$0xff]
    %v97 = vld [vmem:[#allocation6 + $0x38] sm:$0xff]
    %v98 = vld [vmem:[#allocation6 + $0x40] sm:$0xff]
    %v99 = vld [vmem:[#allocation6 + $0x48] sm:$0xff]
    %v100 = vld [vmem:[#allocation6 + $0x50] sm:$0xff]
    %v101 = vld [vmem:[#allocation6 + $0x58] sm:$0xff]
    %v102 = vld [vmem:[#allocation6 + $0x60] sm:$0xff]
    %v103 = vld [vmem:[#allocation6 + $0x68] sm:$0xff]
    %v104 = vld [vmem:[#allocation6 + $0x70] sm:$0xff]
    %v105 = vld [vmem:[#allocation6 + $0x78] sm:$0xff]
    %v106 = vld [vmem:[#allocation6 + $0x80] sm:$0xff]
    %v107 = vld [vmem:[#allocation6 + $0x88] sm:$0xff]
    %v108 = vld [vmem:[#allocation6 + $0x90] sm:$0xff]
    %v109 = vld [vmem:[#allocation6 + $0x98] sm:$0xff]
    %v110 = vld [vmem:[#allocation6 + $0xa0] sm:$0xff]
    %v111 = vld [vmem:[#allocation6 + $0xa8] sm:$0xff]
    %v112 = vld [vmem:[#allocation6 + $0xb0] sm:$0xff]
    %v113 = vld [vmem:[#allocation6 + $0xb8] sm:$0xff]
    %v114 = vld [vmem:[#allocation6 + $0xc0] sm:$0xff]
    %v115 = vld [vmem:[#allocation6 + $0xc8] sm:$0xff]
    %v116 = vld [vmem:[#allocation6 + $0xd0] sm:$0xff]
    %v117 = vld [vmem:[#allocation6 + $0xd8] sm:$0xff]
    %v118 = vld [vmem:[#allocation6 + $0xe0] sm:$0xff]
    %v119 = vld [vmem:[#allocation6 + $0xe8] sm:$0xff]
    %v120 = vld [vmem:[#allocation6 + $0xf0] sm:$0xff]
    %v121 = vld [vmem:[#allocation6 + $0xf8] sm:$0xff]
    %v122 = vld [vmem:[#allocation6 + $0x100] sm:$0xff]
    %v123 = vld [vmem:[#allocation6 + $0x108] sm:$0xff]
    %v124 = vld [vmem:[#allocation6 + $0x110] sm:$0xff]
    %v125 = vld [vmem:[#allocation6 + $0x118] sm:$0xff]
    %v126 = vld [vmem:[#allocation6 + $0x120] sm:$0xff]
    %v127 = vld [vmem:[#allocation6 + $0x128] sm:$0xff]
    %v128 = vld [vmem:[#allocation6 + $0x130] sm:$0xff]
    %v129 = vld [vmem:[#allocation6 + $0x138] sm:$0xff]
    %v130 = vld [vmem:[#allocation6 + $0x140] sm:$0xff]
    %v131 = vld [vmem:[#allocation6 + $0x148] sm:$0xff]
    %v132 = vld [vmem:[#allocation6 + $0x150] sm:$0xff]
    %v133 = vld [vmem:[#allocation6 + $0x158] sm:$0xff]
    %v134 = vld [vmem:[#allocation6 + $0x160] sm:$0xff]
    %v135 = vld [vmem:[#allocation6 + $0x168] sm:$0xff]
    %v136 = vld [vmem:[#allocation6 + $0x170] sm:$0xff]
    %v137 = vld [vmem:[#allocation6 + $0x178] sm:$0xff]
    %v138 = vld [vmem:[#allocation6 + $0x180] sm:$0xff]
    %v139 = vld [vmem:[#allocation6 + $0x188] sm:$0xff]
    %v140 = vld [vmem:[#allocation6 + $0x190] sm:$0xff]
    %v141 = vld [vmem:[#allocation6 + $0x198] sm:$0xff]
    %v142 = vld [vmem:[#allocation6 + $0x1a0] sm:$0xff]
    %v143 = vld [vmem:[#allocation6 + $0x1a8] sm:$0xff]
    %v144 = vld [vmem:[#allocation6 + $0x1b0] sm:$0xff]
    %v145 = vld [vmem:[#allocation6 + $0x1b8] sm:$0xff]
    %v146 = vld [vmem:[#allocation6 + $0x1c0] sm:$0xff]
    %v147 = vld [vmem:[#allocation6 + $0x1c8] sm:$0xff]
    %v148 = vld [vmem:[#allocation6 + $0x1d0] sm:$0xff]
    %v149 = vld [vmem:[#allocation6 + $0x1d8] sm:$0xff]
    %v150 = vld [vmem:[#allocation6 + $0x1e0] sm:$0xff]
    %v151 = vld [vmem:[#allocation6 + $0x1e8] sm:$0xff]
    %v152 = vld [vmem:[#allocation6 + $0x1f0] sm:$0xff]
    %v153 = vld [vmem:[#allocation6 + $0x1f8] sm:$0xff]
    %v154 = vld [vmem:[%s2] sm:$0xf]
    %v156 = vlaneseq
    %v157 = vshrl.u32 %v156, 7
    %v158 = vsub.s32 0, %v157
    %v159 = vrot.slane %v154, %v158
    %v160 = vlaneseq
    %v161 = vshrl.u32 %v160, 7
    %v162 = vsub.s32 1, %v161
    %v163 = vrot.slane %v154, %v162
    %v164 = vlaneseq
    %v165 = vshrl.u32 %v164, 7
    %v166 = vsub.s32 2, %v165
    %v167 = vrot.slane %v154, %v166
    %v168 = vlaneseq
    %v169 = vshrl.u32 %v168, 7
    %v170 = vsub.s32 3, %v169
    %v171 = vrot.slane %v154, %v170
    %176 = vmatprep.subr.mxu0 %v91
    %177 = vmatpush1.msra.mxu0 %v90
    %178 = vmatprep.subr.mxu0 %v95
    %179 = vmatpush1.msra.mxu0 %v94
    %180 = vmatprep.subr.mxu0 %v99
    %181 = vmatpush1.msra.mxu0 %v98
    %182 = vmatprep.subr.mxu0 %v103
    %183 = vmatpush1.msra.mxu0 %v102
    %184 = vmatprep.subr.mxu0 %v107
    %185 = vmatpush1.msra.mxu0 %v106
    %186 = vmatprep.subr.mxu0 %v111
    %187 = vmatpush1.msra.mxu0 %v110
    %188 = vmatprep.subr.mxu0 %v115
    %189 = vmatpush1.msra.mxu0 %v114
    %190 = vmatprep.subr.mxu0 %v119
    %191 = vmatpush1.msra.mxu0 %v118
    %192 = vmatprep.subr.mxu0 %v123
    %193 = vmatpush1.msra.mxu0 %v122
    %194 = vmatprep.subr.mxu0 %v127
    %195 = vmatpush1.msra.mxu0 %v126
    %196 = vmatprep.subr.mxu0 %v131
    %197 = vmatpush1.msra.mxu0 %v130
    %198 = vmatprep.subr.mxu0 %v135
    %199 = vmatpush1.msra.mxu0 %v134
    %200 = vmatprep.subr.mxu0 %v139
    %201 = vmatpush1.msra.mxu0 %v138
    %202 = vmatprep.subr.mxu0 %v143
    %203 = vmatpush1.msra.mxu0 %v142
    %204 = vmatprep.subr.mxu0 %v147
    %205 = vmatpush1.msra.mxu0 %v146
    %206 = vmatprep.subr.mxu0 %v151
    %207 = vmatpush1.msra.mxu0 %v150
    %208 = vmatprep.subr.mxu0 0.0
    %209 = vmatpush1.msra.mxu0 0.0
    %210 = vmatprep.subr.mxu0 0.0
    %211 = vmatpush1.msra.mxu0 0.0
    %212 = vmatprep.subr.mxu0 0.0
    %213 = vmatpush1.msra.mxu0 0.0
    %214 = vmatprep.subr.mxu0 0.0
    %215 = vmatpush1.msra.mxu0 0.0
    %216 = vmatprep.subr.mxu0 0.0
    %217 = vmatpush1.msra.mxu0 0.0
    %218 = vmatprep.subr.mxu0 0.0
    %219 = vmatpush1.msra.mxu0 0.0
    %220 = vmatprep.subr.mxu0 0.0
    %221 = vmatpush1.msra.mxu0 0.0
    %222 = vmatprep.subr.mxu0 0.0
    %223 = vmatpush1.msra.mxu0 0.0
    %224 = vmatprep.subr.mxu0 0.0
    %225 = vmatpush1.msra.mxu0 0.0
    %226 = vmatprep.subr.mxu0 0.0
    %227 = vmatpush1.msra.mxu0 0.0
    %228 = vmatprep.subr.mxu0 0.0
    %229 = vmatpush1.msra.mxu0 0.0
    %230 = vmatprep.subr.mxu0 0.0
    %231 = vmatpush1.msra.mxu0 0.0
    %232 = vmatprep.subr.mxu0 0.0
    %233 = vmatpush1.msra.mxu0 0.0
    %234 = vmatprep.subr.mxu0 0.0
    %235 = vmatpush1.msra.mxu0 0.0
    %236 = vmatprep.subr.mxu0 0.0
    %237 = vmatpush1.msra.mxu0 0.0
    %238 = vmatprep.subr.mxu0 0.0
    %239 = vmatpush1.msra.mxu0 0.0
    %240 = vmatprep.mubr.f32.mxu0 0.0
    %241 = vmatmul.mubr.f32.gmra.mrb[0].mxu0 %v82
    %v242 = vpop.f32.mrb[0].mxu0
    %v243 = vadd.f32 %v159, %v242
    %v244 = vpop.f32.mrb[0].mxu0
    %v245 = vadd.f32 %v163, %v244
    %246 = vmatprep.mubr.f32.mxu0 0.0
    %247 = vmatmul.mubr.f32.gmra.mrb[0].mxu0 %v83
    %v248 = vpop.f32.mrb[0].mxu0
    %v249 = vadd.f32 %v159, %v248
    %v250 = vpop.f32.mrb[0].mxu0
    %v251 = vadd.f32 %v163, %v250
    %252 = vmatprep.mubr.f32.mxu0 0.0
    %253 = vmatmul.mubr.f32.gmra.mrb[0].mxu0 %v84
    %v254 = vpop.f32.mrb[0].mxu0
    %v255 = vadd.f32 %v159, %v254
    %v256 = vpop.f32.mrb[0].mxu0
    %v257 = vadd.f32 %v163, %v256
    %258 = vmatprep.mubr.f32.mxu0 0.0
    %259 = vmatmul.mubr.f32.gmra.mrb[0].mxu0 %v85
    %v260 = vpop.f32.mrb[0].mxu0
    %v261 = vadd.f32 %v159, %v260
    %v262 = vpop.f32.mrb[0].mxu0
    %v263 = vadd.f32 %v163, %v262
    %264 = vmatprep.mubr.f32.mxu0 0.0
    %265 = vmatmul.mubr.f32.gmra.mrb[0].mxu0 %v86
    %v266 = vpop.f32.mrb[0].mxu0
    %v267 = vadd.f32 %v159, %v266
    %v268 = vpop.f32.mrb[0].mxu0
    %v269 = vadd.f32 %v163, %v268
    %270 = vmatprep.mubr.f32.mxu0 0.0
    %271 = vmatmul.mubr.f32.gmra.mrb[0].mxu0 %v87
    %v272 = vpop.f32.mrb[0].mxu0
    %v273 = vadd.f32 %v159, %v272
    %v274 = vpop.f32.mrb[0].mxu0
    %v275 = vadd.f32 %v163, %v274
    %276 = vmatprep.mubr.f32.mxu0 0.0
    %277 = vmatmul.mubr.f32.gmra.mrb[0].mxu0 %v88
    %v278 = vpop.f32.mrb[0].mxu0
    %v279 = vadd.f32 %v159, %v278
    %v280 = vpop.f32.mrb[0].mxu0
    %v281 = vadd.f32 %v163, %v280
    %282 = vmatprep.mubr.f32.mxu0 0.0
    %283 = vmatmul.mubr.f32.gmra.mrb[0].mxu0 %v89
    %v284 = vpop.f32.mrb[0].mxu0
    %v285 = vadd.f32 %v159, %v284
    %v286 = vpop.f32.mrb[0].mxu0
    %v287 = vadd.f32 %v163, %v286
    %288 = vdwg.mxu0
    %289 = vmatprep.subr.mxu0 %v93
    %290 = vmatpush1.msra.mxu0 %v92
    %291 = vmatprep.subr.mxu0 %v97
    %292 = vmatpush1.msra.mxu0 %v96
    %293 = vmatprep.subr.mxu0 %v101
    %294 = vmatpush1.msra.mxu0 %v100
    %295 = vmatprep.subr.mxu0 %v105
    %296 = vmatpush1.msra.mxu0 %v104
    %297 = vmatprep.subr.mxu0 %v109
    %298 = vmatpush1.msra.mxu0 %v108
    %299 = vmatprep.subr.mxu0 %v113
    %300 = vmatpush1.msra.mxu0 %v112
    %301 = vmatprep.subr.mxu0 %v117
    %302 = vmatpush1.msra.mxu0 %v116
    %303 = vmatprep.subr.mxu0 %v121
    %304 = vmatpush1.msra.mxu0 %v120
    %305 = vmatprep.subr.mxu0 %v125
    %306 = vmatpush1.msra.mxu0 %v124
    %307 = vmatprep.subr.mxu0 %v129
    %308 = vmatpush1.msra.mxu0 %v128
    %309 = vmatprep.subr.mxu0 %v133
    %310 = vmatpush1.msra.mxu0 %v132
    %311 = vmatprep.subr.mxu0 %v137
    %312 = vmatpush1.msra.mxu0 %v136
    %313 = vmatprep.subr.mxu0 %v141
    %314 = vmatpush1.msra.mxu0 %v140
    %315 = vmatprep.subr.mxu0 %v145
    %316 = vmatpush1.msra.mxu0 %v144
    %317 = vmatprep.subr.mxu0 %v149
    %318 = vmatpush1.msra.mxu0 %v148
    %319 = vmatprep.subr.mxu0 %v153
    %320 = vmatpush1.msra.mxu0 %v152
    %321 = vmatprep.subr.mxu0 0.0
    %322 = vmatpush1.msra.mxu0 0.0
    %323 = vmatprep.subr.mxu0 0.0
    %324 = vmatpush1.msra.mxu0 0.0
    %325 = vmatprep.subr.mxu0 0.0
    %326 = vmatpush1.msra.mxu0 0.0
    %327 = vmatprep.subr.mxu0 0.0
    %328 = vmatpush1.msra.mxu0 0.0
    %329 = vmatprep.subr.mxu0 0.0
    %330 = vmatpush1.msra.mxu0 0.0
    %331 = vmatprep.subr.mxu0 0.0
    %332 = vmatpush1.msra.mxu0 0.0
    %333 = vmatprep.subr.mxu0 0.0
    %334 = vmatpush1.msra.mxu0 0.0
    %335 = vmatprep.subr.mxu0 0.0
    %336 = vmatpush1.msra.mxu0 0.0
    %337 = vmatprep.subr.mxu0 0.0
    %338 = vmatpush1.msra.mxu0 0.0
    %339 = vmatprep.subr.mxu0 0.0
    %340 = vmatpush1.msra.mxu0 0.0
    %341 = vmatprep.subr.mxu0 0.0
    %342 = vmatpush1.msra.mxu0 0.0
    %343 = vmatprep.subr.mxu0 0.0
    %344 = vmatpush1.msra.mxu0 0.0
    %345 = vmatprep.subr.mxu0 0.0
    %346 = vmatpush1.msra.mxu0 0.0
    %347 = vmatprep.subr.mxu0 0.0
    %348 = vmatpush1.msra.mxu0 0.0
    %349 = vmatprep.subr.mxu0 0.0
    %350 = vmatpush1.msra.mxu0 0.0
    %351 = vmatprep.subr.mxu0 0.0
    %352 = vmatpush1.msra.mxu0 0.0
    %353 = vmatprep.mubr.f32.mxu0 0.0
    %354 = vmatmul.mubr.f32.gmra.mrb[0].mxu0 %v82
    %v355 = vpop.f32.mrb[0].mxu0
    %v356 = vadd.f32 %v167, %v355
    %v357 = vpop.f32.mrb[0].mxu0
    %v358 = vadd.f32 %v171, %v357
    %359 = vmatprep.mubr.f32.mxu0 0.0
    %360 = vmatmul.mubr.f32.gmra.mrb[0].mxu0 %v83
    %v361 = vpop.f32.mrb[0].mxu0
    %v362 = vadd.f32 %v167, %v361
    %v363 = vpop.f32.mrb[0].mxu0
    %v364 = vadd.f32 %v171, %v363
    %365 = vmatprep.mubr.f32.mxu0 0.0
    %366 = vmatmul.mubr.f32.gmra.mrb[0].mxu0 %v84
    %v367 = vpop.f32.mrb[0].mxu0
    %v368 = vadd.f32 %v167, %v367
    %v369 = vpop.f32.mrb[0].mxu0
    %v370 = vadd.f32 %v171, %v369
    %371 = vmatprep.mubr.f32.mxu0 0.0
    %372 = vmatmul.mubr.f32.gmra.mrb[0].mxu0 %v85
    %v373 = vpop.f32.mrb[0].mxu0
    %v374 = vadd.f32 %v167, %v373
    %v375 = vpop.f32.mrb[0].mxu0
    %v376 = vadd.f32 %v171, %v375
    %377 = vmatprep.mubr.f32.mxu0 0.0
    %378 = vmatmul.mubr.f32.gmra.mrb[0].mxu0 %v86
    %v379 = vpop.f32.mrb[0].mxu0
    %v380 = vadd.f32 %v167, %v379
    %v381 = vpop.f32.mrb[0].mxu0
    %v382 = vadd.f32 %v171, %v381
    %383 = vmatprep.mubr.f32.mxu0 0.0
    %384 = vmatmul.mubr.f32.gmra.mrb[0].mxu0 %v87
    %v385 = vpop.f32.mrb[0].mxu0
    %v386 = vadd.f32 %v167, %v385
    %v387 = vpop.f32.mrb[0].mxu0
    %v388 = vadd.f32 %v171, %v387
    %389 = vmatprep.mubr.f32.mxu0 0.0
    %390 = vmatmul.mubr.f32.gmra.mrb[0].mxu0 %v88
    %v391 = vpop.f32.mrb[0].mxu0
    %v392 = vadd.f32 %v167, %v391
    %v393 = vpop.f32.mrb[0].mxu0
    %v394 = vadd.f32 %v171, %v393
    %395 = vmatprep.mubr.f32.mxu0 0.0
    %396 = vmatmul.mubr.f32.gmra.mrb[0].mxu0 %v89
    %v397 = vpop.f32.mrb[0].mxu0
    %v398 = vadd.f32 %v167, %v397
    %v399 = vpop.f32.mrb[0].mxu0
    %v400 = vadd.f32 %v171, %v399
    %401 = vdwg.mxu0
    %402 = vst [vmem:[#allocation2] sm:$0xff] %v243
    %403 = vst [vmem:[#allocation2 + $0x8] sm:$0xff] %v245
    %404 = vst [vmem:[#allocation2 + $0x10] sm:$0xff] %v356
    %405 = vst [vmem:[#allocation2 + $0x18] sm:$0xff] %v358
    %406 = vst [vmem:[#allocation2 + $0x20] sm:$0xff] %v249
    %407 = vst [vmem:[#allocation2 + $0x28] sm:$0xff] %v251
    %408 = vst [vmem:[#allocation2 + $0x30] sm:$0xff] %v362
    %409 = vst [vmem:[#allocation2 + $0x38] sm:$0xff] %v364
    %410 = vst [vmem:[#allocation2 + $0x40] sm:$0xff] %v255
    %411 = vst [vmem:[#allocation2 + $0x48] sm:$0xff] %v257
    %412 = vst [vmem:[#allocation2 + $0x50] sm:$0xff] %v368
    %413 = vst [vmem:[#allocation2 + $0x58] sm:$0xff] %v370
    %414 = vst [vmem:[#allocation2 + $0x60] sm:$0xff] %v261
    %415 = vst [vmem:[#allocation2 + $0x68] sm:$0xff] %v263
    %416 = vst [vmem:[#allocation2 + $0x70] sm:$0xff] %v374
    %417 = vst [vmem:[#allocation2 + $0x78] sm:$0xff] %v376
    %418 = vst [vmem:[#allocation2 + $0x80] sm:$0xff] %v267
    %419 = vst [vmem:[#allocation2 + $0x88] sm:$0xff] %v269
    %420 = vst [vmem:[#allocation2 + $0x90] sm:$0xff] %v380
    %421 = vst [vmem:[#allocation2 + $0x98] sm:$0xff] %v382
    %422 = vst [vmem:[#allocation2 + $0xa0] sm:$0xff] %v273
    %423 = vst [vmem:[#allocation2 + $0xa8] sm:$0xff] %v275
    %424 = vst [vmem:[#allocation2 + $0xb0] sm:$0xff] %v386
    %425 = vst [vmem:[#allocation2 + $0xb8] sm:$0xff] %v388
    %426 = vst [vmem:[#allocation2 + $0xc0] sm:$0xff] %v279
    %427 = vst [vmem:[#allocation2 + $0xc8] sm:$0xff] %v281
    %428 = vst [vmem:[#allocation2 + $0xd0] sm:$0xff] %v392
    %429 = vst [vmem:[#allocation2 + $0xd8] sm:$0xff] %v394
    %430 = vst [vmem:[#allocation2 + $0xe0] sm:$0xff] %v285
    %431 = vst [vmem:[#allocation2 + $0xe8] sm:$0xff] %v287
    %432 = vst [vmem:[#allocation2 + $0xf0] sm:$0xff] %v398
    %433 = vst [vmem:[#allocation2 + $0xf8] sm:$0xff] %v400
    %v434 = vld [vmem:[%s4] sm:$0xf]
    %v436 = vlaneseq
    %v437 = vshrl.u32 %v436, 7
    %v438 = vsub.s32 0, %v437
    %v439 = vrot.slane %v434, %v438
    %v440 = vlaneseq
    %v441 = vshrl.u32 %v440, 7
    %v442 = vsub.s32 1, %v441
    %v443 = vrot.slane %v434, %v442
    %v444 = vlaneseq
    %v445 = vshrl.u32 %v444, 7
    %v446 = vsub.s32 2, %v445
    %v447 = vrot.slane %v434, %v446
    %v448 = vlaneseq
    %v449 = vshrl.u32 %v448, 7
    %v450 = vsub.s32 3, %v449
    %v451 = vrot.slane %v434, %v450
    %v456 = vld [vmem:[#allocation2] sm:$0xff]
    %v457 = vld [vmem:[#allocation2 + $0x8] sm:$0xff]
    %v458 = vld [vmem:[#allocation2 + $0x10] sm:$0xff]
    %v459 = vld [vmem:[#allocation2 + $0x18] sm:$0xff]
    %v460 = vxor.u32 %v456, 2147483648
    %v461 = vxor.u32 %v457, 2147483648
    %v462 = vxor.u32 %v458, 2147483648
    %v463 = vmul.f32 %v460, 1.442695
    %v464 = vpow.pop %v463
    %v465 = vmul.f32 %v461, 1.442695
    %v466 = vpow.pop %v465
    %v467 = vmul.f32 %v462, 1.442695
    %v468 = vpow.pop %v467
    %v469 = vadd.f32 %v464, 1.0
    %v470 = vadd.f32 %v466, 1.0
    %v471 = vadd.f32 %v468, 1.0
    %v472 = vrcp.pop %v469
    %v473 = vmul.f32 1.0, %v472
    %v474 = vrcp.pop %v470
    %v475 = vmul.f32 1.0, %v474
    %v476 = vrcp.pop %v471
    %v477 = vmul.f32 1.0, %v476
    %v478 = vtanh.pop %v459
    %v479 = vmul.f32 %v475, 0.0
    %v480 = vmul.f32 %v473, %v478
    %v481 = vadd.f32 %v479, %v480
    %v482 = vtanh.pop %v481
    %v483 = vmul.f32 %v477, %v482
    %v484 = vld [vmem:[#allocation8] sm:$0xff]
    %v485 = vld [vmem:[#allocation8 + $0x8] sm:$0xff]
    %v486 = vld [vmem:[#allocation8 + $0x10] sm:$0xff]
    %v487 = vld [vmem:[#allocation8 + $0x18] sm:$0xff]
    %v488 = vld [vmem:[#allocation8 + $0x20] sm:$0xff]
    %v489 = vld [vmem:[#allocation8 + $0x28] sm:$0xff]
    %v490 = vld [vmem:[#allocation8 + $0x30] sm:$0xff]
    %v491 = vld [vmem:[#allocation8 + $0x38] sm:$0xff]
    %v492 = vld [vmem:[#allocation8 + $0x40] sm:$0xff]
    %v493 = vld [vmem:[#allocation8 + $0x48] sm:$0xff]
    %v494 = vld [vmem:[#allocation8 + $0x50] sm:$0xff]
    %v495 = vld [vmem:[#allocation8 + $0x58] sm:$0xff]
    %v496 = vld [vmem:[#allocation8 + $0x60] sm:$0xff]
    %v497 = vld [vmem:[#allocation8 + $0x68] sm:$0xff]
    %v498 = vld [vmem:[#allocation8 + $0x70] sm:$0xff]
    %v499 = vld [vmem:[#allocation8 + $0x78] sm:$0xff]
    %v500 = vld [vmem:[#allocation8 + $0x80] sm:$0xff]
    %v501 = vld [vmem:[#allocation8 + $0x88] sm:$0xff]
    %v502 = vld [vmem:[#allocation8 + $0x90] sm:$0xff]
    %v503 = vld [vmem:[#allocation8 + $0x98] sm:$0xff]
    %v504 = vld [vmem:[#allocation8 + $0xa0] sm:$0xff]
    %v505 = vld [vmem:[#allocation8 + $0xa8] sm:$0xff]
    %v506 = vld [vmem:[#allocation8 + $0xb0] sm:$0xff]
    %v507 = vld [vmem:[#allocation8 + $0xb8] sm:$0xff]
    %v508 = vld [vmem:[#allocation8 + $0xc0] sm:$0xff]
    %v509 = vld [vmem:[#allocation8 + $0xc8] sm:$0xff]
    %v510 = vld [vmem:[#allocation8 + $0xd0] sm:$0xff]
    %v511 = vld [vmem:[#allocation8 + $0xd8] sm:$0xff]
    %v512 = vld [vmem:[#allocation8 + $0xe0] sm:$0xff]
    %v513 = vld [vmem:[#allocation8 + $0xe8] sm:$0xff]
    %v514 = vld [vmem:[#allocation8 + $0xf0] sm:$0xff]
    %v515 = vld [vmem:[#allocation8 + $0xf8] sm:$0xff]
    %v516 = vld [vmem:[#allocation8 + $0x100] sm:$0xff]
    %v517 = vld [vmem:[#allocation8 + $0x108] sm:$0xff]
    %v518 = vld [vmem:[#allocation8 + $0x110] sm:$0xff]
    %v519 = vld [vmem:[#allocation8 + $0x118] sm:$0xff]
    %v520 = vld [vmem:[#allocation8 + $0x120] sm:$0xff]
    %v521 = vld [vmem:[#allocation8 + $0x128] sm:$0xff]
    %v522 = vld [vmem:[#allocation8 + $0x130] sm:$0xff]
    %v523 = vld [vmem:[#allocation8 + $0x138] sm:$0xff]
    %v524 = vld [vmem:[#allocation8 + $0x140] sm:$0xff]
    %v525 = vld [vmem:[#allocation8 + $0x148] sm:$0xff]
    %v526 = vld [vmem:[#allocation8 + $0x150] sm:$0xff]
    %v527 = vld [vmem:[#allocation8 + $0x158] sm:$0xff]
    %v528 = vld [vmem:[#allocation8 + $0x160] sm:$0xff]
    %v529 = vld [vmem:[#allocation8 + $0x168] sm:$0xff]
    %v530 = vld [vmem:[#allocation8 + $0x170] sm:$0xff]
    %v531 = vld [vmem:[#allocation8 + $0x178] sm:$0xff]
    %v532 = vld [vmem:[#allocation8 + $0x180] sm:$0xff]
    %v533 = vld [vmem:[#allocation8 + $0x188] sm:$0xff]
    %v534 = vld [vmem:[#allocation8 + $0x190] sm:$0xff]
    %v535 = vld [vmem:[#allocation8 + $0x198] sm:$0xff]
    %v536 = vld [vmem:[#allocation8 + $0x1a0] sm:$0xff]
    %v537 = vld [vmem:[#allocation8 + $0x1a8] sm:$0xff]
    %v538 = vld [vmem:[#allocation8 + $0x1b0] sm:$0xff]
    %v539 = vld [vmem:[#allocation8 + $0x1b8] sm:$0xff]
    %v540 = vld [vmem:[#allocation8 + $0x1c0] sm:$0xff]
    %v541 = vld [vmem:[#allocation8 + $0x1c8] sm:$0xff]
    %v542 = vld [vmem:[#allocation8 + $0x1d0] sm:$0xff]
    %v543 = vld [vmem:[#allocation8 + $0x1d8] sm:$0xff]
    %v544 = vld [vmem:[#allocation8 + $0x1e0] sm:$0xff]
    %v545 = vld [vmem:[#allocation8 + $0x1e8] sm:$0xff]
    %v546 = vld [vmem:[#allocation8 + $0x1f0] sm:$0xff]
    %v547 = vld [vmem:[#allocation8 + $0x1f8] sm:$0xff]
    %v548 = vld [vmem:[#allocation8 + $0x200] sm:$0xff]
    %v549 = vld [vmem:[#allocation8 + $0x208] sm:$0xff]
    %v550 = vld [vmem:[#allocation8 + $0x210] sm:$0xff]
    %v551 = vld [vmem:[#allocation8 + $0x218] sm:$0xff]
    %v552 = vld [vmem:[#allocation8 + $0x220] sm:$0xff]
    %v553 = vld [vmem:[#allocation8 + $0x228] sm:$0xff]
    %v554 = vld [vmem:[#allocation8 + $0x230] sm:$0xff]
    %v555 = vld [vmem:[#allocation8 + $0x238] sm:$0xff]
    %v556 = vld [vmem:[#allocation8 + $0x240] sm:$0xff]
    %v557 = vld [vmem:[#allocation8 + $0x248] sm:$0xff]
    %v558 = vld [vmem:[#allocation8 + $0x250] sm:$0xff]
    %v559 = vld [vmem:[#allocation8 + $0x258] sm:$0xff]
    %v560 = vld [vmem:[#allocation8 + $0x260] sm:$0xff]
    %v561 = vld [vmem:[#allocation8 + $0x268] sm:$0xff]
    %v562 = vld [vmem:[#allocation8 + $0x270] sm:$0xff]
    %v563 = vld [vmem:[#allocation8 + $0x278] sm:$0xff]
    %v564 = vld [vmem:[#allocation8 + $0x280] sm:$0xff]
    %v565 = vld [vmem:[#allocation8 + $0x288] sm:$0xff]
    %v566 = vld [vmem:[#allocation8 + $0x290] sm:$0xff]
    %v567 = vld [vmem:[#allocation8 + $0x298] sm:$0xff]
    %v568 = vld [vmem:[#allocation8 + $0x2a0] sm:$0xff]
    %v569 = vld [vmem:[#allocation8 + $0x2a8] sm:$0xff]
    %v570 = vld [vmem:[#allocation8 + $0x2b0] sm:$0xff]
    %v571 = vld [vmem:[#allocation8 + $0x2b8] sm:$0xff]
    %v572 = vld [vmem:[#allocation8 + $0x2c0] sm:$0xff]
    %v573 = vld [vmem:[#allocation8 + $0x2c8] sm:$0xff]
    %v574 = vld [vmem:[#allocation8 + $0x2d0] sm:$0xff]
    %v575 = vld [vmem:[#allocation8 + $0x2d8] sm:$0xff]
    %v576 = vld [vmem:[#allocation8 + $0x2e0] sm:$0xff]
    %v577 = vld [vmem:[#allocation8 + $0x2e8] sm:$0xff]
    %v578 = vld [vmem:[#allocation8 + $0x2f0] sm:$0xff]
    %v579 = vld [vmem:[#allocation8 + $0x2f8] sm:$0xff]
    %v580 = vld [vmem:[#allocation8 + $0x300] sm:$0xff]
    %v581 = vld [vmem:[#allocation8 + $0x308] sm:$0xff]
    %v582 = vld [vmem:[#allocation8 + $0x310] sm:$0xff]
    %v583 = vld [vmem:[#allocation8 + $0x318] sm:$0xff]
    %v584 = vld [vmem:[#allocation8 + $0x320] sm:$0xff]
    %v585 = vld [vmem:[#allocation8 + $0x328] sm:$0xff]
    %v586 = vld [vmem:[#allocation8 + $0x330] sm:$0xff]
    %v587 = vld [vmem:[#allocation8 + $0x338] sm:$0xff]
    %v588 = vld [vmem:[#allocation8 + $0x340] sm:$0xff]
    %v589 = vld [vmem:[#allocation8 + $0x348] sm:$0xff]
    %v590 = vld [vmem:[#allocation8 + $0x350] sm:$0xff]
    %v591 = vld [vmem:[#allocation8 + $0x358] sm:$0xff]
    %v592 = vld [vmem:[#allocation8 + $0x360] sm:$0xff]
    %v593 = vld [vmem:[#allocation8 + $0x368] sm:$0xff]
    %v594 = vld [vmem:[#allocation8 + $0x370] sm:$0xff]
    %v595 = vld [vmem:[#allocation8 + $0x378] sm:$0xff]
    %v596 = vld [vmem:[#allocation8 + $0x380] sm:$0xff]
    %v597 = vld [vmem:[#allocation8 + $0x388] sm:$0xff]
    %v598 = vld [vmem:[#allocation8 + $0x390] sm:$0xff]
    %v599 = vld [vmem:[#allocation8 + $0x398] sm:$0xff]
    %v600 = vld [vmem:[#allocation8 + $0x3a0] sm:$0xff]
    %v601 = vld [vmem:[#allocation8 + $0x3a8] sm:$0xff]
    %v602 = vld [vmem:[#allocation8 + $0x3b0] sm:$0xff]
    %v603 = vld [vmem:[#allocation8 + $0x3b8] sm:$0xff]
    %v604 = vld [vmem:[#allocation8 + $0x3c0] sm:$0xff]
    %v605 = vld [vmem:[#allocation8 + $0x3c8] sm:$0xff]
    %v606 = vld [vmem:[#allocation8 + $0x3d0] sm:$0xff]
    %v607 = vld [vmem:[#allocation8 + $0x3d8] sm:$0xff]
    %v608 = vld [vmem:[#allocation8 + $0x3e0] sm:$0xff]
    %v609 = vld [vmem:[#allocation8 + $0x3e8] sm:$0xff]
    %v610 = vld [vmem:[#allocation8 + $0x3f0] sm:$0xff]
    %v611 = vld [vmem:[#allocation8 + $0x3f8] sm:$0xff]
    %v612 = vld [vmem:[#allocation8 + $0x400] sm:$0xff]
    %v613 = vld [vmem:[#allocation8 + $0x408] sm:$0xff]
    %v614 = vld [vmem:[#allocation8 + $0x410] sm:$0xff]
    %v615 = vld [vmem:[#allocation8 + $0x418] sm:$0xff]
    %v616 = vld [vmem:[#allocation8 + $0x420] sm:$0xff]
    %v617 = vld [vmem:[#allocation8 + $0x428] sm:$0xff]
    %v618 = vld [vmem:[#allocation8 + $0x430] sm:$0xff]
    %v619 = vld [vmem:[#allocation8 + $0x438] sm:$0xff]
    %v620 = vld [vmem:[#allocation8 + $0x440] sm:$0xff]
    %v621 = vld [vmem:[#allocation8 + $0x448] sm:$0xff]
    %v622 = vld [vmem:[#allocation8 + $0x450] sm:$0xff]
    %v623 = vld [vmem:[#allocation8 + $0x458] sm:$0xff]
    %v624 = vld [vmem:[#allocation8 + $0x460] sm:$0xff]
    %v625 = vld [vmem:[#allocation8 + $0x468] sm:$0xff]
    %v626 = vld [vmem:[#allocation8 + $0x470] sm:$0xff]
    %v627 = vld [vmem:[#allocation8 + $0x478] sm:$0xff]
    %v628 = vld [vmem:[#allocation8 + $0x480] sm:$0xff]
    %v629 = vld [vmem:[#allocation8 + $0x488] sm:$0xff]
    %v630 = vld [vmem:[#allocation8 + $0x490] sm:$0xff]
    %v631 = vld [vmem:[#allocation8 + $0x498] sm:$0xff]
    %v632 = vld [vmem:[#allocation8 + $0x4a0] sm:$0xff]
    %v633 = vld [vmem:[#allocation8 + $0x4a8] sm:$0xff]
    %v634 = vld [vmem:[#allocation8 + $0x4b0] sm:$0xff]
    %v635 = vld [vmem:[#allocation8 + $0x4b8] sm:$0xff]
    %v636 = vld [vmem:[#allocation8 + $0x4c0] sm:$0xff]
    %v637 = vld [vmem:[#allocation8 + $0x4c8] sm:$0xff]
    %v638 = vld [vmem:[#allocation8 + $0x4d0] sm:$0xff]
    %v639 = vld [vmem:[#allocation8 + $0x4d8] sm:$0xff]
    %v640 = vld [vmem:[#allocation8 + $0x4e0] sm:$0xff]
    %v641 = vld [vmem:[#allocation8 + $0x4e8] sm:$0xff]
    %v642 = vld [vmem:[#allocation8 + $0x4f0] sm:$0xff]
    %v643 = vld [vmem:[#allocation8 + $0x4f8] sm:$0xff]
    %v644 = vld [vmem:[#allocation8 + $0x500] sm:$0xff]
    %v645 = vld [vmem:[#allocation8 + $0x508] sm:$0xff]
    %v646 = vld [vmem:[#allocation8 + $0x510] sm:$0xff]
    %v647 = vld [vmem:[#allocation8 + $0x518] sm:$0xff]
    %v648 = vld [vmem:[#allocation8 + $0x520] sm:$0xff]
    %v649 = vld [vmem:[#allocation8 + $0x528] sm:$0xff]
    %v650 = vld [vmem:[#allocation8 + $0x530] sm:$0xff]
    %v651 = vld [vmem:[#allocation8 + $0x538] sm:$0xff]
    %v652 = vld [vmem:[#allocation8 + $0x540] sm:$0xff]
    %v653 = vld [vmem:[#allocation8 + $0x548] sm:$0xff]
    %v654 = vld [vmem:[#allocation8 + $0x550] sm:$0xff]
    %v655 = vld [vmem:[#allocation8 + $0x558] sm:$0xff]
    %v656 = vld [vmem:[#allocation8 + $0x560] sm:$0xff]
    %v657 = vld [vmem:[#allocation8 + $0x568] sm:$0xff]
    %v658 = vld [vmem:[#allocation8 + $0x570] sm:$0xff]
    %v659 = vld [vmem:[#allocation8 + $0x578] sm:$0xff]
    %v660 = vld [vmem:[#allocation8 + $0x580] sm:$0xff]
    %v661 = vld [vmem:[#allocation8 + $0x588] sm:$0xff]
    %v662 = vld [vmem:[#allocation8 + $0x590] sm:$0xff]
    %v663 = vld [vmem:[#allocation8 + $0x598] sm:$0xff]
    %v664 = vld [vmem:[#allocation8 + $0x5a0] sm:$0xff]
    %v665 = vld [vmem:[#allocation8 + $0x5a8] sm:$0xff]
    %v666 = vld [vmem:[#allocation8 + $0x5b0] sm:$0xff]
    %v667 = vld [vmem:[#allocation8 + $0x5b8] sm:$0xff]
    %v668 = vld [vmem:[#allocation8 + $0x5c0] sm:$0xff]
    %v669 = vld [vmem:[#allocation8 + $0x5c8] sm:$0xff]
    %v670 = vld [vmem:[#allocation8 + $0x5d0] sm:$0xff]
    %v671 = vld [vmem:[#allocation8 + $0x5d8] sm:$0xff]
    %v672 = vld [vmem:[#allocation8 + $0x5e0] sm:$0xff]
    %v673 = vld [vmem:[#allocation8 + $0x5e8] sm:$0xff]
    %v674 = vld [vmem:[#allocation8 + $0x5f0] sm:$0xff]
    %v675 = vld [vmem:[#allocation8 + $0x5f8] sm:$0xff]
    %v676 = vld [vmem:[#allocation8 + $0x600] sm:$0xff]
    %v677 = vld [vmem:[#allocation8 + $0x608] sm:$0xff]
    %v678 = vld [vmem:[#allocation8 + $0x610] sm:$0xff]
    %v679 = vld [vmem:[#allocation8 + $0x618] sm:$0xff]
    %v680 = vld [vmem:[#allocation8 + $0x620] sm:$0xff]
    %v681 = vld [vmem:[#allocation8 + $0x628] sm:$0xff]
    %v682 = vld [vmem:[#allocation8 + $0x630] sm:$0xff]
    %v683 = vld [vmem:[#allocation8 + $0x638] sm:$0xff]
    %v684 = vld [vmem:[#allocation8 + $0x640] sm:$0xff]
    %v685 = vld [vmem:[#allocation8 + $0x648] sm:$0xff]
    %v686 = vld [vmem:[#allocation8 + $0x650] sm:$0xff]
    %v687 = vld [vmem:[#allocation8 + $0x658] sm:$0xff]
    %v688 = vld [vmem:[#allocation8 + $0x660] sm:$0xff]
    %v689 = vld [vmem:[#allocation8 + $0x668] sm:$0xff]
    %v690 = vld [vmem:[#allocation8 + $0x670] sm:$0xff]
    %v691 = vld [vmem:[#allocation8 + $0x678] sm:$0xff]
    %v692 = vld [vmem:[#allocation8 + $0x680] sm:$0xff]
    %v693 = vld [vmem:[#allocation8 + $0x688] sm:$0xff]
    %v694 = vld [vmem:[#allocation8 + $0x690] sm:$0xff]
    %v695 = vld [vmem:[#allocation8 + $0x698] sm:$0xff]
    %v696 = vld [vmem:[#allocation8 + $0x6a0] sm:$0xff]
    %v697 = vld [vmem:[#allocation8 + $0x6a8] sm:$0xff]
    %v698 = vld [vmem:[#allocation8 + $0x6b0] sm:$0xff]
    %v699 = vld [vmem:[#allocation8 + $0x6b8] sm:$0xff]
    %v700 = vld [vmem:[#allocation8 + $0x6c0] sm:$0xff]
    %v701 = vld [vmem:[#allocation8 + $0x6c8] sm:$0xff]
    %v702 = vld [vmem:[#allocation8 + $0x6d0] sm:$0xff]
    %v703 = vld [vmem:[#allocation8 + $0x6d8] sm:$0xff]
    %v704 = vld [vmem:[#allocation8 + $0x6e0] sm:$0xff]
    %v705 = vld [vmem:[#allocation8 + $0x6e8] sm:$0xff]
    %v706 = vld [vmem:[#allocation8 + $0x6f0] sm:$0xff]
    %v707 = vld [vmem:[#allocation8 + $0x6f8] sm:$0xff]
    %v708 = vld [vmem:[#allocation8 + $0x700] sm:$0xff]
    %v709 = vld [vmem:[#allocation8 + $0x708] sm:$0xff]
    %v710 = vld [vmem:[#allocation8 + $0x710] sm:$0xff]
    %v711 = vld [vmem:[#allocation8 + $0x718] sm:$0xff]
    %v712 = vld [vmem:[#allocation8 + $0x720] sm:$0xff]
    %v713 = vld [vmem:[#allocation8 + $0x728] sm:$0xff]
    %v714 = vld [vmem:[#allocation8 + $0x730] sm:$0xff]
    %v715 = vld [vmem:[#allocation8 + $0x738] sm:$0xff]
    %v716 = vld [vmem:[#allocation8 + $0x740] sm:$0xff]
    %v717 = vld [vmem:[#allocation8 + $0x748] sm:$0xff]
    %v718 = vld [vmem:[#allocation8 + $0x750] sm:$0xff]
    %v719 = vld [vmem:[#allocation8 + $0x758] sm:$0xff]
    %v720 = vld [vmem:[#allocation8 + $0x760] sm:$0xff]
    %v721 = vld [vmem:[#allocation8 + $0x768] sm:$0xff]
    %v722 = vld [vmem:[#allocation8 + $0x770] sm:$0xff]
    %v723 = vld [vmem:[#allocation8 + $0x778] sm:$0xff]
    %v724 = vld [vmem:[#allocation8 + $0x780] sm:$0xff]
    %v725 = vld [vmem:[#allocation8 + $0x788] sm:$0xff]
    %v726 = vld [vmem:[#allocation8 + $0x790] sm:$0xff]
    %v727 = vld [vmem:[#allocation8 + $0x798] sm:$0xff]
    %v728 = vld [vmem:[#allocation8 + $0x7a0] sm:$0xff]
    %v729 = vld [vmem:[#allocation8 + $0x7a8] sm:$0xff]
    %v730 = vld [vmem:[#allocation8 + $0x7b0] sm:$0xff]
    %v731 = vld [vmem:[#allocation8 + $0x7b8] sm:$0xff]
    %v732 = vld [vmem:[#allocation8 + $0x7c0] sm:$0xff]
    %v733 = vld [vmem:[#allocation8 + $0x7c8] sm:$0xff]
    %v734 = vld [vmem:[#allocation8 + $0x7d0] sm:$0xff]
    %v735 = vld [vmem:[#allocation8 + $0x7d8] sm:$0xff]
    %v736 = vld [vmem:[#allocation8 + $0x7e0] sm:$0xff]
    %v737 = vld [vmem:[#allocation8 + $0x7e8] sm:$0xff]
    %v738 = vld [vmem:[#allocation8 + $0x7f0] sm:$0xff]
    %v739 = vld [vmem:[#allocation8 + $0x7f8] sm:$0xff]
    %740 = vmatprep.subr.mxu0 %v485
    %741 = vmatpush1.msra.mxu0 %v484
    %742 = vmatprep.subr.mxu0 %v493
    %743 = vmatpush1.msra.mxu0 %v492
    %744 = vmatprep.subr.mxu0 %v501
    %745 = vmatpush1.msra.mxu0 %v500
    %746 = vmatprep.subr.mxu0 %v509
    %747 = vmatpush1.msra.mxu0 %v508
    %748 = vmatprep.subr.mxu0 %v517
    %749 = vmatpush1.msra.mxu0 %v516
    %750 = vmatprep.subr.mxu0 %v525
    %751 = vmatpush1.msra.mxu0 %v524
    %752 = vmatprep.subr.mxu0 %v533
    %753 = vmatpush1.msra.mxu0 %v532
    %754 = vmatprep.subr.mxu0 %v541
    %755 = vmatpush1.msra.mxu0 %v540
    %756 = vmatprep.subr.mxu0 %v549
    %757 = vmatpush1.msra.mxu0 %v548
    %758 = vmatprep.subr.mxu0 %v557
    %759 = vmatpush1.msra.mxu0 %v556
    %760 = vmatprep.subr.mxu0 %v565
    %761 = vmatpush1.msra.mxu0 %v564
    %762 = vmatprep.subr.mxu0 %v573
    %763 = vmatpush1.msra.mxu0 %v572
    %764 = vmatprep.subr.mxu0 %v581
    %765 = vmatpush1.msra.mxu0 %v580
    %766 = vmatprep.subr.mxu0 %v589
    %767 = vmatpush1.msra.mxu0 %v588
    %768 = vmatprep.subr.mxu0 %v597
    %769 = vmatpush1.msra.mxu0 %v596
    %770 = vmatprep.subr.mxu0 %v605
    %771 = vmatpush1.msra.mxu0 %v604
    %772 = vmatprep.subr.mxu0 %v613
    %773 = vmatpush1.msra.mxu0 %v612
    %774 = vmatprep.subr.mxu0 %v621
    %775 = vmatpush1.msra.mxu0 %v620
    %776 = vmatprep.subr.mxu0 %v629
    %777 = vmatpush1.msra.mxu0 %v628
    %778 = vmatprep.subr.mxu0 %v637
    %779 = vmatpush1.msra.mxu0 %v636
    %780 = vmatprep.subr.mxu0 %v645
    %781 = vmatpush1.msra.mxu0 %v644
    %782 = vmatprep.subr.mxu0 %v653
    %783 = vmatpush1.msra.mxu0 %v652
    %784 = vmatprep.subr.mxu0 %v661
    %785 = vmatpush1.msra.mxu0 %v660
    %786 = vmatprep.subr.mxu0 %v669
    %787 = vmatpush1.msra.mxu0 %v668
    %788 = vmatprep.subr.mxu0 %v677
    %789 = vmatpush1.msra.mxu0 %v676
    %790 = vmatprep.subr.mxu0 %v685
    %791 = vmatpush1.msra.mxu0 %v684
    %792 = vmatprep.subr.mxu0 %v693
    %793 = vmatpush1.msra.mxu0 %v692
    %794 = vmatprep.subr.mxu0 %v701
    %795 = vmatpush1.msra.mxu0 %v700
    %796 = vmatprep.subr.mxu0 %v709
    %797 = vmatpush1.msra.mxu0 %v708
    %798 = vmatprep.subr.mxu0 %v717
    %799 = vmatpush1.msra.mxu0 %v716
    %800 = vmatprep.subr.mxu0 %v725
    %801 = vmatpush1.msra.mxu0 %v724
    %802 = vmatprep.subr.mxu0 %v733
    %803 = vmatpush1.msra.mxu0 %v732
    %804 = vmatprep.mubr.f32.mxu0 0.0
    %805 = vmatmul.mubr.f32.gmra.mrb[0].mxu0 %v483
    %v806 = vpop.f32.mrb[0].mxu0
    %v807 = vadd.f32 0.0, %v806
    %v808 = vpop.f32.mrb[0].mxu0
    %v809 = vadd.f32 0.0, %v808
    %810 = vdwg.mxu0
    %811 = vmatprep.subr.mxu0 %v487
    %812 = vmatpush1.msra.mxu0 %v486
    %813 = vmatprep.subr.mxu0 %v495
    %814 = vmatpush1.msra.mxu0 %v494
    %815 = vmatprep.subr.mxu0 %v503
    %816 = vmatpush1.msra.mxu0 %v502
    %817 = vmatprep.subr.mxu0 %v511
    %818 = vmatpush1.msra.mxu0 %v510
    %819 = vmatprep.subr.mxu0 %v519
    %820 = vmatpush1.msra.mxu0 %v518
    %821 = vmatprep.subr.mxu0 %v527
    %822 = vmatpush1.msra.mxu0 %v526
    %823 = vmatprep.subr.mxu0 %v535
    %824 = vmatpush1.msra.mxu0 %v534
    %825 = vmatprep.subr.mxu0 %v543
    %826 = vmatpush1.msra.mxu0 %v542
    %827 = vmatprep.subr.mxu0 %v551
    %828 = vmatpush1.msra.mxu0 %v550
    %829 = vmatprep.subr.mxu0 %v559
    %830 = vmatpush1.msra.mxu0 %v558
    %831 = vmatprep.subr.mxu0 %v567
    %832 = vmatpush1.msra.mxu0 %v566
    %833 = vmatprep.subr.mxu0 %v575
    %834 = vmatpush1.msra.mxu0 %v574
    %835 = vmatprep.subr.mxu0 %v583
    %836 = vmatpush1.msra.mxu0 %v582
    %837 = vmatprep.subr.mxu0 %v591
    %838 = vmatpush1.msra.mxu0 %v590
    %839 = vmatprep.subr.mxu0 %v599
    %840 = vmatpush1.msra.mxu0 %v598
    %841 = vmatprep.subr.mxu0 %v607
    %842 = vmatpush1.msra.mxu0 %v606
    %843 = vmatprep.subr.mxu0 %v615
    %844 = vmatpush1.msra.mxu0 %v614
    %845 = vmatprep.subr.mxu0 %v623
    %846 = vmatpush1.msra.mxu0 %v622
    %847 = vmatprep.subr.mxu0 %v631
    %848 = vmatpush1.msra.mxu0 %v630
    %849 = vmatprep.subr.mxu0 %v639
    %850 = vmatpush1.msra.mxu0 %v638
    %851 = vmatprep.subr.mxu0 %v647
    %852 = vmatpush1.msra.mxu0 %v646
    %853 = vmatprep.subr.mxu0 %v655
    %854 = vmatpush1.msra.mxu0 %v654
    %855 = vmatprep.subr.mxu0 %v663
    %856 = vmatpush1.msra.mxu0 %v662
    %857 = vmatprep.subr.mxu0 %v671
    %858 = vmatpush1.msra.mxu0 %v670
    %859 = vmatprep.subr.mxu0 %v679
    %860 = vmatpush1.msra.mxu0 %v678
    %861 = vmatprep.subr.mxu0 %v687
    %862 = vmatpush1.msra.mxu0 %v686
    %863 = vmatprep.subr.mxu0 %v695
    %864 = vmatpush1.msra.mxu0 %v694
    %865 = vmatprep.subr.mxu0 %v703
    %866 = vmatpush1.msra.mxu0 %v702
    %867 = vmatprep.subr.mxu0 %v711
    %868 = vmatpush1.msra.mxu0 %v710
    %869 = vmatprep.subr.mxu0 %v719
    %870 = vmatpush1.msra.mxu0 %v718
    %871 = vmatprep.subr.mxu0 %v727
    %872 = vmatpush1.msra.mxu0 %v726
    %873 = vmatprep.subr.mxu0 %v735
    %874 = vmatpush1.msra.mxu0 %v734
    %875 = vmatprep.mubr.f32.mxu0 0.0
    %876 = vmatmul.mubr.f32.gmra.mrb[0].mxu0 %v483
    %v877 = vpop.f32.mrb[0].mxu0
    %v878 = vadd.f32 0.0, %v877
    %v879 = vpop.f32.mrb[0].mxu0
    %v880 = vadd.f32 0.0, %v879
    %881 = vdwg.mxu0
    %882 = vmatprep.subr.mxu0 %v489
    %883 = vmatpush1.msra.mxu0 %v488
    %884 = vmatprep.subr.mxu0 %v497
    %885 = vmatpush1.msra.mxu0 %v496
    %886 = vmatprep.subr.mxu0 %v505
    %887 = vmatpush1.msra.mxu0 %v504
    %888 = vmatprep.subr.mxu0 %v513
    %889 = vmatpush1.msra.mxu0 %v512
    %890 = vmatprep.subr.mxu0 %v521
    %891 = vmatpush1.msra.mxu0 %v520
    %892 = vmatprep.subr.mxu0 %v529
    %893 = vmatpush1.msra.mxu0 %v528
    %894 = vmatprep.subr.mxu0 %v537
    %895 = vmatpush1.msra.mxu0 %v536
    %896 = vmatprep.subr.mxu0 %v545
    %897 = vmatpush1.msra.mxu0 %v544
    %898 = vmatprep.subr.mxu0 %v553
    %899 = vmatpush1.msra.mxu0 %v552
    %900 = vmatprep.subr.mxu0 %v561
    %901 = vmatpush1.msra.mxu0 %v560
    %902 = vmatprep.subr.mxu0 %v569
    %903 = vmatpush1.msra.mxu0 %v568
    %904 = vmatprep.subr.mxu0 %v577
    %905 = vmatpush1.msra.mxu0 %v576
    %906 = vmatprep.subr.mxu0 %v585
    %907 = vmatpush1.msra.mxu0 %v584
    %908 = vmatprep.subr.mxu0 %v593
    %909 = vmatpush1.msra.mxu0 %v592
    %910 = vmatprep.subr.mxu0 %v601
    %911 = vmatpush1.msra.mxu0 %v600
    %912 = vmatprep.subr.mxu0 %v609
    %913 = vmatpush1.msra.mxu0 %v608
    %914 = vmatprep.subr.mxu0 %v617
    %915 = vmatpush1.msra.mxu0 %v616
    %916 = vmatprep.subr.mxu0 %v625
    %917 = vmatpush1.msra.mxu0 %v624
    %918 = vmatprep.subr.mxu0 %v633
    %919 = vmatpush1.msra.mxu0 %v632
    %920 = vmatprep.subr.mxu0 %v641
    %921 = vmatpush1.msra.mxu0 %v640
    %922 = vmatprep.subr.mxu0 %v649
    %923 = vmatpush1.msra.mxu0 %v648
    %924 = vmatprep.subr.mxu0 %v657
    %925 = vmatpush1.msra.mxu0 %v656
    %926 = vmatprep.subr.mxu0 %v665
    %927 = vmatpush1.msra.mxu0 %v664
    %928 = vmatprep.subr.mxu0 %v673
    %929 = vmatpush1.msra.mxu0 %v672
    %930 = vmatprep.subr.mxu0 %v681
    %931 = vmatpush1.msra.mxu0 %v680
    %932 = vmatprep.subr.mxu0 %v689
    %933 = vmatpush1.msra.mxu0 %v688
    %934 = vmatprep.subr.mxu0 %v697
    %935 = vmatpush1.msra.mxu0 %v696
    %936 = vmatprep.subr.mxu0 %v705
    %937 = vmatpush1.msra.mxu0 %v704
    %938 = vmatprep.subr.mxu0 %v713
    %939 = vmatpush1.msra.mxu0 %v712
    %940 = vmatprep.subr.mxu0 %v721
    %941 = vmatpush1.msra.mxu0 %v720
    %942 = vmatprep.subr.mxu0 %v729
    %943 = vmatpush1.msra.mxu0 %v728
    %944 = vmatprep.subr.mxu0 %v737
    %945 = vmatpush1.msra.mxu0 %v736
    %946 = vmatprep.mubr.f32.mxu0 0.0
    %947 = vmatmul.mubr.f32.gmra.mrb[0].mxu0 %v483
    %v948 = vpop.f32.mrb[0].mxu0
    %v949 = vadd.f32 0.0, %v948
    %v950 = vpop.f32.mrb[0].mxu0
    %v951 = vadd.f32 0.0, %v950
    %952 = vdwg.mxu0
    %953 = vmatprep.subr.mxu0 %v491
    %954 = vmatpush1.msra.mxu0 %v490
    %955 = vmatprep.subr.mxu0 %v499
    %956 = vmatpush1.msra.mxu0 %v498
    %957 = vmatprep.subr.mxu0 %v507
    %958 = vmatpush1.msra.mxu0 %v506
    %959 = vmatprep.subr.mxu0 %v515
    %960 = vmatpush1.msra.mxu0 %v514
    %961 = vmatprep.subr.mxu0 %v523
    %962 = vmatpush1.msra.mxu0 %v522
    %963 = vmatprep.subr.mxu0 %v531
    %964 = vmatpush1.msra.mxu0 %v530
    %965 = vmatprep.subr.mxu0 %v539
    %966 = vmatpush1.msra.mxu0 %v538
    %967 = vmatprep.subr.mxu0 %v547
    %968 = vmatpush1.msra.mxu0 %v546
    %969 = vmatprep.subr.mxu0 %v555
    %970 = vmatpush1.msra.mxu0 %v554
    %971 = vmatprep.subr.mxu0 %v563
    %972 = vmatpush1.msra.mxu0 %v562
    %973 = vmatprep.subr.mxu0 %v571
    %974 = vmatpush1.msra.mxu0 %v570
    %975 = vmatprep.subr.mxu0 %v579
    %976 = vmatpush1.msra.mxu0 %v578
    %977 = vmatprep.subr.mxu0 %v587
    %978 = vmatpush1.msra.mxu0 %v586
    %979 = vmatprep.subr.mxu0 %v595
    %980 = vmatpush1.msra.mxu0 %v594
    %981 = vmatprep.subr.mxu0 %v603
    %982 = vmatpush1.msra.mxu0 %v602
    %983 = vmatprep.subr.mxu0 %v611
    %984 = vmatpush1.msra.mxu0 %v610
    %985 = vmatprep.subr.mxu0 %v619
    %986 = vmatpush1.msra.mxu0 %v618
    %987 = vmatprep.subr.mxu0 %v627
    %988 = vmatpush1.msra.mxu0 %v626
    %989 = vmatprep.subr.mxu0 %v635
    %990 = vmatpush1.msra.mxu0 %v634
    %991 = vmatprep.subr.mxu0 %v643
    %992 = vmatpush1.msra.mxu0 %v642
    %993 = vmatprep.subr.mxu0 %v651
    %994 = vmatpush1.msra.mxu0 %v650
    %995 = vmatprep.subr.mxu0 %v659
    %996 = vmatpush1.msra.mxu0 %v658
    %997 = vmatprep.subr.mxu0 %v667
    %998 = vmatpush1.msra.mxu0 %v666
    %999 = vmatprep.subr.mxu0 %v675
    %1000 = vmatpush1.msra.mxu0 %v674
    %1001 = vmatprep.subr.mxu0 %v683
    %1002 = vmatpush1.msra.mxu0 %v682
    %1003 = vmatprep.subr.mxu0 %v691
    %1004 = vmatpush1.msra.mxu0 %v690
    %1005 = vmatprep.subr.mxu0 %v699
    %1006 = vmatpush1.msra.mxu0 %v698
    %1007 = vmatprep.subr.mxu0 %v707
    %1008 = vmatpush1.msra.mxu0 %v706
    %1009 = vmatprep.subr.mxu0 %v715
    %1010 = vmatpush1.msra.mxu0 %v714
    %1011 = vmatprep.subr.mxu0 %v723
    %1012 = vmatpush1.msra.mxu0 %v722
    %1013 = vmatprep.subr.mxu0 %v731
    %1014 = vmatpush1.msra.mxu0 %v730
    %1015 = vmatprep.subr.mxu0 %v739
    %1016 = vmatpush1.msra.mxu0 %v738
    %1017 = vmatprep.mubr.f32.mxu0 0.0
    %1018 = vmatmul.mubr.f32.gmra.mrb[0].mxu0 %v483
    %v1019 = vpop.f32.mrb[0].mxu0
    %v1020 = vadd.f32 0.0, %v1019
    %v1021 = vpop.f32.mrb[0].mxu0
    %v1022 = vadd.f32 0.0, %v1021
    %1023 = vdwg.mxu0
    %v1024 = vadd.f32 %v949, %v439
    %v1025 = vadd.f32 %v951, %v443
    %v1026 = vadd.f32 %v1020, %v447
    %v1027 = vadd.f32 %v1022, %v451
    %v1028 = vxor.u32 %v1024, 2147483648
    %v1029 = vxor.u32 %v1025, 2147483648
    %v1030 = vxor.u32 %v1026, 2147483648
    %v1031 = vmul.f32 %v1028, 1.442695
    %v1032 = vpow.pop %v1031
    %v1033 = vmul.f32 %v1029, 1.442695
    %v1034 = vpow.pop %v1033
    %v1035 = vmul.f32 %v1030, 1.442695
    %v1036 = vpow.pop %v1035
    %v1037 = vadd.f32 %v1032, 1.0
    %v1038 = vadd.f32 %v1034, 1.0
    %v1039 = vadd.f32 %v1036, 1.0
    %v1040 = vrcp.pop %v1037
    %v1041 = vmul.f32 1.0, %v1040
    %v1042 = vrcp.pop %v1038
    %v1043 = vmul.f32 1.0, %v1042
    %v1044 = vrcp.pop %v1039
    %v1045 = vmul.f32 1.0, %v1044
    %v1046 = vtanh.pop %v1027
    %v1047 = vmul.f32 %v1043, 0.0
    %v1048 = vmul.f32 %v1041, %v1046
    %v1049 = vadd.f32 %v1047, %v1048
    %v1050 = vtanh.pop %v1049
    %v1051 = vmul.f32 %v1045, %v1050
    %v1052 = vld [vmem:[#allocation2 + $0x20] sm:$0xff]
    %v1053 = vld [vmem:[#allocation2 + $0x28] sm:$0xff]
    %v1054 = vld [vmem:[#allocation2 + $0x30] sm:$0xff]
    %v1055 = vld [vmem:[#allocation2 + $0x38] sm:$0xff]
    %v1056 = vadd.f32 %v1052, %v807
    %v1057 = vadd.f32 %v1053, %v809
    %v1058 = vadd.f32 %v1054, %v878
    %v1059 = vadd.f32 %v1055, %v880
    %v1060 = vxor.u32 %v1056, 2147483648
    %v1061 = vxor.u32 %v1057, 2147483648
    %v1062 = vxor.u32 %v1058, 2147483648
    %v1063 = vmul.f32 %v1060, 1.442695
    %v1064 = vpow.pop %v1063
    %v1065 = vmul.f32 %v1061, 1.442695
    %v1066 = vpow.pop %v1065
    %v1067 = vmul.f32 %v1062, 1.442695
    %v1068 = vpow.pop %v1067
    %v1069 = vadd.f32 %v1064, 1.0
    %v1070 = vadd.f32 %v1066, 1.0
    %v1071 = vadd.f32 %v1068, 1.0
    %v1072 = vrcp.pop %v1069
    %v1073 = vmul.f32 1.0, %v1072
    %v1074 = vrcp.pop %v1070
    %v1075 = vmul.f32 1.0, %v1074
    %v1076 = vrcp.pop %v1071
    %v1077 = vmul.f32 1.0, %v1076
    %v1078 = vtanh.pop %v1059
    %v1079 = vmul.f32 %v1075, %v481
    %v1080 = vmul.f32 %v1073, %v1078
    %v1081 = vadd.f32 %v1079, %v1080
    %v1082 = vtanh.pop %v1081
    %v1083 = vmul.f32 %v1077, %v1082
    %1084 = vmatprep.subr.mxu0 %v485
    %1085 = vmatpush1.msra.mxu0 %v484
    %1086 = vmatprep.subr.mxu0 %v493
    %1087 = vmatpush1.msra.mxu0 %v492
    %1088 = vmatprep.subr.mxu0 %v501
    %1089 = vmatpush1.msra.mxu0 %v500
    %1090 = vmatprep.subr.mxu0 %v509
    %1091 = vmatpush1.msra.mxu0 %v508
    %1092 = vmatprep.subr.mxu0 %v517
    %1093 = vmatpush1.msra.mxu0 %v516
    %1094 = vmatprep.subr.mxu0 %v525
    %1095 = vmatpush1.msra.mxu0 %v524
    %1096 = vmatprep.subr.mxu0 %v533
    %1097 = vmatpush1.msra.mxu0 %v532
    %1098 = vmatprep.subr.mxu0 %v541
    %1099 = vmatpush1.msra.mxu0 %v540
    %1100 = vmatprep.subr.mxu0 %v549
    %1101 = vmatpush1.msra.mxu0 %v548
    %1102 = vmatprep.subr.mxu0 %v557
    %1103 = vmatpush1.msra.mxu0 %v556
    %1104 = vmatprep.subr.mxu0 %v565
    %1105 = vmatpush1.msra.mxu0 %v564
    %1106 = vmatprep.subr.mxu0 %v573
    %1107 = vmatpush1.msra.mxu0 %v572
    %1108 = vmatprep.subr.mxu0 %v581
    %1109 = vmatpush1.msra.mxu0 %v580
    %1110 = vmatprep.subr.mxu0 %v589
    %1111 = vmatpush1.msra.mxu0 %v588
    %1112 = vmatprep.subr.mxu0 %v597
    %1113 = vmatpush1.msra.mxu0 %v596
    %1114 = vmatprep.subr.mxu0 %v605
    %1115 = vmatpush1.msra.mxu0 %v604
    %1116 = vmatprep.subr.mxu0 %v613
    %1117 = vmatpush1.msra.mxu0 %v612
    %1118 = vmatprep.subr.mxu0 %v621
    %1119 = vmatpush1.msra.mxu0 %v620
    %1120 = vmatprep.subr.mxu0 %v629
    %1121 = vmatpush1.msra.mxu0 %v628
    %1122 = vmatprep.subr.mxu0 %v637
    %1123 = vmatpush1.msra.mxu0 %v636
    %1124 = vmatprep.subr.mxu0 %v645
    %1125 = vmatpush1.msra.mxu0 %v644
    %1126 = vmatprep.subr.mxu0 %v653
    %1127 = vmatpush1.msra.mxu0 %v652
    %1128 = vmatprep.subr.mxu0 %v661
    %1129 = vmatpush1.msra.mxu0 %v660
    %1130 = vmatprep.subr.mxu0 %v669
    %1131 = vmatpush1.msra.mxu0 %v668
    %1132 = vmatprep.subr.mxu0 %v677
    %1133 = vmatpush1.msra.mxu0 %v676
    %1134 = vmatprep.subr.mxu0 %v685
    %1135 = vmatpush1.msra.mxu0 %v684
    %1136 = vmatprep.subr.mxu0 %v693
    %1137 = vmatpush1.msra.mxu0 %v692
    %1138 = vmatprep.subr.mxu0 %v701
    %1139 = vmatpush1.msra.mxu0 %v700
    %1140 = vmatprep.subr.mxu0 %v709
    %1141 = vmatpush1.msra.mxu0 %v708
    %1142 = vmatprep.subr.mxu0 %v717
    %1143 = vmatpush1.msra.mxu0 %v716
    %1144 = vmatprep.subr.mxu0 %v725
    %1145 = vmatpush1.msra.mxu0 %v724
    %1146 = vmatprep.subr.mxu0 %v733
    %1147 = vmatpush1.msra.mxu0 %v732
    %1148 = vmatprep.mubr.f32.mxu0 %v1051
    %1149 = vmatmul.mubr.f32.gmra.mrb[0].mxu0 %v1083
    %v1150 = vpop.f32.mrb[0].mxu0
    %v1151 = vadd.f32 0.0, %v1150
    %v1152 = vpop.f32.mrb[0].mxu0
    %v1153 = vadd.f32 0.0, %v1152
    %1154 = vdwg.mxu0
    %1155 = vmatprep.subr.mxu0 %v487
    %1156 = vmatpush1.msra.mxu0 %v486
    %1157 = vmatprep.subr.mxu0 %v495
    %1158 = vmatpush1.msra.mxu0 %v494
    %1159 = vmatprep.subr.mxu0 %v503
    %1160 = vmatpush1.msra.mxu0 %v502
    %1161 = vmatprep.subr.mxu0 %v511
    %1162 = vmatpush1.msra.mxu0 %v510
    %1163 = vmatprep.subr.mxu0 %v519
    %1164 = vmatpush1.msra.mxu0 %v518
    %1165 = vmatprep.subr.mxu0 %v527
    %1166 = vmatpush1.msra.mxu0 %v526
    %1167 = vmatprep.subr.mxu0 %v535
    %1168 = vmatpush1.msra.mxu0 %v534
    %1169 = vmatprep.subr.mxu0 %v543
    %1170 = vmatpush1.msra.mxu0 %v542
    %1171 = vmatprep.subr.mxu0 %v551
    %1172 = vmatpush1.msra.mxu0 %v550
    %1173 = vmatprep.subr.mxu0 %v559
    %1174 = vmatpush1.msra.mxu0 %v558
    %1175 = vmatprep.subr.mxu0 %v567
    %1176 = vmatpush1.msra.mxu0 %v566
    %1177 = vmatprep.subr.mxu0 %v575
    %1178 = vmatpush1.msra.mxu0 %v574
    %1179 = vmatprep.subr.mxu0 %v583
    %1180 = vmatpush1.msra.mxu0 %v582
    %1181 = vmatprep.subr.mxu0 %v591
    %1182 = vmatpush1.msra.mxu0 %v590
    %1183 = vmatprep.subr.mxu0 %v599
    %1184 = vmatpush1.msra.mxu0 %v598
    %1185 = vmatprep.subr.mxu0 %v607
    %1186 = vmatpush1.msra.mxu0 %v606
    %1187 = vmatprep.subr.mxu0 %v615
    %1188 = vmatpush1.msra.mxu0 %v614
    %1189 = vmatprep.subr.mxu0 %v623
    %1190 = vmatpush1.msra.mxu0 %v622
    %1191 = vmatprep.subr.mxu0 %v631
    %1192 = vmatpush1.msra.mxu0 %v630
    %1193 = vmatprep.subr.mxu0 %v639
    %1194 = vmatpush1.msra.mxu0 %v638
    %1195 = vmatprep.subr.mxu0 %v647
    %1196 = vmatpush1.msra.mxu0 %v646
    %1197 = vmatprep.subr.mxu0 %v655
    %1198 = vmatpush1.msra.mxu0 %v654
    %1199 = vmatprep.subr.mxu0 %v663
    %1200 = vmatpush1.msra.mxu0 %v662
    %1201 = vmatprep.subr.mxu0 %v671
    %1202 = vmatpush1.msra.mxu0 %v670
    %1203 = vmatprep.subr.mxu0 %v679
    %1204 = vmatpush1.msra.mxu0 %v678
    %1205 = vmatprep.subr.mxu0 %v687
    %1206 = vmatpush1.msra.mxu0 %v686
    %1207 = vmatprep.subr.mxu0 %v695
    %1208 = vmatpush1.msra.mxu0 %v694
    %1209 = vmatprep.subr.mxu0 %v703
    %1210 = vmatpush1.msra.mxu0 %v702
    %1211 = vmatprep.subr.mxu0 %v711
    %1212 = vmatpush1.msra.mxu0 %v710
    %1213 = vmatprep.subr.mxu0 %v719
    %1214 = vmatpush1.msra.mxu0 %v718
    %1215 = vmatprep.subr.mxu0 %v727
    %1216 = vmatpush1.msra.mxu0 %v726
    %1217 = vmatprep.subr.mxu0 %v735
    %1218 = vmatpush1.msra.mxu0 %v734
    %1219 = vmatprep.mubr.f32.mxu0 %v1051
    %1220 = vmatmul.mubr.f32.gmra.mrb[0].mxu0 %v1083
    %v1221 = vpop.f32.mrb[0].mxu0
    %v1222 = vadd.f32 0.0, %v1221
    %v1223 = vpop.f32.mrb[0].mxu0
    %v1224 = vadd.f32 0.0, %v1223
    %1225 = vdwg.mxu0
    %1226 = vmatprep.subr.mxu0 %v489
    %1227 = vmatpush1.msra.mxu0 %v488
    %1228 = vmatprep.subr.mxu0 %v497
    %1229 = vmatpush1.msra.mxu0 %v496
    %1230 = vmatprep.subr.mxu0 %v505
    %1231 = vmatpush1.msra.mxu0 %v504
    %1232 = vmatprep.subr.mxu0 %v513
    %1233 = vmatpush1.msra.mxu0 %v512
    %1234 = vmatprep.subr.mxu0 %v521
    %1235 = vmatpush1.msra.mxu0 %v520
    %1236 = vmatprep.subr.mxu0 %v529
    %1237 = vmatpush1.msra.mxu0 %v528
    %1238 = vmatprep.subr.mxu0 %v537
    %1239 = vmatpush1.msra.mxu0 %v536
    %1240 = vmatprep.subr.mxu0 %v545
    %1241 = vmatpush1.msra.mxu0 %v544
    %1242 = vmatprep.subr.mxu0 %v553
    %1243 = vmatpush1.msra.mxu0 %v552
    %1244 = vmatprep.subr.mxu0 %v561
    %1245 = vmatpush1.msra.mxu0 %v560
    %1246 = vmatprep.subr.mxu0 %v569
    %1247 = vmatpush1.msra.mxu0 %v568
    %1248 = vmatprep.subr.mxu0 %v577
    %1249 = vmatpush1.msra.mxu0 %v576
    %1250 = vmatprep.subr.mxu0 %v585
    %1251 = vmatpush1.msra.mxu0 %v584
    %1252 = vmatprep.subr.mxu0 %v593
    %1253 = vmatpush1.msra.mxu0 %v592
    %1254 = vmatprep.subr.mxu0 %v601
    %1255 = vmatpush1.msra.mxu0 %v600
    %1256 = vmatprep.subr.mxu0 %v609
    %1257 = vmatpush1.msra.mxu0 %v608
    %1258 = vmatprep.subr.mxu0 %v617
    %1259 = vmatpush1.msra.mxu0 %v616
    %1260 = vmatprep.subr.mxu0 %v625
    %1261 = vmatpush1.msra.mxu0 %v624
    %1262 = vmatprep.subr.mxu0 %v633
    %1263 = vmatpush1.msra.mxu0 %v632
    %1264 = vmatprep.subr.mxu0 %v641
    %1265 = vmatpush1.msra.mxu0 %v640
    %1266 = vmatprep.subr.mxu0 %v649
    %1267 = vmatpush1.msra.mxu0 %v648
    %1268 = vmatprep.subr.mxu0 %v657
    %1269 = vmatpush1.msra.mxu0 %v656
    %1270 = vmatprep.subr.mxu0 %v665
    %1271 = vmatpush1.msra.mxu0 %v664
    %1272 = vmatprep.subr.mxu0 %v673
    %1273 = vmatpush1.msra.mxu0 %v672
    %1274 = vmatprep.subr.mxu0 %v681
    %1275 = vmatpush1.msra.mxu0 %v680
    %1276 = vmatprep.subr.mxu0 %v689
    %1277 = vmatpush1.msra.mxu0 %v688
    %1278 = vmatprep.subr.mxu0 %v697
    %1279 = vmatpush1.msra.mxu0 %v696
    %1280 = vmatprep.subr.mxu0 %v705
    %1281 = vmatpush1.msra.mxu0 %v704
    %1282 = vmatprep.subr.mxu0 %v713
    %1283 = vmatpush1.msra.mxu0 %v712
    %1284 = vmatprep.subr.mxu0 %v721
    %1285 = vmatpush1.msra.mxu0 %v720
    %1286 = vmatprep.subr.mxu0 %v729
    %1287 = vmatpush1.msra.mxu0 %v728
    %1288 = vmatprep.subr.mxu0 %v737
    %1289 = vmatpush1.msra.mxu0 %v736
    %1290 = vmatprep.mubr.f32.mxu0 %v1051
    %1291 = vmatmul.mubr.f32.gmra.mrb[0].mxu0 %v1083
    %v1292 = vpop.f32.mrb[0].mxu0
    %v1293 = vadd.f32 0.0, %v1292
    %v1294 = vpop.f32.mrb[0].mxu0
    %v1295 = vadd.f32 0.0, %v1294
    %1296 = vdwg.mxu0
    %1297 = vmatprep.subr.mxu0 %v491
    %1298 = vmatpush1.msra.mxu0 %v490
    %1299 = vmatprep.subr.mxu0 %v499
    %1300 = vmatpush1.msra.mxu0 %v498
    %1301 = vmatprep.subr.mxu0 %v507
    %1302 = vmatpush1.msra.mxu0 %v506
    %1303 = vmatprep.subr.mxu0 %v515
    %1304 = vmatpush1.msra.mxu0 %v514
    %1305 = vmatprep.subr.mxu0 %v523
    %1306 = vmatpush1.msra.mxu0 %v522
    %1307 = vmatprep.subr.mxu0 %v531
    %1308 = vmatpush1.msra.mxu0 %v530
    %1309 = vmatprep.subr.mxu0 %v539
    %1310 = vmatpush1.msra.mxu0 %v538
    %1311 = vmatprep.subr.mxu0 %v547
    %1312 = vmatpush1.msra.mxu0 %v546
    %1313 = vmatprep.subr.mxu0 %v555
    %1314 = vmatpush1.msra.mxu0 %v554
    %1315 = vmatprep.subr.mxu0 %v563
    %1316 = vmatpush1.msra.mxu0 %v562
    %1317 = vmatprep.subr.mxu0 %v571
    %1318 = vmatpush1.msra.mxu0 %v570
    %1319 = vmatprep.subr.mxu0 %v579
    %1320 = vmatpush1.msra.mxu0 %v578
    %1321 = vmatprep.subr.mxu0 %v587
    %1322 = vmatpush1.msra.mxu0 %v586
    %1323 = vmatprep.subr.mxu0 %v595
    %1324 = vmatpush1.msra.mxu0 %v594
    %1325 = vmatprep.subr.mxu0 %v603
    %1326 = vmatpush1.msra.mxu0 %v602
    %1327 = vmatprep.subr.mxu0 %v611
    %1328 = vmatpush1.msra.mxu0 %v610
    %1329 = vmatprep.subr.mxu0 %v619
    %1330 = vmatpush1.msra.mxu0 %v618
    %1331 = vmatprep.subr.mxu0 %v627
    %1332 = vmatpush1.msra.mxu0 %v626
    %1333 = vmatprep.subr.mxu0 %v635
    %1334 = vmatpush1.msra.mxu0 %v634
    %1335 = vmatprep.subr.mxu0 %v643
    %1336 = vmatpush1.msra.mxu0 %v642
    %1337 = vmatprep.subr.mxu0 %v651
    %1338 = vmatpush1.msra.mxu0 %v650
    %1339 = vmatprep.subr.mxu0 %v659
    %1340 = vmatpush1.msra.mxu0 %v658
    %1341 = vmatprep.subr.mxu0 %v667
    %1342 = vmatpush1.msra.mxu0 %v666
    %1343 = vmatprep.subr.mxu0 %v675
    %1344 = vmatpush1.msra.mxu0 %v674
    %1345 = vmatprep.subr.mxu0 %v683
    %1346 = vmatpush1.msra.mxu0 %v682
    %1347 = vmatprep.subr.mxu0 %v691
    %1348 = vmatpush1.msra.mxu0 %v690
    %1349 = vmatprep.subr.mxu0 %v699
    %1350 = vmatpush1.msra.mxu0 %v698
    %1351 = vmatprep.subr.mxu0 %v707
    %1352 = vmatpush1.msra.mxu0 %v706
    %1353 = vmatprep.subr.mxu0 %v715
    %1354 = vmatpush1.msra.mxu0 %v714
    %1355 = vmatprep.subr.mxu0 %v723
    %1356 = vmatpush1.msra.mxu0 %v722
    %1357 = vmatprep.subr.mxu0 %v731
    %1358 = vmatpush1.msra.mxu0 %v730
    %1359 = vmatprep.subr.mxu0 %v739
    %1360 = vmatpush1.msra.mxu0 %v738
    %1361 = vmatprep.mubr.f32.mxu0 %v1051
    %1362 = vmatmul.mubr.f32.gmra.mrb[0].mxu0 %v1083
    %v1363 = vpop.f32.mrb[0].mxu0
    %v1364 = vadd.f32 0.0, %v1363
    %v1365 = vpop.f32.mrb[0].mxu0
    %v1366 = vadd.f32 0.0, %v1365
    %1367 = vdwg.mxu0
    %v1368 = vadd.f32 %v1293, %v439
    %v1369 = vadd.f32 %v1295, %v443
    %v1370 = vadd.f32 %v1364, %v447
    %v1371 = vadd.f32 %v1366, %v451
    %v1372 = vxor.u32 %v1368, 2147483648
    %v1373 = vxor.u32 %v1369, 2147483648
    %v1374 = vxor.u32 %v1370, 2147483648
    %v1375 = vmul.f32 %v1372, 1.442695
    %v1376 = vpow.pop %v1375
    %v1377 = vmul.f32 %v1373, 1.442695
    %v1378 = vpow.pop %v1377
    %v1379 = vmul.f32 %v1374, 1.442695
    %v1380 = vpow.pop %v1379
    %v1381 = vadd.f32 %v1376, 1.0
    %v1382 = vadd.f32 %v1378, 1.0
    %v1383 = vadd.f32 %v1380, 1.0
    %v1384 = vrcp.pop %v1381
    %v1385 = vmul.f32 1.0, %v1384
    %v1386 = vrcp.pop %v1382
    %v1387 = vmul.f32 1.0, %v1386
    %v1388 = vrcp.pop %v1383
    %v1389 = vmul.f32 1.0, %v1388
    %v1390 = vtanh.pop %v1371
    %v1391 = vmul.f32 %v1387, %v1049
    %v1392 = vmul.f32 %v1385, %v1390
    %v1393 = vadd.f32 %v1391, %v1392
    %v1394 = vtanh.pop %v1393
    %v1395 = vmul.f32 %v1389, %v1394
    %v1396 = vld [vmem:[#allocation2 + $0x40] sm:$0xff]
    %v1397 = vld [vmem:[#allocation2 + $0x48] sm:$0xff]
    %v1398 = vld [vmem:[#allocation2 + $0x50] sm:$0xff]
    %v1399 = vld [vmem:[#allocation2 + $0x58] sm:$0xff]
    %v1400 = vadd.f32 %v1396, %v1151
    %v1401 = vadd.f32 %v1397, %v1153
    %v1402 = vadd.f32 %v1398, %v1222
    %v1403 = vadd.f32 %v1399, %v1224
    %v1404 = vxor.u32 %v1400, 2147483648
    %v1405 = vxor.u32 %v1401, 2147483648
    %v1406 = vxor.u32 %v1402, 2147483648
    %v1407 = vmul.f32 %v1404, 1.442695
    %v1408 = vpow.pop %v1407
    %v1409 = vmul.f32 %v1405, 1.442695
    %v1410 = vpow.pop %v1409
    %v1411 = vmul.f32 %v1406, 1.442695
    %v1412 = vpow.pop %v1411
    %v1413 = vadd.f32 %v1408, 1.0
    %v1414 = vadd.f32 %v1410, 1.0
    %v1415 = vadd.f32 %v1412, 1.0
    %v1416 = vrcp.pop %v1413
    %v1417 = vmul.f32 1.0, %v1416
    %v1418 = vrcp.pop %v1414
    %v1419 = vmul.f32 1.0, %v1418
    %v1420 = vrcp.pop %v1415
    %v1421 = vmul.f32 1.0, %v1420
    %v1422 = vtanh.pop %v1403
    %v1423 = vmul.f32 %v1419, %v1081
    %v1424 = vmul.f32 %v1417, %v1422
    %v1425 = vadd.f32 %v1423, %v1424
    %v1426 = vtanh.pop %v1425
    %v1427 = vmul.f32 %v1421, %v1426
    %1428 = vmatprep.subr.mxu0 %v485
    %1429 = vmatpush1.msra.mxu0 %v484
    %1430 = vmatprep.subr.mxu0 %v493
    %1431 = vmatpush1.msra.mxu0 %v492
    %1432 = vmatprep.subr.mxu0 %v501
    %1433 = vmatpush1.msra.mxu0 %v500
    %1434 = vmatprep.subr.mxu0 %v509
    %1435 = vmatpush1.msra.mxu0 %v508
    %1436 = vmatprep.subr.mxu0 %v517
    %1437 = vmatpush1.msra.mxu0 %v516
    %1438 = vmatprep.subr.mxu0 %v525
    %1439 = vmatpush1.msra.mxu0 %v524
    %1440 = vmatprep.subr.mxu0 %v533
    %1441 = vmatpush1.msra.mxu0 %v532
    %1442 = vmatprep.subr.mxu0 %v541
    %1443 = vmatpush1.msra.mxu0 %v540
    %1444 = vmatprep.subr.mxu0 %v549
    %1445 = vmatpush1.msra.mxu0 %v548
    %1446 = vmatprep.subr.mxu0 %v557
    %1447 = vmatpush1.msra.mxu0 %v556
    %1448 = vmatprep.subr.mxu0 %v565
    %1449 = vmatpush1.msra.mxu0 %v564
    %1450 = vmatprep.subr.mxu0 %v573
    %1451 = vmatpush1.msra.mxu0 %v572
    %1452 = vmatprep.subr.mxu0 %v581
    %1453 = vmatpush1.msra.mxu0 %v580
    %1454 = vmatprep.subr.mxu0 %v589
    %1455 = vmatpush1.msra.mxu0 %v588
    %1456 = vmatprep.subr.mxu0 %v597
    %1457 = vmatpush1.msra.mxu0 %v596
    %1458 = vmatprep.subr.mxu0 %v605
    %1459 = vmatpush1.msra.mxu0 %v604
    %1460 = vmatprep.subr.mxu0 %v613
    %1461 = vmatpush1.msra.mxu0 %v612
    %1462 = vmatprep.subr.mxu0 %v621
    %1463 = vmatpush1.msra.mxu0 %v620
    %1464 = vmatprep.subr.mxu0 %v629
    %1465 = vmatpush1.msra.mxu0 %v628
    %1466 = vmatprep.subr.mxu0 %v637
    %1467 = vmatpush1.msra.mxu0 %v636
    %1468 = vmatprep.subr.mxu0 %v645
    %1469 = vmatpush1.msra.mxu0 %v644
    %1470 = vmatprep.subr.mxu0 %v653
    %1471 = vmatpush1.msra.mxu0 %v652
    %1472 = vmatprep.subr.mxu0 %v661
    %1473 = vmatpush1.msra.mxu0 %v660
    %1474 = vmatprep.subr.mxu0 %v669
    %1475 = vmatpush1.msra.mxu0 %v668
    %1476 = vmatprep.subr.mxu0 %v677
    %1477 = vmatpush1.msra.mxu0 %v676
    %1478 = vmatprep.subr.mxu0 %v685
    %1479 = vmatpush1.msra.mxu0 %v684
    %1480 = vmatprep.subr.mxu0 %v693
    %1481 = vmatpush1.msra.mxu0 %v692
    %1482 = vmatprep.subr.mxu0 %v701
    %1483 = vmatpush1.msra.mxu0 %v700
    %1484 = vmatprep.subr.mxu0 %v709
    %1485 = vmatpush1.msra.mxu0 %v708
    %1486 = vmatprep.subr.mxu0 %v717
    %1487 = vmatpush1.msra.mxu0 %v716
    %1488 = vmatprep.subr.mxu0 %v725
    %1489 = vmatpush1.msra.mxu0 %v724
    %1490 = vmatprep.subr.mxu0 %v733
    %1491 = vmatpush1.msra.mxu0 %v732
    %1492 = vmatprep.mubr.f32.mxu0 %v1395
    %1493 = vmatmul.mubr.f32.gmra.mrb[0].mxu0 %v1427
    %v1494 = vpop.f32.mrb[0].mxu0
    %v1495 = vadd.f32 0.0, %v1494
    %v1496 = vpop.f32.mrb[0].mxu0
    %v1497 = vadd.f32 0.0, %v1496
    %1498 = vdwg.mxu0
    %1499 = vmatprep.subr.mxu0 %v487
    %1500 = vmatpush1.msra.mxu0 %v486
    %1501 = vmatprep.subr.mxu0 %v495
    %1502 = vmatpush1.msra.mxu0 %v494
    %1503 = vmatprep.subr.mxu0 %v503
    %1504 = vmatpush1.msra.mxu0 %v502
    %1505 = vmatprep.subr.mxu0 %v511
    %1506 = vmatpush1.msra.mxu0 %v510
    %1507 = vmatprep.subr.mxu0 %v519
    %1508 = vmatpush1.msra.mxu0 %v518
    %1509 = vmatprep.subr.mxu0 %v527
    %1510 = vmatpush1.msra.mxu0 %v526
    %1511 = vmatprep.subr.mxu0 %v535
    %1512 = vmatpush1.msra.mxu0 %v534
    %1513 = vmatprep.subr.mxu0 %v543
    %1514 = vmatpush1.msra.mxu0 %v542
    %1515 = vmatprep.subr.mxu0 %v551
    %1516 = vmatpush1.msra.mxu0 %v550
    %1517 = vmatprep.subr.mxu0 %v559
    %1518 = vmatpush1.msra.mxu0 %v558
    %1519 = vmatprep.subr.mxu0 %v567
    %1520 = vmatpush1.msra.mxu0 %v566
    %1521 = vmatprep.subr.mxu0 %v575
    %1522 = vmatpush1.msra.mxu0 %v574
    %1523 = vmatprep.subr.mxu0 %v583
    %1524 = vmatpush1.msra.mxu0 %v582
    %1525 = vmatprep.subr.mxu0 %v591
    %1526 = vmatpush1.msra.mxu0 %v590
    %1527 = vmatprep.subr.mxu0 %v599
    %1528 = vmatpush1.msra.mxu0 %v598
    %1529 = vmatprep.subr.mxu0 %v607
    %1530 = vmatpush1.msra.mxu0 %v606
    %1531 = vmatprep.subr.mxu0 %v615
    %1532 = vmatpush1.msra.mxu0 %v614
    %1533 = vmatprep.subr.mxu0 %v623
    %1534 = vmatpush1.msra.mxu0 %v622
    %1535 = vmatprep.subr.mxu0 %v631
    %1536 = vmatpush1.msra.mxu0 %v630
    %1537 = vmatprep.subr.mxu0 %v639
    %1538 = vmatpush1.msra.mxu0 %v638
    %1539 = vmatprep.subr.mxu0 %v647
    %1540 = vmatpush1.msra.mxu0 %v646
    %1541 = vmatprep.subr.mxu0 %v655
    %1542 = vmatpush1.msra.mxu0 %v654
    %1543 = vmatprep.subr.mxu0 %v663
    %1544 = vmatpush1.msra.mxu0 %v662
    %1545 = vmatprep.subr.mxu0 %v671
    %1546 = vmatpush1.msra.mxu0 %v670
    %1547 = vmatprep.subr.mxu0 %v679
    %1548 = vmatpush1.msra.mxu0 %v678
    %1549 = vmatprep.subr.mxu0 %v687
    %1550 = vmatpush1.msra.mxu0 %v686
    %1551 = vmatprep.subr.mxu0 %v695
    %1552 = vmatpush1.msra.mxu0 %v694
    %1553 = vmatprep.subr.mxu0 %v703
    %1554 = vmatpush1.msra.mxu0 %v702
    %1555 = vmatprep.subr.mxu0 %v711
    %1556 = vmatpush1.msra.mxu0 %v710
    %1557 = vmatprep.subr.mxu0 %v719
    %1558 = vmatpush1.msra.mxu0 %v718
    %1559 = vmatprep.subr.mxu0 %v727
    %1560 = vmatpush1.msra.mxu0 %v726
    %1561 = vmatprep.subr.mxu0 %v735
    %1562 = vmatpush1.msra.mxu0 %v734
    %1563 = vmatprep.mubr.f32.mxu0 %v1395
    %1564 = vmatmul.mubr.f32.gmra.mrb[0].mxu0 %v1427
    %v1565 = vpop.f32.mrb[0].mxu0
    %v1566 = vadd.f32 0.0, %v1565
    %v1567 = vpop.f32.mrb[0].mxu0
    %v1568 = vadd.f32 0.0, %v1567
    %1569 = vdwg.mxu0
    %1570 = vmatprep.subr.mxu0 %v489
    %1571 = vmatpush1.msra.mxu0 %v488
    %1572 = vmatprep.subr.mxu0 %v497
    %1573 = vmatpush1.msra.mxu0 %v496
    %1574 = vmatprep.subr.mxu0 %v505
    %1575 = vmatpush1.msra.mxu0 %v504
    %1576 = vmatprep.subr.mxu0 %v513
    %1577 = vmatpush1.msra.mxu0 %v512
    %1578 = vmatprep.subr.mxu0 %v521
    %1579 = vmatpush1.msra.mxu0 %v520
    %1580 = vmatprep.subr.mxu0 %v529
    %1581 = vmatpush1.msra.mxu0 %v528
    %1582 = vmatprep.subr.mxu0 %v537
    %1583 = vmatpush1.msra.mxu0 %v536
    %1584 = vmatprep.subr.mxu0 %v545
    %1585 = vmatpush1.msra.mxu0 %v544
    %1586 = vmatprep.subr.mxu0 %v553
    %1587 = vmatpush1.msra.mxu0 %v552
    %1588 = vmatprep.subr.mxu0 %v561
    %1589 = vmatpush1.msra.mxu0 %v560
    %1590 = vmatprep.subr.mxu0 %v569
    %1591 = vmatpush1.msra.mxu0 %v568
    %1592 = vmatprep.subr.mxu0 %v577
    %1593 = vmatpush1.msra.mxu0 %v576
    %1594 = vmatprep.subr.mxu0 %v585
    %1595 = vmatpush1.msra.mxu0 %v584
    %1596 = vmatprep.subr.mxu0 %v593
    %1597 = vmatpush1.msra.mxu0 %v592
    %1598 = vmatprep.subr.mxu0 %v601
    %1599 = vmatpush1.msra.mxu0 %v600
    %1600 = vmatprep.subr.mxu0 %v609
    %1601 = vmatpush1.msra.mxu0 %v608
    %1602 = vmatprep.subr.mxu0 %v617
    %1603 = vmatpush1.msra.mxu0 %v616
    %1604 = vmatprep.subr.mxu0 %v625
    %1605 = vmatpush1.msra.mxu0 %v624
    %1606 = vmatprep.subr.mxu0 %v633
    %1607 = vmatpush1.msra.mxu0 %v632
    %1608 = vmatprep.subr.mxu0 %v641
    %1609 = vmatpush1.msra.mxu0 %v640
    %1610 = vmatprep.subr.mxu0 %v649
    %1611 = vmatpush1.msra.mxu0 %v648
    %1612 = vmatprep.subr.mxu0 %v657
    %1613 = vmatpush1.msra.mxu0 %v656
    %1614 = vmatprep.subr.mxu0 %v665
    %1615 = vmatpush1.msra.mxu0 %v664
    %1616 = vmatprep.subr.mxu0 %v673
    %1617 = vmatpush1.msra.mxu0 %v672
    %1618 = vmatprep.subr.mxu0 %v681
    %1619 = vmatpush1.msra.mxu0 %v680
    %1620 = vmatprep.subr.mxu0 %v689
    %1621 = vmatpush1.msra.mxu0 %v688
    %1622 = vmatprep.subr.mxu0 %v697
    %1623 = vmatpush1.msra.mxu0 %v696
    %1624 = vmatprep.subr.mxu0 %v705
    %1625 = vmatpush1.msra.mxu0 %v704
    %1626 = vmatprep.subr.mxu0 %v713
    %1627 = vmatpush1.msra.mxu0 %v712
    %1628 = vmatprep.subr.mxu0 %v721
    %1629 = vmatpush1.msra.mxu0 %v720
    %1630 = vmatprep.subr.mxu0 %v729
    %1631 = vmatpush1.msra.mxu0 %v728
    %1632 = vmatprep.subr.mxu0 %v737
    %1633 = vmatpush1.msra.mxu0 %v736
    %1634 = vmatprep.mubr.f32.mxu0 %v1395
    %1635 = vmatmul.mubr.f32.gmra.mrb[0].mxu0 %v1427
    %v1636 = vpop.f32.mrb[0].mxu0
    %v1637 = vadd.f32 0.0, %v1636
    %v1638 = vpop.f32.mrb[0].mxu0
    %v1639 = vadd.f32 0.0, %v1638
    %1640 = vdwg.mxu0
    %1641 = vmatprep.subr.mxu0 %v491
    %1642 = vmatpush1.msra.mxu0 %v490
    %1643 = vmatprep.subr.mxu0 %v499
    %1644 = vmatpush1.msra.mxu0 %v498
    %1645 = vmatprep.subr.mxu0 %v507
    %1646 = vmatpush1.msra.mxu0 %v506
    %1647 = vmatprep.subr.mxu0 %v515
    %1648 = vmatpush1.msra.mxu0 %v514
    %1649 = vmatprep.subr.mxu0 %v523
    %1650 = vmatpush1.msra.mxu0 %v522
    %1651 = vmatprep.subr.mxu0 %v531
    %1652 = vmatpush1.msra.mxu0 %v530
    %1653 = vmatprep.subr.mxu0 %v539
    %1654 = vmatpush1.msra.mxu0 %v538
    %1655 = vmatprep.subr.mxu0 %v547
    %1656 = vmatpush1.msra.mxu0 %v546
    %1657 = vmatprep.subr.mxu0 %v555
    %1658 = vmatpush1.msra.mxu0 %v554
    %1659 = vmatprep.subr.mxu0 %v563
    %1660 = vmatpush1.msra.mxu0 %v562
    %1661 = vmatprep.subr.mxu0 %v571
    %1662 = vmatpush1.msra.mxu0 %v570
    %1663 = vmatprep.subr.mxu0 %v579
    %1664 = vmatpush1.msra.mxu0 %v578
    %1665 = vmatprep.subr.mxu0 %v587
    %1666 = vmatpush1.msra.mxu0 %v586
    %1667 = vmatprep.subr.mxu0 %v595
    %1668 = vmatpush1.msra.mxu0 %v594
    %1669 = vmatprep.subr.mxu0 %v603
    %1670 = vmatpush1.msra.mxu0 %v602
    %1671 = vmatprep.subr.mxu0 %v611
    %1672 = vmatpush1.msra.mxu0 %v610
    %1673 = vmatprep.subr.mxu0 %v619
    %1674 = vmatpush1.msra.mxu0 %v618
    %1675 = vmatprep.subr.mxu0 %v627
    %1676 = vmatpush1.msra.mxu0 %v626
    %1677 = vmatprep.subr.mxu0 %v635
    %1678 = vmatpush1.msra.mxu0 %v634
    %1679 = vmatprep.subr.mxu0 %v643
    %1680 = vmatpush1.msra.mxu0 %v642
    %1681 = vmatprep.subr.mxu0 %v651
    %1682 = vmatpush1.msra.mxu0 %v650
    %1683 = vmatprep.subr.mxu0 %v659
    %1684 = vmatpush1.msra.mxu0 %v658
    %1685 = vmatprep.subr.mxu0 %v667
    %1686 = vmatpush1.msra.mxu0 %v666
    %1687 = vmatprep.subr.mxu0 %v675
    %1688 = vmatpush1.msra.mxu0 %v674
    %1689 = vmatprep.subr.mxu0 %v683
    %1690 = vmatpush1.msra.mxu0 %v682
    %1691 = vmatprep.subr.mxu0 %v691
    %1692 = vmatpush1.msra.mxu0 %v690
    %1693 = vmatprep.subr.mxu0 %v699
    %1694 = vmatpush1.msra.mxu0 %v698
    %1695 = vmatprep.subr.mxu0 %v707
    %1696 = vmatpush1.msra.mxu0 %v706
    %1697 = vmatprep.subr.mxu0 %v715
    %1698 = vmatpush1.msra.mxu0 %v714
    %1699 = vmatprep.subr.mxu0 %v723
    %1700 = vmatpush1.msra.mxu0 %v722
    %1701 = vmatprep.subr.mxu0 %v731
    %1702 = vmatpush1.msra.mxu0 %v730
    %1703 = vmatprep.subr.mxu0 %v739
    %1704 = vmatpush1.msra.mxu0 %v738
    %1705 = vmatprep.mubr.f32.mxu0 %v1395
    %1706 = vmatmul.mubr.f32.gmra.mrb[0].mxu0 %v1427
    %v1707 = vpop.f32.mrb[0].mxu0
    %v1708 = vadd.f32 0.0, %v1707
    %v1709 = vpop.f32.mrb[0].mxu0
    %v1710 = vadd.f32 0.0, %v1709
    %1711 = vdwg.mxu0
    %v1712 = vadd.f32 %v1637, %v439
    %v1713 = vadd.f32 %v1639, %v443
    %v1714 = vadd.f32 %v1708, %v447
    %v1715 = vadd.f32 %v1710, %v451
    %v1716 = vxor.u32 %v1712, 2147483648
    %v1717 = vxor.u32 %v1713, 2147483648
    %v1718 = vxor.u32 %v1714, 2147483648
    %v1719 = vmul.f32 %v1716, 1.442695
    %v1720 = vpow.pop %v1719
    %v1721 = vmul.f32 %v1717, 1.442695
    %v1722 = vpow.pop %v1721
    %v1723 = vmul.f32 %v1718, 1.442695
    %v1724 = vpow.pop %v1723
    %v1725 = vadd.f32 %v1720, 1.0
    %v1726 = vadd.f32 %v1722, 1.0
    %v1727 = vadd.f32 %v1724, 1.0
    %v1728 = vrcp.pop %v1725
    %v1729 = vmul.f32 1.0, %v1728
    %v1730 = vrcp.pop %v1726
    %v1731 = vmul.f32 1.0, %v1730
    %v1732 = vrcp.pop %v1727
    %v1733 = vmul.f32 1.0, %v1732
    %v1734 = vtanh.pop %v1715
    %v1735 = vmul.f32 %v1731, %v1393
    %v1736 = vmul.f32 %v1729, %v1734
    %v1737 = vadd.f32 %v1735, %v1736
    %v1738 = vtanh.pop %v1737
    %v1739 = vmul.f32 %v1733, %v1738
    %v1740 = vld [vmem:[#allocation2 + $0x60] sm:$0xff]
    %v1741 = vld [vmem:[#allocation2 + $0x68] sm:$0xff]
    %v1742 = vld [vmem:[#allocation2 + $0x70] sm:$0xff]
    %v1743 = vld [vmem:[#allocation2 + $0x78] sm:$0xff]
    %v1744 = vadd.f32 %v1740, %v1495
    %v1745 = vadd.f32 %v1741, %v1497
    %v1746 = vadd.f32 %v1742, %v1566
    %v1747 = vadd.f32 %v1743, %v1568
    %v1748 = vxor.u32 %v1744, 2147483648
    %v1749 = vxor.u32 %v1745, 2147483648
    %v1750 = vxor.u32 %v1746, 2147483648
    %v1751 = vmul.f32 %v1748, 1.442695
    %v1752 = vpow.pop %v1751
    %v1753 = vmul.f32 %v1749, 1.442695
    %v1754 = vpow.pop %v1753
    %v1755 = vmul.f32 %v1750, 1.442695
    %v1756 = vpow.pop %v1755
    %v1757 = vadd.f32 %v1752, 1.0
    %v1758 = vadd.f32 %v1754, 1.0
    %v1759 = vadd.f32 %v1756, 1.0
    %v1760 = vrcp.pop %v1757
    %v1761 = vmul.f32 1.0, %v1760
    %v1762 = vrcp.pop %v1758
    %v1763 = vmul.f32 1.0, %v1762
    %v1764 = vrcp.pop %v1759
    %v1765 = vmul.f32 1.0, %v1764
    %v1766 = vtanh.pop %v1747
    %v1767 = vmul.f32 %v1763, %v1425
    %v1768 = vmul.f32 %v1761, %v1766
    %v1769 = vadd.f32 %v1767, %v1768
    %v1770 = vtanh.pop %v1769
    %v1771 = vmul.f32 %v1765, %v1770
    %1772 = vmatprep.subr.mxu0 %v485
    %1773 = vmatpush1.msra.mxu0 %v484
    %1774 = vmatprep.subr.mxu0 %v493
    %1775 = vmatpush1.msra.mxu0 %v492
    %1776 = vmatprep.subr.mxu0 %v501
    %1777 = vmatpush1.msra.mxu0 %v500
    %1778 = vmatprep.subr.mxu0 %v509
    %1779 = vmatpush1.msra.mxu0 %v508
    %1780 = vmatprep.subr.mxu0 %v517
    %1781 = vmatpush1.msra.mxu0 %v516
    %1782 = vmatprep.subr.mxu0 %v525
    %1783 = vmatpush1.msra.mxu0 %v524
    %1784 = vmatprep.subr.mxu0 %v533
    %1785 = vmatpush1.msra.mxu0 %v532
    %1786 = vmatprep.subr.mxu0 %v541
    %1787 = vmatpush1.msra.mxu0 %v540
    %1788 = vmatprep.subr.mxu0 %v549
    %1789 = vmatpush1.msra.mxu0 %v548
    %1790 = vmatprep.subr.mxu0 %v557
    %1791 = vmatpush1.msra.mxu0 %v556
    %1792 = vmatprep.subr.mxu0 %v565
    %1793 = vmatpush1.msra.mxu0 %v564
    %1794 = vmatprep.subr.mxu0 %v573
    %1795 = vmatpush1.msra.mxu0 %v572
    %1796 = vmatprep.subr.mxu0 %v581
    %1797 = vmatpush1.msra.mxu0 %v580
    %1798 = vmatprep.subr.mxu0 %v589
    %1799 = vmatpush1.msra.mxu0 %v588
    %1800 = vmatprep.subr.mxu0 %v597
    %1801 = vmatpush1.msra.mxu0 %v596
    %1802 = vmatprep.subr.mxu0 %v605
    %1803 = vmatpush1.msra.mxu0 %v604
    %1804 = vmatprep.subr.mxu0 %v613
    %1805 = vmatpush1.msra.mxu0 %v612
    %1806 = vmatprep.subr.mxu0 %v621
    %1807 = vmatpush1.msra.mxu0 %v620
    %1808 = vmatprep.subr.mxu0 %v629
    %1809 = vmatpush1.msra.mxu0 %v628
    %1810 = vmatprep.subr.mxu0 %v637
    %1811 = vmatpush1.msra.mxu0 %v636
    %1812 = vmatprep.subr.mxu0 %v645
    %1813 = vmatpush1.msra.mxu0 %v644
    %1814 = vmatprep.subr.mxu0 %v653
    %1815 = vmatpush1.msra.mxu0 %v652
    %1816 = vmatprep.subr.mxu0 %v661
    %1817 = vmatpush1.msra.mxu0 %v660
    %1818 = vmatprep.subr.mxu0 %v669
    %1819 = vmatpush1.msra.mxu0 %v668
    %1820 = vmatprep.subr.mxu0 %v677
    %1821 = vmatpush1.msra.mxu0 %v676
    %1822 = vmatprep.subr.mxu0 %v685
    %1823 = vmatpush1.msra.mxu0 %v684
    %1824 = vmatprep.subr.mxu0 %v693
    %1825 = vmatpush1.msra.mxu0 %v692
    %1826 = vmatprep.subr.mxu0 %v701
    %1827 = vmatpush1.msra.mxu0 %v700
    %1828 = vmatprep.subr.mxu0 %v709
    %1829 = vmatpush1.msra.mxu0 %v708
    %1830 = vmatprep.subr.mxu0 %v717
    %1831 = vmatpush1.msra.mxu0 %v716
    %1832 = vmatprep.subr.mxu0 %v725
    %1833 = vmatpush1.msra.mxu0 %v724
    %1834 = vmatprep.subr.mxu0 %v733
    %1835 = vmatpush1.msra.mxu0 %v732
    %1836 = vmatprep.mubr.f32.mxu0 %v1739
    %1837 = vmatmul.mubr.f32.gmra.mrb[0].mxu0 %v1771
    %v1838 = vpop.f32.mrb[0].mxu0
    %v1839 = vadd.f32 0.0, %v1838
    %v1840 = vpop.f32.mrb[0].mxu0
    %v1841 = vadd.f32 0.0, %v1840
    %1842 = vdwg.mxu0
    %1843 = vmatprep.subr.mxu0 %v487
    %1844 = vmatpush1.msra.mxu0 %v486
    %1845 = vmatprep.subr.mxu0 %v495
    %1846 = vmatpush1.msra.mxu0 %v494
    %1847 = vmatprep.subr.mxu0 %v503
    %1848 = vmatpush1.msra.mxu0 %v502
    %1849 = vmatprep.subr.mxu0 %v511
    %1850 = vmatpush1.msra.mxu0 %v510
    %1851 = vmatprep.subr.mxu0 %v519
    %1852 = vmatpush1.msra.mxu0 %v518
    %1853 = vmatprep.subr.mxu0 %v527
    %1854 = vmatpush1.msra.mxu0 %v526
    %1855 = vmatprep.subr.mxu0 %v535
    %1856 = vmatpush1.msra.mxu0 %v534
    %1857 = vmatprep.subr.mxu0 %v543
    %1858 = vmatpush1.msra.mxu0 %v542
    %1859 = vmatprep.subr.mxu0 %v551
    %1860 = vmatpush1.msra.mxu0 %v550
    %1861 = vmatprep.subr.mxu0 %v559
    %1862 = vmatpush1.msra.mxu0 %v558
    %1863 = vmatprep.subr.mxu0 %v567
    %1864 = vmatpush1.msra.mxu0 %v566
    %1865 = vmatprep.subr.mxu0 %v575
    %1866 = vmatpush1.msra.mxu0 %v574
    %1867 = vmatprep.subr.mxu0 %v583
    %1868 = vmatpush1.msra.mxu0 %v582
    %1869 = vmatprep.subr.mxu0 %v591
    %1870 = vmatpush1.msra.mxu0 %v590
    %1871 = vmatprep.subr.mxu0 %v599
    %1872 = vmatpush1.msra.mxu0 %v598
    %1873 = vmatprep.subr.mxu0 %v607
    %1874 = vmatpush1.msra.mxu0 %v606
    %1875 = vmatprep.subr.mxu0 %v615
    %1876 = vmatpush1.msra.mxu0 %v614
    %1877 = vmatprep.subr.mxu0 %v623
    %1878 = vmatpush1.msra.mxu0 %v622
    %1879 = vmatprep.subr.mxu0 %v631
    %1880 = vmatpush1.msra.mxu0 %v630
    %1881 = vmatprep.subr.mxu0 %v639
    %1882 = vmatpush1.msra.mxu0 %v638
    %1883 = vmatprep.subr.mxu0 %v647
    %1884 = vmatpush1.msra.mxu0 %v646
    %1885 = vmatprep.subr.mxu0 %v655
    %1886 = vmatpush1.msra.mxu0 %v654
    %1887 = vmatprep.subr.mxu0 %v663
    %1888 = vmatpush1.msra.mxu0 %v662
    %1889 = vmatprep.subr.mxu0 %v671
    %1890 = vmatpush1.msra.mxu0 %v670
    %1891 = vmatprep.subr.mxu0 %v679
    %1892 = vmatpush1.msra.mxu0 %v678
    %1893 = vmatprep.subr.mxu0 %v687
    %1894 = vmatpush1.msra.mxu0 %v686
    %1895 = vmatprep.subr.mxu0 %v695
    %1896 = vmatpush1.msra.mxu0 %v694
    %1897 = vmatprep.subr.mxu0 %v703
    %1898 = vmatpush1.msra.mxu0 %v702
    %1899 = vmatprep.subr.mxu0 %v711
    %1900 = vmatpush1.msra.mxu0 %v710
    %1901 = vmatprep.subr.mxu0 %v719
    %1902 = vmatpush1.msra.mxu0 %v718
    %1903 = vmatprep.subr.mxu0 %v727
    %1904 = vmatpush1.msra.mxu0 %v726
    %1905 = vmatprep.subr.mxu0 %v735
    %1906 = vmatpush1.msra.mxu0 %v734
    %1907 = vmatprep.mubr.f32.mxu0 %v1739
    %1908 = vmatmul.mubr.f32.gmra.mrb[0].mxu0 %v1771
    %v1909 = vpop.f32.mrb[0].mxu0
    %v1910 = vadd.f32 0.0, %v1909
    %v1911 = vpop.f32.mrb[0].mxu0
    %v1912 = vadd.f32 0.0, %v1911
    %1913 = vdwg.mxu0
    %1914 = vmatprep.subr.mxu0 %v489
    %1915 = vmatpush1.msra.mxu0 %v488
    %1916 = vmatprep.subr.mxu0 %v497
    %1917 = vmatpush1.msra.mxu0 %v496
    %1918 = vmatprep.subr.mxu0 %v505
    %1919 = vmatpush1.msra.mxu0 %v504
    %1920 = vmatprep.subr.mxu0 %v513
    %1921 = vmatpush1.msra.mxu0 %v512
    %1922 = vmatprep.subr.mxu0 %v521
    %1923 = vmatpush1.msra.mxu0 %v520
    %1924 = vmatprep.subr.mxu0 %v529
    %1925 = vmatpush1.msra.mxu0 %v528
    %1926 = vmatprep.subr.mxu0 %v537
    %1927 = vmatpush1.msra.mxu0 %v536
    %1928 = vmatprep.subr.mxu0 %v545
    %1929 = vmatpush1.msra.mxu0 %v544
    %1930 = vmatprep.subr.mxu0 %v553
    %1931 = vmatpush1.msra.mxu0 %v552
    %1932 = vmatprep.subr.mxu0 %v561
    %1933 = vmatpush1.msra.mxu0 %v560
    %1934 = vmatprep.subr.mxu0 %v569
    %1935 = vmatpush1.msra.mxu0 %v568
    %1936 = vmatprep.subr.mxu0 %v577
    %1937 = vmatpush1.msra.mxu0 %v576
    %1938 = vmatprep.subr.mxu0 %v585
    %1939 = vmatpush1.msra.mxu0 %v584
    %1940 = vmatprep.subr.mxu0 %v593
    %1941 = vmatpush1.msra.mxu0 %v592
    %1942 = vmatprep.subr.mxu0 %v601
    %1943 = vmatpush1.msra.mxu0 %v600
    %1944 = vmatprep.subr.mxu0 %v609
    %1945 = vmatpush1.msra.mxu0 %v608
    %1946 = vmatprep.subr.mxu0 %v617
    %1947 = vmatpush1.msra.mxu0 %v616
    %1948 = vmatprep.subr.mxu0 %v625
    %1949 = vmatpush1.msra.mxu0 %v624
    %1950 = vmatprep.subr.mxu0 %v633
    %1951 = vmatpush1.msra.mxu0 %v632
    %1952 = vmatprep.subr.mxu0 %v641
    %1953 = vmatpush1.msra.mxu0 %v640
    %1954 = vmatprep.subr.mxu0 %v649
    %1955 = vmatpush1.msra.mxu0 %v648
    %1956 = vmatprep.subr.mxu0 %v657
    %1957 = vmatpush1.msra.mxu0 %v656
    %1958 = vmatprep.subr.mxu0 %v665
    %1959 = vmatpush1.msra.mxu0 %v664
    %1960 = vmatprep.subr.mxu0 %v673
    %1961 = vmatpush1.msra.mxu0 %v672
    %1962 = vmatprep.subr.mxu0 %v681
    %1963 = vmatpush1.msra.mxu0 %v680
    %1964 = vmatprep.subr.mxu0 %v689
    %1965 = vmatpush1.msra.mxu0 %v688
    %1966 = vmatprep.subr.mxu0 %v697
    %1967 = vmatpush1.msra.mxu0 %v696
    %1968 = vmatprep.subr.mxu0 %v705
    %1969 = vmatpush1.msra.mxu0 %v704
    %1970 = vmatprep.subr.mxu0 %v713
    %1971 = vmatpush1.msra.mxu0 %v712
    %1972 = vmatprep.subr.mxu0 %v721
    %1973 = vmatpush1.msra.mxu0 %v720
    %1974 = vmatprep.subr.mxu0 %v729
    %1975 = vmatpush1.msra.mxu0 %v728
    %1976 = vmatprep.subr.mxu0 %v737
    %1977 = vmatpush1.msra.mxu0 %v736
    %1978 = vmatprep.mubr.f32.mxu0 %v1739
    %1979 = vmatmul.mubr.f32.gmra.mrb[0].mxu0 %v1771
    %v1980 = vpop.f32.mrb[0].mxu0
    %v1981 = vadd.f32 0.0, %v1980
    %v1982 = vpop.f32.mrb[0].mxu0
    %v1983 = vadd.f32 0.0, %v1982
    %1984 = vdwg.mxu0
    %1985 = vmatprep.subr.mxu0 %v491
    %1986 = vmatpush1.msra.mxu0 %v490
    %1987 = vmatprep.subr.mxu0 %v499
    %1988 = vmatpush1.msra.mxu0 %v498
    %1989 = vmatprep.subr.mxu0 %v507
    %1990 = vmatpush1.msra.mxu0 %v506
    %1991 = vmatprep.subr.mxu0 %v515
    %1992 = vmatpush1.msra.mxu0 %v514
    %1993 = vmatprep.subr.mxu0 %v523
    %1994 = vmatpush1.msra.mxu0 %v522
    %1995 = vmatprep.subr.mxu0 %v531
    %1996 = vmatpush1.msra.mxu0 %v530
    %1997 = vmatprep.subr.mxu0 %v539
    %1998 = vmatpush1.msra.mxu0 %v538
    %1999 = vmatprep.subr.mxu0 %v547
    %2000 = vmatpush1.msra.mxu0 %v546
    %2001 = vmatprep.subr.mxu0 %v555
    %2002 = vmatpush1.msra.mxu0 %v554
    %2003 = vmatprep.subr.mxu0 %v563
    %2004 = vmatpush1.msra.mxu0 %v562
    %2005 = vmatprep.subr.mxu0 %v571
    %2006 = vmatpush1.msra.mxu0 %v570
    %2007 = vmatprep.subr.mxu0 %v579
    %2008 = vmatpush1.msra.mxu0 %v578
    %2009 = vmatprep.subr.mxu0 %v587
    %2010 = vmatpush1.msra.mxu0 %v586
    %2011 = vmatprep.subr.mxu0 %v595
    %2012 = vmatpush1.msra.mxu0 %v594
    %2013 = vmatprep.subr.mxu0 %v603
    %2014 = vmatpush1.msra.mxu0 %v602
    %2015 = vmatprep.subr.mxu0 %v611
    %2016 = vmatpush1.msra.mxu0 %v610
    %2017 = vmatprep.subr.mxu0 %v619
    %2018 = vmatpush1.msra.mxu0 %v618
    %2019 = vmatprep.subr.mxu0 %v627
    %2020 = vmatpush1.msra.mxu0 %v626
    %2021 = vmatprep.subr.mxu0 %v635
    %2022 = vmatpush1.msra.mxu0 %v634
    %2023 = vmatprep.subr.mxu0 %v643
    %2024 = vmatpush1.msra.mxu0 %v642
    %2025 = vmatprep.subr.mxu0 %v651
    %2026 = vmatpush1.msra.mxu0 %v650
    %2027 = vmatprep.subr.mxu0 %v659
    %2028 = vmatpush1.msra.mxu0 %v658
    %2029 = vmatprep.subr.mxu0 %v667
    %2030 = vmatpush1.msra.mxu0 %v666
    %2031 = vmatprep.subr.mxu0 %v675
    %2032 = vmatpush1.msra.mxu0 %v674
    %2033 = vmatprep.subr.mxu0 %v683
    %2034 = vmatpush1.msra.mxu0 %v682
    %2035 = vmatprep.subr.mxu0 %v691
    %2036 = vmatpush1.msra.mxu0 %v690
    %2037 = vmatprep.subr.mxu0 %v699
    %2038 = vmatpush1.msra.mxu0 %v698
    %2039 = vmatprep.subr.mxu0 %v707
    %2040 = vmatpush1.msra.mxu0 %v706
    %2041 = vmatprep.subr.mxu0 %v715
    %2042 = vmatpush1.msra.mxu0 %v714
    %2043 = vmatprep.subr.mxu0 %v723
    %2044 = vmatpush1.msra.mxu0 %v722
    %2045 = vmatprep.subr.mxu0 %v731
    %2046 = vmatpush1.msra.mxu0 %v730
    %2047 = vmatprep.subr.mxu0 %v739
    %2048 = vmatpush1.msra.mxu0 %v738
    %2049 = vmatprep.mubr.f32.mxu0 %v1739
    %2050 = vmatmul.mubr.f32.gmra.mrb[0].mxu0 %v1771
    %v2051 = vpop.f32.mrb[0].mxu0
    %v2052 = vadd.f32 0.0, %v2051
    %v2053 = vpop.f32.mrb[0].mxu0
    %v2054 = vadd.f32 0.0, %v2053
    %2055 = vdwg.mxu0
    %v2056 = vadd.f32 %v1981, %v439
    %v2057 = vadd.f32 %v1983, %v443
    %v2058 = vadd.f32 %v2052, %v447
    %v2059 = vadd.f32 %v2054, %v451
    %v2060 = vxor.u32 %v2056, 2147483648
    %v2061 = vxor.u32 %v2057, 2147483648
    %v2062 = vxor.u32 %v2058, 2147483648
    %v2063 = vmul.f32 %v2060, 1.442695
    %v2064 = vpow.pop %v2063
    %v2065 = vmul.f32 %v2061, 1.442695
    %v2066 = vpow.pop %v2065
    %v2067 = vmul.f32 %v2062, 1.442695
    %v2068 = vpow.pop %v2067
    %v2069 = vadd.f32 %v2064, 1.0
    %v2070 = vadd.f32 %v2066, 1.0
    %v2071 = vadd.f32 %v2068, 1.0
    %v2072 = vrcp.pop %v2069
    %v2073 = vmul.f32 1.0, %v2072
    %v2074 = vrcp.pop %v2070
    %v2075 = vmul.f32 1.0, %v2074
    %v2076 = vrcp.pop %v2071
    %v2077 = vmul.f32 1.0, %v2076
    %v2078 = vtanh.pop %v2059
    %v2079 = vmul.f32 %v2075, %v1737
    %v2080 = vmul.f32 %v2073, %v2078
    %v2081 = vadd.f32 %v2079, %v2080
    %v2082 = vtanh.pop %v2081
    %v2083 = vmul.f32 %v2077, %v2082
    %v2084 = vld [vmem:[#allocation2 + $0x80] sm:$0xff]
    %v2085 = vld [vmem:[#allocation2 + $0x88] sm:$0xff]
    %v2086 = vld [vmem:[#allocation2 + $0x90] sm:$0xff]
    %v2087 = vld [vmem:[#allocation2 + $0x98] sm:$0xff]
    %v2088 = vadd.f32 %v2084, %v1839
    %v2089 = vadd.f32 %v2085, %v1841
    %v2090 = vadd.f32 %v2086, %v1910
    %v2091 = vadd.f32 %v2087, %v1912
    %v2092 = vxor.u32 %v2088, 2147483648
    %v2093 = vxor.u32 %v2089, 2147483648
    %v2094 = vxor.u32 %v2090, 2147483648
    %v2095 = vmul.f32 %v2092, 1.442695
    %v2096 = vpow.pop %v2095
    %v2097 = vmul.f32 %v2093, 1.442695
    %v2098 = vpow.pop %v2097
    %v2099 = vmul.f32 %v2094, 1.442695
    %v2100 = vpow.pop %v2099
    %v2101 = vadd.f32 %v2096, 1.0
    %v2102 = vadd.f32 %v2098, 1.0
    %v2103 = vadd.f32 %v2100, 1.0
    %v2104 = vrcp.pop %v2101
    %v2105 = vmul.f32 1.0, %v2104
    %v2106 = vrcp.pop %v2102
    %v2107 = vmul.f32 1.0, %v2106
    %v2108 = vrcp.pop %v2103
    %v2109 = vmul.f32 1.0, %v2108
    %v2110 = vtanh.pop %v2091
    %v2111 = vmul.f32 %v2107, %v1769
    %v2112 = vmul.f32 %v2105, %v2110
    %v2113 = vadd.f32 %v2111, %v2112
    %v2114 = vtanh.pop %v2113
    %v2115 = vmul.f32 %v2109, %v2114
    %2116 = vmatprep.subr.mxu0 %v485
    %2117 = vmatpush1.msra.mxu0 %v484
    %2118 = vmatprep.subr.mxu0 %v493
    %2119 = vmatpush1.msra.mxu0 %v492
    %2120 = vmatprep.subr.mxu0 %v501
    %2121 = vmatpush1.msra.mxu0 %v500
    %2122 = vmatprep.subr.mxu0 %v509
    %2123 = vmatpush1.msra.mxu0 %v508
    %2124 = vmatprep.subr.mxu0 %v517
    %2125 = vmatpush1.msra.mxu0 %v516
    %2126 = vmatprep.subr.mxu0 %v525
    %2127 = vmatpush1.msra.mxu0 %v524
    %2128 = vmatprep.subr.mxu0 %v533
    %2129 = vmatpush1.msra.mxu0 %v532
    %2130 = vmatprep.subr.mxu0 %v541
    %2131 = vmatpush1.msra.mxu0 %v540
    %2132 = vmatprep.subr.mxu0 %v549
    %2133 = vmatpush1.msra.mxu0 %v548
    %2134 = vmatprep.subr.mxu0 %v557
    %2135 = vmatpush1.msra.mxu0 %v556
    %2136 = vmatprep.subr.mxu0 %v565
    %2137 = vmatpush1.msra.mxu0 %v564
    %2138 = vmatprep.subr.mxu0 %v573
    %2139 = vmatpush1.msra.mxu0 %v572
    %2140 = vmatprep.subr.mxu0 %v581
    %2141 = vmatpush1.msra.mxu0 %v580
    %2142 = vmatprep.subr.mxu0 %v589
    %2143 = vmatpush1.msra.mxu0 %v588
    %2144 = vmatprep.subr.mxu0 %v597
    %2145 = vmatpush1.msra.mxu0 %v596
    %2146 = vmatprep.subr.mxu0 %v605
    %2147 = vmatpush1.msra.mxu0 %v604
    %2148 = vmatprep.subr.mxu0 %v613
    %2149 = vmatpush1.msra.mxu0 %v612
    %2150 = vmatprep.subr.mxu0 %v621
    %2151 = vmatpush1.msra.mxu0 %v620
    %2152 = vmatprep.subr.mxu0 %v629
    %2153 = vmatpush1.msra.mxu0 %v628
    %2154 = vmatprep.subr.mxu0 %v637
    %2155 = vmatpush1.msra.mxu0 %v636
    %2156 = vmatprep.subr.mxu0 %v645
    %2157 = vmatpush1.msra.mxu0 %v644
    %2158 = vmatprep.subr.mxu0 %v653
    %2159 = vmatpush1.msra.mxu0 %v652
    %2160 = vmatprep.subr.mxu0 %v661
    %2161 = vmatpush1.msra.mxu0 %v660
    %2162 = vmatprep.subr.mxu0 %v669
    %2163 = vmatpush1.msra.mxu0 %v668
    %2164 = vmatprep.subr.mxu0 %v677
    %2165 = vmatpush1.msra.mxu0 %v676
    %2166 = vmatprep.subr.mxu0 %v685
    %2167 = vmatpush1.msra.mxu0 %v684
    %2168 = vmatprep.subr.mxu0 %v693
    %2169 = vmatpush1.msra.mxu0 %v692
    %2170 = vmatprep.subr.mxu0 %v701
    %2171 = vmatpush1.msra.mxu0 %v700
    %2172 = vmatprep.subr.mxu0 %v709
    %2173 = vmatpush1.msra.mxu0 %v708
    %2174 = vmatprep.subr.mxu0 %v717
    %2175 = vmatpush1.msra.mxu0 %v716
    %2176 = vmatprep.subr.mxu0 %v725
    %2177 = vmatpush1.msra.mxu0 %v724
    %2178 = vmatprep.subr.mxu0 %v733
    %2179 = vmatpush1.msra.mxu0 %v732
    %2180 = vmatprep.mubr.f32.mxu0 %v2083
    %2181 = vmatmul.mubr.f32.gmra.mrb[0].mxu0 %v2115
    %v2182 = vpop.f32.mrb[0].mxu0
    %v2183 = vadd.f32 0.0, %v2182
    %v2184 = vpop.f32.mrb[0].mxu0
    %v2185 = vadd.f32 0.0, %v2184
    %2186 = vdwg.mxu0
    %2187 = vmatprep.subr.mxu0 %v487
    %2188 = vmatpush1.msra.mxu0 %v486
    %2189 = vmatprep.subr.mxu0 %v495
    %2190 = vmatpush1.msra.mxu0 %v494
    %2191 = vmatprep.subr.mxu0 %v503
    %2192 = vmatpush1.msra.mxu0 %v502
    %2193 = vmatprep.subr.mxu0 %v511
    %2194 = vmatpush1.msra.mxu0 %v510
    %2195 = vmatprep.subr.mxu0 %v519
    %2196 = vmatpush1.msra.mxu0 %v518
    %2197 = vmatprep.subr.mxu0 %v527
    %2198 = vmatpush1.msra.mxu0 %v526
    %2199 = vmatprep.subr.mxu0 %v535
    %2200 = vmatpush1.msra.mxu0 %v534
    %2201 = vmatprep.subr.mxu0 %v543
    %2202 = vmatpush1.msra.mxu0 %v542
    %2203 = vmatprep.subr.mxu0 %v551
    %2204 = vmatpush1.msra.mxu0 %v550
    %2205 = vmatprep.subr.mxu0 %v559
    %2206 = vmatpush1.msra.mxu0 %v558
    %2207 = vmatprep.subr.mxu0 %v567
    %2208 = vmatpush1.msra.mxu0 %v566
    %2209 = vmatprep.subr.mxu0 %v575
    %2210 = vmatpush1.msra.mxu0 %v574
    %2211 = vmatprep.subr.mxu0 %v583
    %2212 = vmatpush1.msra.mxu0 %v582
    %2213 = vmatprep.subr.mxu0 %v591
    %2214 = vmatpush1.msra.mxu0 %v590
    %2215 = vmatprep.subr.mxu0 %v599
    %2216 = vmatpush1.msra.mxu0 %v598
    %2217 = vmatprep.subr.mxu0 %v607
    %2218 = vmatpush1.msra.mxu0 %v606
    %2219 = vmatprep.subr.mxu0 %v615
    %2220 = vmatpush1.msra.mxu0 %v614
    %2221 = vmatprep.subr.mxu0 %v623
    %2222 = vmatpush1.msra.mxu0 %v622
    %2223 = vmatprep.subr.mxu0 %v631
    %2224 = vmatpush1.msra.mxu0 %v630
    %2225 = vmatprep.subr.mxu0 %v639
    %2226 = vmatpush1.msra.mxu0 %v638
    %2227 = vmatprep.subr.mxu0 %v647
    %2228 = vmatpush1.msra.mxu0 %v646
    %2229 = vmatprep.subr.mxu0 %v655
    %2230 = vmatpush1.msra.mxu0 %v654
    %2231 = vmatprep.subr.mxu0 %v663
    %2232 = vmatpush1.msra.mxu0 %v662
    %2233 = vmatprep.subr.mxu0 %v671
    %2234 = vmatpush1.msra.mxu0 %v670
    %2235 = vmatprep.subr.mxu0 %v679
    %2236 = vmatpush1.msra.mxu0 %v678
    %2237 = vmatprep.subr.mxu0 %v687
    %2238 = vmatpush1.msra.mxu0 %v686
    %2239 = vmatprep.subr.mxu0 %v695
    %2240 = vmatpush1.msra.mxu0 %v694
    %2241 = vmatprep.subr.mxu0 %v703
    %2242 = vmatpush1.msra.mxu0 %v702
    %2243 = vmatprep.subr.mxu0 %v711
    %2244 = vmatpush1.msra.mxu0 %v710
    %2245 = vmatprep.subr.mxu0 %v719
    %2246 = vmatpush1.msra.mxu0 %v718
    %2247 = vmatprep.subr.mxu0 %v727
    %2248 = vmatpush1.msra.mxu0 %v726
    %2249 = vmatprep.subr.mxu0 %v735
    %2250 = vmatpush1.msra.mxu0 %v734
    %2251 = vmatprep.mubr.f32.mxu0 %v2083
    %2252 = vmatmul.mubr.f32.gmra.mrb[0].mxu0 %v2115
    %v2253 = vpop.f32.mrb[0].mxu0
    %v2254 = vadd.f32 0.0, %v2253
    %v2255 = vpop.f32.mrb[0].mxu0
    %v2256 = vadd.f32 0.0, %v2255
    %2257 = vdwg.mxu0
    %2258 = vmatprep.subr.mxu0 %v489
    %2259 = vmatpush1.msra.mxu0 %v488
    %2260 = vmatprep.subr.mxu0 %v497
    %2261 = vmatpush1.msra.mxu0 %v496
    %2262 = vmatprep.subr.mxu0 %v505
    %2263 = vmatpush1.msra.mxu0 %v504
    %2264 = vmatprep.subr.mxu0 %v513
    %2265 = vmatpush1.msra.mxu0 %v512
    %2266 = vmatprep.subr.mxu0 %v521
    %2267 = vmatpush1.msra.mxu0 %v520
    %2268 = vmatprep.subr.mxu0 %v529
    %2269 = vmatpush1.msra.mxu0 %v528
    %2270 = vmatprep.subr.mxu0 %v537
    %2271 = vmatpush1.msra.mxu0 %v536
    %2272 = vmatprep.subr.mxu0 %v545
    %2273 = vmatpush1.msra.mxu0 %v544
    %2274 = vmatprep.subr.mxu0 %v553
    %2275 = vmatpush1.msra.mxu0 %v552
    %2276 = vmatprep.subr.mxu0 %v561
    %2277 = vmatpush1.msra.mxu0 %v560
    %2278 = vmatprep.subr.mxu0 %v569
    %2279 = vmatpush1.msra.mxu0 %v568
    %2280 = vmatprep.subr.mxu0 %v577
    %2281 = vmatpush1.msra.mxu0 %v576
    %2282 = vmatprep.subr.mxu0 %v585
    %2283 = vmatpush1.msra.mxu0 %v584
    %2284 = vmatprep.subr.mxu0 %v593
    %2285 = vmatpush1.msra.mxu0 %v592
    %2286 = vmatprep.subr.mxu0 %v601
    %2287 = vmatpush1.msra.mxu0 %v600
    %2288 = vmatprep.subr.mxu0 %v609
    %2289 = vmatpush1.msra.mxu0 %v608
    %2290 = vmatprep.subr.mxu0 %v617
    %2291 = vmatpush1.msra.mxu0 %v616
    %2292 = vmatprep.subr.mxu0 %v625
    %2293 = vmatpush1.msra.mxu0 %v624
    %2294 = vmatprep.subr.mxu0 %v633
    %2295 = vmatpush1.msra.mxu0 %v632
    %2296 = vmatprep.subr.mxu0 %v641
    %2297 = vmatpush1.msra.mxu0 %v640
    %2298 = vmatprep.subr.mxu0 %v649
    %2299 = vmatpush1.msra.mxu0 %v648
    %2300 = vmatprep.subr.mxu0 %v657
    %2301 = vmatpush1.msra.mxu0 %v656
    %2302 = vmatprep.subr.mxu0 %v665
    %2303 = vmatpush1.msra.mxu0 %v664
    %2304 = vmatprep.subr.mxu0 %v673
    %2305 = vmatpush1.msra.mxu0 %v672
    %2306 = vmatprep.subr.mxu0 %v681
    %2307 = vmatpush1.msra.mxu0 %v680
    %2308 = vmatprep.subr.mxu0 %v689
    %2309 = vmatpush1.msra.mxu0 %v688
    %2310 = vmatprep.subr.mxu0 %v697
    %2311 = vmatpush1.msra.mxu0 %v696
    %2312 = vmatprep.subr.mxu0 %v705
    %2313 = vmatpush1.msra.mxu0 %v704
    %2314 = vmatprep.subr.mxu0 %v713
    %2315 = vmatpush1.msra.mxu0 %v712
    %2316 = vmatprep.subr.mxu0 %v721
    %2317 = vmatpush1.msra.mxu0 %v720
    %2318 = vmatprep.subr.mxu0 %v729
    %2319 = vmatpush1.msra.mxu0 %v728
    %2320 = vmatprep.subr.mxu0 %v737
    %2321 = vmatpush1.msra.mxu0 %v736
    %2322 = vmatprep.mubr.f32.mxu0 %v2083
    %2323 = vmatmul.mubr.f32.gmra.mrb[0].mxu0 %v2115
    %v2324 = vpop.f32.mrb[0].mxu0
    %v2325 = vadd.f32 0.0, %v2324
    %v2326 = vpop.f32.mrb[0].mxu0
    %v2327 = vadd.f32 0.0, %v2326
    %2328 = vdwg.mxu0
    %2329 = vmatprep.subr.mxu0 %v491
    %2330 = vmatpush1.msra.mxu0 %v490
    %2331 = vmatprep.subr.mxu0 %v499
    %2332 = vmatpush1.msra.mxu0 %v498
    %2333 = vmatprep.subr.mxu0 %v507
    %2334 = vmatpush1.msra.mxu0 %v506
    %2335 = vmatprep.subr.mxu0 %v515
    %2336 = vmatpush1.msra.mxu0 %v514
    %2337 = vmatprep.subr.mxu0 %v523
    %2338 = vmatpush1.msra.mxu0 %v522
    %2339 = vmatprep.subr.mxu0 %v531
    %2340 = vmatpush1.msra.mxu0 %v530
    %2341 = vmatprep.subr.mxu0 %v539
    %2342 = vmatpush1.msra.mxu0 %v538
    %2343 = vmatprep.subr.mxu0 %v547
    %2344 = vmatpush1.msra.mxu0 %v546
    %2345 = vmatprep.subr.mxu0 %v555
    %2346 = vmatpush1.msra.mxu0 %v554
    %2347 = vmatprep.subr.mxu0 %v563
    %2348 = vmatpush1.msra.mxu0 %v562
    %2349 = vmatprep.subr.mxu0 %v571
    %2350 = vmatpush1.msra.mxu0 %v570
    %2351 = vmatprep.subr.mxu0 %v579
    %2352 = vmatpush1.msra.mxu0 %v578
    %2353 = vmatprep.subr.mxu0 %v587
    %2354 = vmatpush1.msra.mxu0 %v586
    %2355 = vmatprep.subr.mxu0 %v595
    %2356 = vmatpush1.msra.mxu0 %v594
    %2357 = vmatprep.subr.mxu0 %v603
    %2358 = vmatpush1.msra.mxu0 %v602
    %2359 = vmatprep.subr.mxu0 %v611
    %2360 = vmatpush1.msra.mxu0 %v610
    %2361 = vmatprep.subr.mxu0 %v619
    %2362 = vmatpush1.msra.mxu0 %v618
    %2363 = vmatprep.subr.mxu0 %v627
    %2364 = vmatpush1.msra.mxu0 %v626
    %2365 = vmatprep.subr.mxu0 %v635
    %2366 = vmatpush1.msra.mxu0 %v634
    %2367 = vmatprep.subr.mxu0 %v643
    %2368 = vmatpush1.msra.mxu0 %v642
    %2369 = vmatprep.subr.mxu0 %v651
    %2370 = vmatpush1.msra.mxu0 %v650
    %2371 = vmatprep.subr.mxu0 %v659
    %2372 = vmatpush1.msra.mxu0 %v658
    %2373 = vmatprep.subr.mxu0 %v667
    %2374 = vmatpush1.msra.mxu0 %v666
    %2375 = vmatprep.subr.mxu0 %v675
    %2376 = vmatpush1.msra.mxu0 %v674
    %2377 = vmatprep.subr.mxu0 %v683
    %2378 = vmatpush1.msra.mxu0 %v682
    %2379 = vmatprep.subr.mxu0 %v691
    %2380 = vmatpush1.msra.mxu0 %v690
    %2381 = vmatprep.subr.mxu0 %v699
    %2382 = vmatpush1.msra.mxu0 %v698
    %2383 = vmatprep.subr.mxu0 %v707
    %2384 = vmatpush1.msra.mxu0 %v706
    %2385 = vmatprep.subr.mxu0 %v715
    %2386 = vmatpush1.msra.mxu0 %v714
    %2387 = vmatprep.subr.mxu0 %v723
    %2388 = vmatpush1.msra.mxu0 %v722
    %2389 = vmatprep.subr.mxu0 %v731
    %2390 = vmatpush1.msra.mxu0 %v730
    %2391 = vmatprep.subr.mxu0 %v739
    %2392 = vmatpush1.msra.mxu0 %v738
    %2393 = vmatprep.mubr.f32.mxu0 %v2083
    %2394 = vmatmul.mubr.f32.gmra.mrb[0].mxu0 %v2115
    %v2395 = vpop.f32.mrb[0].mxu0
    %v2396 = vadd.f32 0.0, %v2395
    %v2397 = vpop.f32.mrb[0].mxu0
    %v2398 = vadd.f32 0.0, %v2397
    %2399 = vdwg.mxu0
    %v2400 = vadd.f32 %v2325, %v439
    %v2401 = vadd.f32 %v2327, %v443
    %v2402 = vadd.f32 %v2396, %v447
    %v2403 = vadd.f32 %v2398, %v451
    %v2404 = vxor.u32 %v2400, 2147483648
    %v2405 = vxor.u32 %v2401, 2147483648
    %v2406 = vxor.u32 %v2402, 2147483648
    %v2407 = vmul.f32 %v2404, 1.442695
    %v2408 = vpow.pop %v2407
    %v2409 = vmul.f32 %v2405, 1.442695
    %v2410 = vpow.pop %v2409
    %v2411 = vmul.f32 %v2406, 1.442695
    %v2412 = vpow.pop %v2411
    %v2413 = vadd.f32 %v2408, 1.0
    %v2414 = vadd.f32 %v2410, 1.0
    %v2415 = vadd.f32 %v2412, 1.0
    %v2416 = vrcp.pop %v2413
    %v2417 = vmul.f32 1.0, %v2416
    %v2418 = vrcp.pop %v2414
    %v2419 = vmul.f32 1.0, %v2418
    %v2420 = vrcp.pop %v2415
    %v2421 = vmul.f32 1.0, %v2420
    %v2422 = vtanh.pop %v2403
    %v2423 = vmul.f32 %v2419, %v2081
    %v2424 = vmul.f32 %v2417, %v2422
    %v2425 = vadd.f32 %v2423, %v2424
    %v2426 = vtanh.pop %v2425
    %v2427 = vmul.f32 %v2421, %v2426
    %v2428 = vld [vmem:[#allocation2 + $0xa0] sm:$0xff]
    %v2429 = vld [vmem:[#allocation2 + $0xa8] sm:$0xff]
    %v2430 = vld [vmem:[#allocation2 + $0xb0] sm:$0xff]
    %v2431 = vld [vmem:[#allocation2 + $0xb8] sm:$0xff]
    %v2432 = vadd.f32 %v2428, %v2183
    %v2433 = vadd.f32 %v2429, %v2185
    %v2434 = vadd.f32 %v2430, %v2254
    %v2435 = vadd.f32 %v2431, %v2256
    %v2436 = vxor.u32 %v2432, 2147483648
    %v2437 = vxor.u32 %v2433, 2147483648
    %v2438 = vxor.u32 %v2434, 2147483648
    %v2439 = vmul.f32 %v2436, 1.442695
    %v2440 = vpow.pop %v2439
    %v2441 = vmul.f32 %v2437, 1.442695
    %v2442 = vpow.pop %v2441
    %v2443 = vmul.f32 %v2438, 1.442695
    %v2444 = vpow.pop %v2443
    %v2445 = vadd.f32 %v2440, 1.0
    %v2446 = vadd.f32 %v2442, 1.0
    %v2447 = vadd.f32 %v2444, 1.0
    %v2448 = vrcp.pop %v2445
    %v2449 = vmul.f32 1.0, %v2448
    %v2450 = vrcp.pop %v2446
    %v2451 = vmul.f32 1.0, %v2450
    %v2452 = vrcp.pop %v2447
    %v2453 = vmul.f32 1.0, %v2452
    %v2454 = vtanh.pop %v2435
    %v2455 = vmul.f32 %v2451, %v2113
    %v2456 = vmul.f32 %v2449, %v2454
    %v2457 = vadd.f32 %v2455, %v2456
    %v2458 = vtanh.pop %v2457
    %v2459 = vmul.f32 %v2453, %v2458
    %2460 = vmatprep.subr.mxu0 %v485
    %2461 = vmatpush1.msra.mxu0 %v484
    %2462 = vmatprep.subr.mxu0 %v493
    %2463 = vmatpush1.msra.mxu0 %v492
    %2464 = vmatprep.subr.mxu0 %v501
    %2465 = vmatpush1.msra.mxu0 %v500
    %2466 = vmatprep.subr.mxu0 %v509
    %2467 = vmatpush1.msra.mxu0 %v508
    %2468 = vmatprep.subr.mxu0 %v517
    %2469 = vmatpush1.msra.mxu0 %v516
    %2470 = vmatprep.subr.mxu0 %v525
    %2471 = vmatpush1.msra.mxu0 %v524
    %2472 = vmatprep.subr.mxu0 %v533
    %2473 = vmatpush1.msra.mxu0 %v532
    %2474 = vmatprep.subr.mxu0 %v541
    %2475 = vmatpush1.msra.mxu0 %v540
    %2476 = vmatprep.subr.mxu0 %v549
    %2477 = vmatpush1.msra.mxu0 %v548
    %2478 = vmatprep.subr.mxu0 %v557
    %2479 = vmatpush1.msra.mxu0 %v556
    %2480 = vmatprep.subr.mxu0 %v565
    %2481 = vmatpush1.msra.mxu0 %v564
    %2482 = vmatprep.subr.mxu0 %v573
    %2483 = vmatpush1.msra.mxu0 %v572
    %2484 = vmatprep.subr.mxu0 %v581
    %2485 = vmatpush1.msra.mxu0 %v580
    %2486 = vmatprep.subr.mxu0 %v589
    %2487 = vmatpush1.msra.mxu0 %v588
    %2488 = vmatprep.subr.mxu0 %v597
    %2489 = vmatpush1.msra.mxu0 %v596
    %2490 = vmatprep.subr.mxu0 %v605
    %2491 = vmatpush1.msra.mxu0 %v604
    %2492 = vmatprep.subr.mxu0 %v613
    %2493 = vmatpush1.msra.mxu0 %v612
    %2494 = vmatprep.subr.mxu0 %v621
    %2495 = vmatpush1.msra.mxu0 %v620
    %2496 = vmatprep.subr.mxu0 %v629
    %2497 = vmatpush1.msra.mxu0 %v628
    %2498 = vmatprep.subr.mxu0 %v637
    %2499 = vmatpush1.msra.mxu0 %v636
    %2500 = vmatprep.subr.mxu0 %v645
    %2501 = vmatpush1.msra.mxu0 %v644
    %2502 = vmatprep.subr.mxu0 %v653
    %2503 = vmatpush1.msra.mxu0 %v652
    %2504 = vmatprep.subr.mxu0 %v661
    %2505 = vmatpush1.msra.mxu0 %v660
    %2506 = vmatprep.subr.mxu0 %v669
    %2507 = vmatpush1.msra.mxu0 %v668
    %2508 = vmatprep.subr.mxu0 %v677
    %2509 = vmatpush1.msra.mxu0 %v676
    %2510 = vmatprep.subr.mxu0 %v685
    %2511 = vmatpush1.msra.mxu0 %v684
    %2512 = vmatprep.subr.mxu0 %v693
    %2513 = vmatpush1.msra.mxu0 %v692
    %2514 = vmatprep.subr.mxu0 %v701
    %2515 = vmatpush1.msra.mxu0 %v700
    %2516 = vmatprep.subr.mxu0 %v709
    %2517 = vmatpush1.msra.mxu0 %v708
    %2518 = vmatprep.subr.mxu0 %v717
    %2519 = vmatpush1.msra.mxu0 %v716
    %2520 = vmatprep.subr.mxu0 %v725
    %2521 = vmatpush1.msra.mxu0 %v724
    %2522 = vmatprep.subr.mxu0 %v733
    %2523 = vmatpush1.msra.mxu0 %v732
    %2524 = vmatprep.mubr.f32.mxu0 %v2427
    %2525 = vmatmul.mubr.f32.gmra.mrb[0].mxu0 %v2459
    %v2526 = vpop.f32.mrb[0].mxu0
    %v2527 = vadd.f32 0.0, %v2526
    %v2528 = vpop.f32.mrb[0].mxu0
    %v2529 = vadd.f32 0.0, %v2528
    %2530 = vdwg.mxu0
    %2531 = vmatprep.subr.mxu0 %v487
    %2532 = vmatpush1.msra.mxu0 %v486
    %2533 = vmatprep.subr.mxu0 %v495
    %2534 = vmatpush1.msra.mxu0 %v494
    %2535 = vmatprep.subr.mxu0 %v503
    %2536 = vmatpush1.msra.mxu0 %v502
    %2537 = vmatprep.subr.mxu0 %v511
    %2538 = vmatpush1.msra.mxu0 %v510
    %2539 = vmatprep.subr.mxu0 %v519
    %2540 = vmatpush1.msra.mxu0 %v518
    %2541 = vmatprep.subr.mxu0 %v527
    %2542 = vmatpush1.msra.mxu0 %v526
    %2543 = vmatprep.subr.mxu0 %v535
    %2544 = vmatpush1.msra.mxu0 %v534
    %2545 = vmatprep.subr.mxu0 %v543
    %2546 = vmatpush1.msra.mxu0 %v542
    %2547 = vmatprep.subr.mxu0 %v551
    %2548 = vmatpush1.msra.mxu0 %v550
    %2549 = vmatprep.subr.mxu0 %v559
    %2550 = vmatpush1.msra.mxu0 %v558
    %2551 = vmatprep.subr.mxu0 %v567
    %2552 = vmatpush1.msra.mxu0 %v566
    %2553 = vmatprep.subr.mxu0 %v575
    %2554 = vmatpush1.msra.mxu0 %v574
    %2555 = vmatprep.subr.mxu0 %v583
    %2556 = vmatpush1.msra.mxu0 %v582
    %2557 = vmatprep.subr.mxu0 %v591
    %2558 = vmatpush1.msra.mxu0 %v590
    %2559 = vmatprep.subr.mxu0 %v599
    %2560 = vmatpush1.msra.mxu0 %v598
    %2561 = vmatprep.subr.mxu0 %v607
    %2562 = vmatpush1.msra.mxu0 %v606
    %2563 = vmatprep.subr.mxu0 %v615
    %2564 = vmatpush1.msra.mxu0 %v614
    %2565 = vmatprep.subr.mxu0 %v623
    %2566 = vmatpush1.msra.mxu0 %v622
    %2567 = vmatprep.subr.mxu0 %v631
    %2568 = vmatpush1.msra.mxu0 %v630
    %2569 = vmatprep.subr.mxu0 %v639
    %2570 = vmatpush1.msra.mxu0 %v638
    %2571 = vmatprep.subr.mxu0 %v647
    %2572 = vmatpush1.msra.mxu0 %v646
    %2573 = vmatprep.subr.mxu0 %v655
    %2574 = vmatpush1.msra.mxu0 %v654
    %2575 = vmatprep.subr.mxu0 %v663
    %2576 = vmatpush1.msra.mxu0 %v662
    %2577 = vmatprep.subr.mxu0 %v671
    %2578 = vmatpush1.msra.mxu0 %v670
    %2579 = vmatprep.subr.mxu0 %v679
    %2580 = vmatpush1.msra.mxu0 %v678
    %2581 = vmatprep.subr.mxu0 %v687
    %2582 = vmatpush1.msra.mxu0 %v686
    %2583 = vmatprep.subr.mxu0 %v695
    %2584 = vmatpush1.msra.mxu0 %v694
    %2585 = vmatprep.subr.mxu0 %v703
    %2586 = vmatpush1.msra.mxu0 %v702
    %2587 = vmatprep.subr.mxu0 %v711
    %2588 = vmatpush1.msra.mxu0 %v710
    %2589 = vmatprep.subr.mxu0 %v719
    %2590 = vmatpush1.msra.mxu0 %v718
    %2591 = vmatprep.subr.mxu0 %v727
    %2592 = vmatpush1.msra.mxu0 %v726
    %2593 = vmatprep.subr.mxu0 %v735
    %2594 = vmatpush1.msra.mxu0 %v734
    %2595 = vmatprep.mubr.f32.mxu0 %v2427
    %2596 = vmatmul.mubr.f32.gmra.mrb[0].mxu0 %v2459
    %v2597 = vpop.f32.mrb[0].mxu0
    %v2598 = vadd.f32 0.0, %v2597
    %v2599 = vpop.f32.mrb[0].mxu0
    %v2600 = vadd.f32 0.0, %v2599
    %2601 = vdwg.mxu0
    %2602 = vmatprep.subr.mxu0 %v489
    %2603 = vmatpush1.msra.mxu0 %v488
    %2604 = vmatprep.subr.mxu0 %v497
    %2605 = vmatpush1.msra.mxu0 %v496
    %2606 = vmatprep.subr.mxu0 %v505
    %2607 = vmatpush1.msra.mxu0 %v504
    %2608 = vmatprep.subr.mxu0 %v513
    %2609 = vmatpush1.msra.mxu0 %v512
    %2610 = vmatprep.subr.mxu0 %v521
    %2611 = vmatpush1.msra.mxu0 %v520
    %2612 = vmatprep.subr.mxu0 %v529
    %2613 = vmatpush1.msra.mxu0 %v528
    %2614 = vmatprep.subr.mxu0 %v537
    %2615 = vmatpush1.msra.mxu0 %v536
    %2616 = vmatprep.subr.mxu0 %v545
    %2617 = vmatpush1.msra.mxu0 %v544
    %2618 = vmatprep.subr.mxu0 %v553
    %2619 = vmatpush1.msra.mxu0 %v552
    %2620 = vmatprep.subr.mxu0 %v561
    %2621 = vmatpush1.msra.mxu0 %v560
    %2622 = vmatprep.subr.mxu0 %v569
    %2623 = vmatpush1.msra.mxu0 %v568
    %2624 = vmatprep.subr.mxu0 %v577
    %2625 = vmatpush1.msra.mxu0 %v576
    %2626 = vmatprep.subr.mxu0 %v585
    %2627 = vmatpush1.msra.mxu0 %v584
    %2628 = vmatprep.subr.mxu0 %v593
    %2629 = vmatpush1.msra.mxu0 %v592
    %2630 = vmatprep.subr.mxu0 %v601
    %2631 = vmatpush1.msra.mxu0 %v600
    %2632 = vmatprep.subr.mxu0 %v609
    %2633 = vmatpush1.msra.mxu0 %v608
    %2634 = vmatprep.subr.mxu0 %v617
    %2635 = vmatpush1.msra.mxu0 %v616
    %2636 = vmatprep.subr.mxu0 %v625
    %2637 = vmatpush1.msra.mxu0 %v624
    %2638 = vmatprep.subr.mxu0 %v633
    %2639 = vmatpush1.msra.mxu0 %v632
    %2640 = vmatprep.subr.mxu0 %v641
    %2641 = vmatpush1.msra.mxu0 %v640
    %2642 = vmatprep.subr.mxu0 %v649
    %2643 = vmatpush1.msra.mxu0 %v648
    %2644 = vmatprep.subr.mxu0 %v657
    %2645 = vmatpush1.msra.mxu0 %v656
    %2646 = vmatprep.subr.mxu0 %v665
    %2647 = vmatpush1.msra.mxu0 %v664
    %2648 = vmatprep.subr.mxu0 %v673
    %2649 = vmatpush1.msra.mxu0 %v672
    %2650 = vmatprep.subr.mxu0 %v681
    %2651 = vmatpush1.msra.mxu0 %v680
    %2652 = vmatprep.subr.mxu0 %v689
    %2653 = vmatpush1.msra.mxu0 %v688
    %2654 = vmatprep.subr.mxu0 %v697
    %2655 = vmatpush1.msra.mxu0 %v696
    %2656 = vmatprep.subr.mxu0 %v705
    %2657 = vmatpush1.msra.mxu0 %v704
    %2658 = vmatprep.subr.mxu0 %v713
    %2659 = vmatpush1.msra.mxu0 %v712
    %2660 = vmatprep.subr.mxu0 %v721
    %2661 = vmatpush1.msra.mxu0 %v720
    %2662 = vmatprep.subr.mxu0 %v729
    %2663 = vmatpush1.msra.mxu0 %v728
    %2664 = vmatprep.subr.mxu0 %v737
    %2665 = vmatpush1.msra.mxu0 %v736
    %2666 = vmatprep.mubr.f32.mxu0 %v2427
    %2667 = vmatmul.mubr.f32.gmra.mrb[0].mxu0 %v2459
    %v2668 = vpop.f32.mrb[0].mxu0
    %v2669 = vadd.f32 0.0, %v2668
    %v2670 = vpop.f32.mrb[0].mxu0
    %v2671 = vadd.f32 0.0, %v2670
    %2672 = vdwg.mxu0
    %2673 = vmatprep.subr.mxu0 %v491
    %2674 = vmatpush1.msra.mxu0 %v490
    %2675 = vmatprep.subr.mxu0 %v499
    %2676 = vmatpush1.msra.mxu0 %v498
    %2677 = vmatprep.subr.mxu0 %v507
    %2678 = vmatpush1.msra.mxu0 %v506
    %2679 = vmatprep.subr.mxu0 %v515
    %2680 = vmatpush1.msra.mxu0 %v514
    %2681 = vmatprep.subr.mxu0 %v523
    %2682 = vmatpush1.msra.mxu0 %v522
    %2683 = vmatprep.subr.mxu0 %v531
    %2684 = vmatpush1.msra.mxu0 %v530
    %2685 = vmatprep.subr.mxu0 %v539
    %2686 = vmatpush1.msra.mxu0 %v538
    %2687 = vmatprep.subr.mxu0 %v547
    %2688 = vmatpush1.msra.mxu0 %v546
    %2689 = vmatprep.subr.mxu0 %v555
    %2690 = vmatpush1.msra.mxu0 %v554
    %2691 = vmatprep.subr.mxu0 %v563
    %2692 = vmatpush1.msra.mxu0 %v562
    %2693 = vmatprep.subr.mxu0 %v571
    %2694 = vmatpush1.msra.mxu0 %v570
    %2695 = vmatprep.subr.mxu0 %v579
    %2696 = vmatpush1.msra.mxu0 %v578
    %2697 = vmatprep.subr.mxu0 %v587
    %2698 = vmatpush1.msra.mxu0 %v586
    %2699 = vmatprep.subr.mxu0 %v595
    %2700 = vmatpush1.msra.mxu0 %v594
    %2701 = vmatprep.subr.mxu0 %v603
    %2702 = vmatpush1.msra.mxu0 %v602
    %2703 = vmatprep.subr.mxu0 %v611
    %2704 = vmatpush1.msra.mxu0 %v610
    %2705 = vmatprep.subr.mxu0 %v619
    %2706 = vmatpush1.msra.mxu0 %v618
    %2707 = vmatprep.subr.mxu0 %v627
    %2708 = vmatpush1.msra.mxu0 %v626
    %2709 = vmatprep.subr.mxu0 %v635
    %2710 = vmatpush1.msra.mxu0 %v634
    %2711 = vmatprep.subr.mxu0 %v643
    %2712 = vmatpush1.msra.mxu0 %v642
    %2713 = vmatprep.subr.mxu0 %v651
    %2714 = vmatpush1.msra.mxu0 %v650
    %2715 = vmatprep.subr.mxu0 %v659
    %2716 = vmatpush1.msra.mxu0 %v658
    %2717 = vmatprep.subr.mxu0 %v667
    %2718 = vmatpush1.msra.mxu0 %v666
    %2719 = vmatprep.subr.mxu0 %v675
    %2720 = vmatpush1.msra.mxu0 %v674
    %2721 = vmatprep.subr.mxu0 %v683
    %2722 = vmatpush1.msra.mxu0 %v682
    %2723 = vmatprep.subr.mxu0 %v691
    %2724 = vmatpush1.msra.mxu0 %v690
    %2725 = vmatprep.subr.mxu0 %v699
    %2726 = vmatpush1.msra.mxu0 %v698
    %2727 = vmatprep.subr.mxu0 %v707
    %2728 = vmatpush1.msra.mxu0 %v706
    %2729 = vmatprep.subr.mxu0 %v715
    %2730 = vmatpush1.msra.mxu0 %v714
    %2731 = vmatprep.subr.mxu0 %v723
    %2732 = vmatpush1.msra.mxu0 %v722
    %2733 = vmatprep.subr.mxu0 %v731
    %2734 = vmatpush1.msra.mxu0 %v730
    %2735 = vmatprep.subr.mxu0 %v739
    %2736 = vmatpush1.msra.mxu0 %v738
    %2737 = vmatprep.mubr.f32.mxu0 %v2427
    %2738 = vmatmul.mubr.f32.gmra.mrb[0].mxu0 %v2459
    %v2739 = vpop.f32.mrb[0].mxu0
    %v2740 = vadd.f32 0.0, %v2739
    %v2741 = vpop.f32.mrb[0].mxu0
    %v2742 = vadd.f32 0.0, %v2741
    %2743 = vdwg.mxu0
    %v2744 = vadd.f32 %v2669, %v439
    %v2745 = vadd.f32 %v2671, %v443
    %v2746 = vadd.f32 %v2740, %v447
    %v2747 = vadd.f32 %v2742, %v451
    %v2748 = vxor.u32 %v2744, 2147483648
    %v2749 = vxor.u32 %v2745, 2147483648
    %v2750 = vxor.u32 %v2746, 2147483648
    %v2751 = vmul.f32 %v2748, 1.442695
    %v2752 = vpow.pop %v2751
    %v2753 = vmul.f32 %v2749, 1.442695
    %v2754 = vpow.pop %v2753
    %v2755 = vmul.f32 %v2750, 1.442695
    %v2756 = vpow.pop %v2755
    %v2757 = vadd.f32 %v2752, 1.0
    %v2758 = vadd.f32 %v2754, 1.0
    %v2759 = vadd.f32 %v2756, 1.0
    %v2760 = vrcp.pop %v2757
    %v2761 = vmul.f32 1.0, %v2760
    %v2762 = vrcp.pop %v2758
    %v2763 = vmul.f32 1.0, %v2762
    %v2764 = vrcp.pop %v2759
    %v2765 = vmul.f32 1.0, %v2764
    %v2766 = vtanh.pop %v2747
    %v2767 = vmul.f32 %v2763, %v2425
    %v2768 = vmul.f32 %v2761, %v2766
    %v2769 = vadd.f32 %v2767, %v2768
    %v2770 = vtanh.pop %v2769
    %v2771 = vmul.f32 %v2765, %v2770
    %v2772 = vld [vmem:[#allocation2 + $0xc0] sm:$0xff]
    %v2773 = vld [vmem:[#allocation2 + $0xc8] sm:$0xff]
    %v2774 = vld [vmem:[#allocation2 + $0xd0] sm:$0xff]
    %v2775 = vld [vmem:[#allocation2 + $0xd8] sm:$0xff]
    %v2776 = vadd.f32 %v2772, %v2527
    %v2777 = vadd.f32 %v2773, %v2529
    %v2778 = vadd.f32 %v2774, %v2598
    %v2779 = vadd.f32 %v2775, %v2600
    %v2780 = vxor.u32 %v2776, 2147483648
    %v2781 = vxor.u32 %v2777, 2147483648
    %v2782 = vxor.u32 %v2778, 2147483648
    %v2783 = vmul.f32 %v2780, 1.442695
    %v2784 = vpow.pop %v2783
    %v2785 = vmul.f32 %v2781, 1.442695
    %v2786 = vpow.pop %v2785
    %v2787 = vmul.f32 %v2782, 1.442695
    %v2788 = vpow.pop %v2787
    %v2789 = vadd.f32 %v2784, 1.0
    %v2790 = vadd.f32 %v2786, 1.0
    %v2791 = vadd.f32 %v2788, 1.0
    %v2792 = vrcp.pop %v2789
    %v2793 = vmul.f32 1.0, %v2792
    %v2794 = vrcp.pop %v2790
    %v2795 = vmul.f32 1.0, %v2794
    %v2796 = vrcp.pop %v2791
    %v2797 = vmul.f32 1.0, %v2796
    %v2798 = vtanh.pop %v2779
    %v2799 = vmul.f32 %v2795, %v2457
    %v2800 = vmul.f32 %v2793, %v2798
    %v2801 = vadd.f32 %v2799, %v2800
    %v2802 = vtanh.pop %v2801
    %v2803 = vmul.f32 %v2797, %v2802
    %2804 = vmatprep.subr.mxu0 %v485
    %2805 = vmatpush1.msra.mxu0 %v484
    %2806 = vmatprep.subr.mxu0 %v493
    %2807 = vmatpush1.msra.mxu0 %v492
    %2808 = vmatprep.subr.mxu0 %v501
    %2809 = vmatpush1.msra.mxu0 %v500
    %2810 = vmatprep.subr.mxu0 %v509
    %2811 = vmatpush1.msra.mxu0 %v508
    %2812 = vmatprep.subr.mxu0 %v517
    %2813 = vmatpush1.msra.mxu0 %v516
    %2814 = vmatprep.subr.mxu0 %v525
    %2815 = vmatpush1.msra.mxu0 %v524
    %2816 = vmatprep.subr.mxu0 %v533
    %2817 = vmatpush1.msra.mxu0 %v532
    %2818 = vmatprep.subr.mxu0 %v541
    %2819 = vmatpush1.msra.mxu0 %v540
    %2820 = vmatprep.subr.mxu0 %v549
    %2821 = vmatpush1.msra.mxu0 %v548
    %2822 = vmatprep.subr.mxu0 %v557
    %2823 = vmatpush1.msra.mxu0 %v556
    %2824 = vmatprep.subr.mxu0 %v565
    %2825 = vmatpush1.msra.mxu0 %v564
    %2826 = vmatprep.subr.mxu0 %v573
    %2827 = vmatpush1.msra.mxu0 %v572
    %2828 = vmatprep.subr.mxu0 %v581
    %2829 = vmatpush1.msra.mxu0 %v580
    %2830 = vmatprep.subr.mxu0 %v589
    %2831 = vmatpush1.msra.mxu0 %v588
    %2832 = vmatprep.subr.mxu0 %v597
    %2833 = vmatpush1.msra.mxu0 %v596
    %2834 = vmatprep.subr.mxu0 %v605
    %2835 = vmatpush1.msra.mxu0 %v604
    %2836 = vmatprep.subr.mxu0 %v613
    %2837 = vmatpush1.msra.mxu0 %v612
    %2838 = vmatprep.subr.mxu0 %v621
    %2839 = vmatpush1.msra.mxu0 %v620
    %2840 = vmatprep.subr.mxu0 %v629
    %2841 = vmatpush1.msra.mxu0 %v628
    %2842 = vmatprep.subr.mxu0 %v637
    %2843 = vmatpush1.msra.mxu0 %v636
    %2844 = vmatprep.subr.mxu0 %v645
    %2845 = vmatpush1.msra.mxu0 %v644
    %2846 = vmatprep.subr.mxu0 %v653
    %2847 = vmatpush1.msra.mxu0 %v652
    %2848 = vmatprep.subr.mxu0 %v661
    %2849 = vmatpush1.msra.mxu0 %v660
    %2850 = vmatprep.subr.mxu0 %v669
    %2851 = vmatpush1.msra.mxu0 %v668
    %2852 = vmatprep.subr.mxu0 %v677
    %2853 = vmatpush1.msra.mxu0 %v676
    %2854 = vmatprep.subr.mxu0 %v685
    %2855 = vmatpush1.msra.mxu0 %v684
    %2856 = vmatprep.subr.mxu0 %v693
    %2857 = vmatpush1.msra.mxu0 %v692
    %2858 = vmatprep.subr.mxu0 %v701
    %2859 = vmatpush1.msra.mxu0 %v700
    %2860 = vmatprep.subr.mxu0 %v709
    %2861 = vmatpush1.msra.mxu0 %v708
    %2862 = vmatprep.subr.mxu0 %v717
    %2863 = vmatpush1.msra.mxu0 %v716
    %2864 = vmatprep.subr.mxu0 %v725
    %2865 = vmatpush1.msra.mxu0 %v724
    %2866 = vmatprep.subr.mxu0 %v733
    %2867 = vmatpush1.msra.mxu0 %v732
    %2868 = vmatprep.mubr.f32.mxu0 %v2771
    %2869 = vmatmul.mubr.f32.gmra.mrb[0].mxu0 %v2803
    %v2870 = vpop.f32.mrb[0].mxu0
    %v2871 = vadd.f32 0.0, %v2870
    %v2872 = vpop.f32.mrb[0].mxu0
    %v2873 = vadd.f32 0.0, %v2872
    %2874 = vdwg.mxu0
    %2875 = vmatprep.subr.mxu0 %v487
    %2876 = vmatpush1.msra.mxu0 %v486
    %2877 = vmatprep.subr.mxu0 %v495
    %2878 = vmatpush1.msra.mxu0 %v494
    %2879 = vmatprep.subr.mxu0 %v503
    %2880 = vmatpush1.msra.mxu0 %v502
    %2881 = vmatprep.subr.mxu0 %v511
    %2882 = vmatpush1.msra.mxu0 %v510
    %2883 = vmatprep.subr.mxu0 %v519
    %2884 = vmatpush1.msra.mxu0 %v518
    %2885 = vmatprep.subr.mxu0 %v527
    %2886 = vmatpush1.msra.mxu0 %v526
    %2887 = vmatprep.subr.mxu0 %v535
    %2888 = vmatpush1.msra.mxu0 %v534
    %2889 = vmatprep.subr.mxu0 %v543
    %2890 = vmatpush1.msra.mxu0 %v542
    %2891 = vmatprep.subr.mxu0 %v551
    %2892 = vmatpush1.msra.mxu0 %v550
    %2893 = vmatprep.subr.mxu0 %v559
    %2894 = vmatpush1.msra.mxu0 %v558
    %2895 = vmatprep.subr.mxu0 %v567
    %2896 = vmatpush1.msra.mxu0 %v566
    %2897 = vmatprep.subr.mxu0 %v575
    %2898 = vmatpush1.msra.mxu0 %v574
    %2899 = vmatprep.subr.mxu0 %v583
    %2900 = vmatpush1.msra.mxu0 %v582
    %2901 = vmatprep.subr.mxu0 %v591
    %2902 = vmatpush1.msra.mxu0 %v590
    %2903 = vmatprep.subr.mxu0 %v599
    %2904 = vmatpush1.msra.mxu0 %v598
    %2905 = vmatprep.subr.mxu0 %v607
    %2906 = vmatpush1.msra.mxu0 %v606
    %2907 = vmatprep.subr.mxu0 %v615
    %2908 = vmatpush1.msra.mxu0 %v614
    %2909 = vmatprep.subr.mxu0 %v623
    %2910 = vmatpush1.msra.mxu0 %v622
    %2911 = vmatprep.subr.mxu0 %v631
    %2912 = vmatpush1.msra.mxu0 %v630
    %2913 = vmatprep.subr.mxu0 %v639
    %2914 = vmatpush1.msra.mxu0 %v638
    %2915 = vmatprep.subr.mxu0 %v647
    %2916 = vmatpush1.msra.mxu0 %v646
    %2917 = vmatprep.subr.mxu0 %v655
    %2918 = vmatpush1.msra.mxu0 %v654
    %2919 = vmatprep.subr.mxu0 %v663
    %2920 = vmatpush1.msra.mxu0 %v662
    %2921 = vmatprep.subr.mxu0 %v671
    %2922 = vmatpush1.msra.mxu0 %v670
    %2923 = vmatprep.subr.mxu0 %v679
    %2924 = vmatpush1.msra.mxu0 %v678
    %2925 = vmatprep.subr.mxu0 %v687
    %2926 = vmatpush1.msra.mxu0 %v686
    %2927 = vmatprep.subr.mxu0 %v695
    %2928 = vmatpush1.msra.mxu0 %v694
    %2929 = vmatprep.subr.mxu0 %v703
    %2930 = vmatpush1.msra.mxu0 %v702
    %2931 = vmatprep.subr.mxu0 %v711
    %2932 = vmatpush1.msra.mxu0 %v710
    %2933 = vmatprep.subr.mxu0 %v719
    %2934 = vmatpush1.msra.mxu0 %v718
    %2935 = vmatprep.subr.mxu0 %v727
    %2936 = vmatpush1.msra.mxu0 %v726
    %2937 = vmatprep.subr.mxu0 %v735
    %2938 = vmatpush1.msra.mxu0 %v734
    %2939 = vmatprep.mubr.f32.mxu0 %v2771
    %2940 = vmatmul.mubr.f32.gmra.mrb[0].mxu0 %v2803
    %v2941 = vpop.f32.mrb[0].mxu0
    %v2942 = vadd.f32 0.0, %v2941
    %v2943 = vpop.f32.mrb[0].mxu0
    %v2944 = vadd.f32 0.0, %v2943
    %2945 = vdwg.mxu0
    %2946 = vmatprep.subr.mxu0 %v489
    %2947 = vmatpush1.msra.mxu0 %v488
    %2948 = vmatprep.subr.mxu0 %v497
    %2949 = vmatpush1.msra.mxu0 %v496
    %2950 = vmatprep.subr.mxu0 %v505
    %2951 = vmatpush1.msra.mxu0 %v504
    %2952 = vmatprep.subr.mxu0 %v513
    %2953 = vmatpush1.msra.mxu0 %v512
    %2954 = vmatprep.subr.mxu0 %v521
    %2955 = vmatpush1.msra.mxu0 %v520
    %2956 = vmatprep.subr.mxu0 %v529
    %2957 = vmatpush1.msra.mxu0 %v528
    %2958 = vmatprep.subr.mxu0 %v537
    %2959 = vmatpush1.msra.mxu0 %v536
    %2960 = vmatprep.subr.mxu0 %v545
    %2961 = vmatpush1.msra.mxu0 %v544
    %2962 = vmatprep.subr.mxu0 %v553
    %2963 = vmatpush1.msra.mxu0 %v552
    %2964 = vmatprep.subr.mxu0 %v561
    %2965 = vmatpush1.msra.mxu0 %v560
    %2966 = vmatprep.subr.mxu0 %v569
    %2967 = vmatpush1.msra.mxu0 %v568
    %2968 = vmatprep.subr.mxu0 %v577
    %2969 = vmatpush1.msra.mxu0 %v576
    %2970 = vmatprep.subr.mxu0 %v585
    %2971 = vmatpush1.msra.mxu0 %v584
    %2972 = vmatprep.subr.mxu0 %v593
    %2973 = vmatpush1.msra.mxu0 %v592
    %2974 = vmatprep.subr.mxu0 %v601
    %2975 = vmatpush1.msra.mxu0 %v600
    %2976 = vmatprep.subr.mxu0 %v609
    %2977 = vmatpush1.msra.mxu0 %v608
    %2978 = vmatprep.subr.mxu0 %v617
    %2979 = vmatpush1.msra.mxu0 %v616
    %2980 = vmatprep.subr.mxu0 %v625
    %2981 = vmatpush1.msra.mxu0 %v624
    %2982 = vmatprep.subr.mxu0 %v633
    %2983 = vmatpush1.msra.mxu0 %v632
    %2984 = vmatprep.subr.mxu0 %v641
    %2985 = vmatpush1.msra.mxu0 %v640
    %2986 = vmatprep.subr.mxu0 %v649
    %2987 = vmatpush1.msra.mxu0 %v648
    %2988 = vmatprep.subr.mxu0 %v657
    %2989 = vmatpush1.msra.mxu0 %v656
    %2990 = vmatprep.subr.mxu0 %v665
    %2991 = vmatpush1.msra.mxu0 %v664
    %2992 = vmatprep.subr.mxu0 %v673
    %2993 = vmatpush1.msra.mxu0 %v672
    %2994 = vmatprep.subr.mxu0 %v681
    %2995 = vmatpush1.msra.mxu0 %v680
    %2996 = vmatprep.subr.mxu0 %v689
    %2997 = vmatpush1.msra.mxu0 %v688
    %2998 = vmatprep.subr.mxu0 %v697
    %2999 = vmatpush1.msra.mxu0 %v696
    %3000 = vmatprep.subr.mxu0 %v705
    %3001 = vmatpush1.msra.mxu0 %v704
    %3002 = vmatprep.subr.mxu0 %v713
    %3003 = vmatpush1.msra.mxu0 %v712
    %3004 = vmatprep.subr.mxu0 %v721
    %3005 = vmatpush1.msra.mxu0 %v720
    %3006 = vmatprep.subr.mxu0 %v729
    %3007 = vmatpush1.msra.mxu0 %v728
    %3008 = vmatprep.subr.mxu0 %v737
    %3009 = vmatpush1.msra.mxu0 %v736
    %3010 = vmatprep.mubr.f32.mxu0 %v2771
    %3011 = vmatmul.mubr.f32.gmra.mrb[0].mxu0 %v2803
    %v3012 = vpop.f32.mrb[0].mxu0
    %v3013 = vadd.f32 0.0, %v3012
    %v3014 = vpop.f32.mrb[0].mxu0
    %v3015 = vadd.f32 0.0, %v3014
    %3016 = vdwg.mxu0
    %3017 = vmatprep.subr.mxu0 %v491
    %3018 = vmatpush1.msra.mxu0 %v490
    %3019 = vmatprep.subr.mxu0 %v499
    %3020 = vmatpush1.msra.mxu0 %v498
    %3021 = vmatprep.subr.mxu0 %v507
    %3022 = vmatpush1.msra.mxu0 %v506
    %3023 = vmatprep.subr.mxu0 %v515
    %3024 = vmatpush1.msra.mxu0 %v514
    %3025 = vmatprep.subr.mxu0 %v523
    %3026 = vmatpush1.msra.mxu0 %v522
    %3027 = vmatprep.subr.mxu0 %v531
    %3028 = vmatpush1.msra.mxu0 %v530
    %3029 = vmatprep.subr.mxu0 %v539
    %3030 = vmatpush1.msra.mxu0 %v538
    %3031 = vmatprep.subr.mxu0 %v547
    %3032 = vmatpush1.msra.mxu0 %v546
    %3033 = vmatprep.subr.mxu0 %v555
    %3034 = vmatpush1.msra.mxu0 %v554
    %3035 = vmatprep.subr.mxu0 %v563
    %3036 = vmatpush1.msra.mxu0 %v562
    %3037 = vmatprep.subr.mxu0 %v571
    %3038 = vmatpush1.msra.mxu0 %v570
    %3039 = vmatprep.subr.mxu0 %v579
    %3040 = vmatpush1.msra.mxu0 %v578
    %3041 = vmatprep.subr.mxu0 %v587
    %3042 = vmatpush1.msra.mxu0 %v586
    %3043 = vmatprep.subr.mxu0 %v595
    %3044 = vmatpush1.msra.mxu0 %v594
    %3045 = vmatprep.subr.mxu0 %v603
    %3046 = vmatpush1.msra.mxu0 %v602
    %3047 = vmatprep.subr.mxu0 %v611
    %3048 = vmatpush1.msra.mxu0 %v610
    %3049 = vmatprep.subr.mxu0 %v619
    %3050 = vmatpush1.msra.mxu0 %v618
    %3051 = vmatprep.subr.mxu0 %v627
    %3052 = vmatpush1.msra.mxu0 %v626
    %3053 = vmatprep.subr.mxu0 %v635
    %3054 = vmatpush1.msra.mxu0 %v634
    %3055 = vmatprep.subr.mxu0 %v643
    %3056 = vmatpush1.msra.mxu0 %v642
    %3057 = vmatprep.subr.mxu0 %v651
    %3058 = vmatpush1.msra.mxu0 %v650
    %3059 = vmatprep.subr.mxu0 %v659
    %3060 = vmatpush1.msra.mxu0 %v658
    %3061 = vmatprep.subr.mxu0 %v667
    %3062 = vmatpush1.msra.mxu0 %v666
    %3063 = vmatprep.subr.mxu0 %v675
    %3064 = vmatpush1.msra.mxu0 %v674
    %3065 = vmatprep.subr.mxu0 %v683
    %3066 = vmatpush1.msra.mxu0 %v682
    %3067 = vmatprep.subr.mxu0 %v691
    %3068 = vmatpush1.msra.mxu0 %v690
    %3069 = vmatprep.subr.mxu0 %v699
    %3070 = vmatpush1.msra.mxu0 %v698
    %3071 = vmatprep.subr.mxu0 %v707
    %3072 = vmatpush1.msra.mxu0 %v706
    %3073 = vmatprep.subr.mxu0 %v715
    %3074 = vmatpush1.msra.mxu0 %v714
    %3075 = vmatprep.subr.mxu0 %v723
    %3076 = vmatpush1.msra.mxu0 %v722
    %3077 = vmatprep.subr.mxu0 %v731
    %3078 = vmatpush1.msra.mxu0 %v730
    %3079 = vmatprep.subr.mxu0 %v739
    %3080 = vmatpush1.msra.mxu0 %v738
    %3081 = vmatprep.mubr.f32.mxu0 %v2771
    %3082 = vmatmul.mubr.f32.gmra.mrb[0].mxu0 %v2803
    %v3083 = vpop.f32.mrb[0].mxu0
    %v3084 = vadd.f32 0.0, %v3083
    %v3085 = vpop.f32.mrb[0].mxu0
    %v3086 = vadd.f32 0.0, %v3085
    %3087 = vdwg.mxu0
    %v3088 = vadd.f32 %v3013, %v439
    %v3089 = vadd.f32 %v3015, %v443
    %v3090 = vadd.f32 %v3084, %v447
    %v3091 = vadd.f32 %v3086, %v451
    %v3092 = vxor.u32 %v3088, 2147483648
    %v3093 = vxor.u32 %v3089, 2147483648
    %v3094 = vxor.u32 %v3090, 2147483648
    %v3095 = vmul.f32 %v3092, 1.442695
    %v3096 = vpow.pop %v3095
    %v3097 = vmul.f32 %v3093, 1.442695
    %v3098 = vpow.pop %v3097
    %v3099 = vmul.f32 %v3094, 1.442695
    %v3100 = vpow.pop %v3099
    %v3101 = vadd.f32 %v3096, 1.0
    %v3102 = vadd.f32 %v3098, 1.0
    %v3103 = vadd.f32 %v3100, 1.0
    %v3104 = vrcp.pop %v3101
    %v3105 = vmul.f32 1.0, %v3104
    %v3106 = vrcp.pop %v3102
    %v3107 = vmul.f32 1.0, %v3106
    %v3108 = vrcp.pop %v3103
    %v3109 = vmul.f32 1.0, %v3108
    %v3110 = vtanh.pop %v3091
    %v3111 = vmul.f32 %v3107, %v2769
    %v3112 = vmul.f32 %v3105, %v3110
    %v3113 = vadd.f32 %v3111, %v3112
    %v3114 = vtanh.pop %v3113
    %v3115 = vmul.f32 %v3109, %v3114
    %v3116 = vld [vmem:[#allocation2 + $0xe0] sm:$0xff]
    %v3117 = vld [vmem:[#allocation2 + $0xe8] sm:$0xff]
    %v3118 = vld [vmem:[#allocation2 + $0xf0] sm:$0xff]
    %v3119 = vld [vmem:[#allocation2 + $0xf8] sm:$0xff]
    %v3120 = vadd.f32 %v3116, %v2871
    %v3121 = vadd.f32 %v3117, %v2873
    %v3122 = vadd.f32 %v3118, %v2942
    %v3123 = vadd.f32 %v3119, %v2944
    %v3124 = vxor.u32 %v3120, 2147483648
    %v3125 = vxor.u32 %v3121, 2147483648
    %v3126 = vxor.u32 %v3122, 2147483648
    %v3127 = vmul.f32 %v3124, 1.442695
    %v3128 = vpow.pop %v3127
    %v3129 = vmul.f32 %v3125, 1.442695
    %v3130 = vpow.pop %v3129
    %v3131 = vmul.f32 %v3126, 1.442695
    %v3132 = vpow.pop %v3131
    %v3133 = vadd.f32 %v3128, 1.0
    %v3134 = vadd.f32 %v3130, 1.0
    %v3135 = vadd.f32 %v3132, 1.0
    %v3136 = vrcp.pop %v3133
    %v3137 = vmul.f32 1.0, %v3136
    %v3138 = vrcp.pop %v3134
    %v3139 = vmul.f32 1.0, %v3138
    %v3140 = vrcp.pop %v3135
    %v3141 = vmul.f32 1.0, %v3140
    %v3142 = vtanh.pop %v3123
    %v3143 = vmul.f32 %v3139, %v2801
    %v3144 = vmul.f32 %v3137, %v3142
    %v3145 = vadd.f32 %v3143, %v3144
    %v3146 = vtanh.pop %v3145
    %v3147 = vmul.f32 %v3141, %v3146
    %3148 = vmatprep.subr.mxu0 %v489
    %3149 = vmatpush1.msra.mxu0 %v488
    %3150 = vmatprep.subr.mxu0 %v497
    %3151 = vmatpush1.msra.mxu0 %v496
    %3152 = vmatprep.subr.mxu0 %v505
    %3153 = vmatpush1.msra.mxu0 %v504
    %3154 = vmatprep.subr.mxu0 %v513
    %3155 = vmatpush1.msra.mxu0 %v512
    %3156 = vmatprep.subr.mxu0 %v521
    %3157 = vmatpush1.msra.mxu0 %v520
    %3158 = vmatprep.subr.mxu0 %v529
    %3159 = vmatpush1.msra.mxu0 %v528
    %3160 = vmatprep.subr.mxu0 %v537
    %3161 = vmatpush1.msra.mxu0 %v536
    %3162 = vmatprep.subr.mxu0 %v545
    %3163 = vmatpush1.msra.mxu0 %v544
    %3164 = vmatprep.subr.mxu0 %v553
    %3165 = vmatpush1.msra.mxu0 %v552
    %3166 = vmatprep.subr.mxu0 %v561
    %3167 = vmatpush1.msra.mxu0 %v560
    %3168 = vmatprep.subr.mxu0 %v569
    %3169 = vmatpush1.msra.mxu0 %v568
    %3170 = vmatprep.subr.mxu0 %v577
    %3171 = vmatpush1.msra.mxu0 %v576
    %3172 = vmatprep.subr.mxu0 %v585
    %3173 = vmatpush1.msra.mxu0 %v584
    %3174 = vmatprep.subr.mxu0 %v593
    %3175 = vmatpush1.msra.mxu0 %v592
    %3176 = vmatprep.subr.mxu0 %v601
    %3177 = vmatpush1.msra.mxu0 %v600
    %3178 = vmatprep.subr.mxu0 %v609
    %3179 = vmatpush1.msra.mxu0 %v608
    %3180 = vmatprep.subr.mxu0 %v617
    %3181 = vmatpush1.msra.mxu0 %v616
    %3182 = vmatprep.subr.mxu0 %v625
    %3183 = vmatpush1.msra.mxu0 %v624
    %3184 = vmatprep.subr.mxu0 %v633
    %3185 = vmatpush1.msra.mxu0 %v632
    %3186 = vmatprep.subr.mxu0 %v641
    %3187 = vmatpush1.msra.mxu0 %v640
    %3188 = vmatprep.subr.mxu0 %v649
    %3189 = vmatpush1.msra.mxu0 %v648
    %3190 = vmatprep.subr.mxu0 %v657
    %3191 = vmatpush1.msra.mxu0 %v656
    %3192 = vmatprep.subr.mxu0 %v665
    %3193 = vmatpush1.msra.mxu0 %v664
    %3194 = vmatprep.subr.mxu0 %v673
    %3195 = vmatpush1.msra.mxu0 %v672
    %3196 = vmatprep.subr.mxu0 %v681
    %3197 = vmatpush1.msra.mxu0 %v680
    %3198 = vmatprep.subr.mxu0 %v689
    %3199 = vmatpush1.msra.mxu0 %v688
    %3200 = vmatprep.subr.mxu0 %v697
    %3201 = vmatpush1.msra.mxu0 %v696
    %3202 = vmatprep.subr.mxu0 %v705
    %3203 = vmatpush1.msra.mxu0 %v704
    %3204 = vmatprep.subr.mxu0 %v713
    %3205 = vmatpush1.msra.mxu0 %v712
    %3206 = vmatprep.subr.mxu0 %v721
    %3207 = vmatpush1.msra.mxu0 %v720
    %3208 = vmatprep.subr.mxu0 %v729
    %3209 = vmatpush1.msra.mxu0 %v728
    %3210 = vmatprep.subr.mxu0 %v737
    %3211 = vmatpush1.msra.mxu0 %v736
    %3212 = vmatprep.mubr.f32.mxu0 %v3115
    %3213 = vmatmul.mubr.f32.gmra.mrb[0].mxu0 %v3147
    %v3214 = vpop.f32.mrb[0].mxu0
    %v3215 = vadd.f32 0.0, %v3214
    %v3216 = vpop.f32.mrb[0].mxu0
    %v3217 = vadd.f32 0.0, %v3216
    %3218 = vdwg.mxu0
    %3219 = vmatprep.subr.mxu0 %v491
    %3220 = vmatpush1.msra.mxu0 %v490
    %3221 = vmatprep.subr.mxu0 %v499
    %3222 = vmatpush1.msra.mxu0 %v498
    %3223 = vmatprep.subr.mxu0 %v507
    %3224 = vmatpush1.msra.mxu0 %v506
    %3225 = vmatprep.subr.mxu0 %v515
    %3226 = vmatpush1.msra.mxu0 %v514
    %3227 = vmatprep.subr.mxu0 %v523
    %3228 = vmatpush1.msra.mxu0 %v522
    %3229 = vmatprep.subr.mxu0 %v531
    %3230 = vmatpush1.msra.mxu0 %v530
    %3231 = vmatprep.subr.mxu0 %v539
    %3232 = vmatpush1.msra.mxu0 %v538
    %3233 = vmatprep.subr.mxu0 %v547
    %3234 = vmatpush1.msra.mxu0 %v546
    %3235 = vmatprep.subr.mxu0 %v555
    %3236 = vmatpush1.msra.mxu0 %v554
    %3237 = vmatprep.subr.mxu0 %v563
    %3238 = vmatpush1.msra.mxu0 %v562
    %3239 = vmatprep.subr.mxu0 %v571
    %3240 = vmatpush1.msra.mxu0 %v570
    %3241 = vmatprep.subr.mxu0 %v579
    %3242 = vmatpush1.msra.mxu0 %v578
    %3243 = vmatprep.subr.mxu0 %v587
    %3244 = vmatpush1.msra.mxu0 %v586
    %3245 = vmatprep.subr.mxu0 %v595
    %3246 = vmatpush1.msra.mxu0 %v594
    %3247 = vmatprep.subr.mxu0 %v603
    %3248 = vmatpush1.msra.mxu0 %v602
    %3249 = vmatprep.subr.mxu0 %v611
    %3250 = vmatpush1.msra.mxu0 %v610
    %3251 = vmatprep.subr.mxu0 %v619
    %3252 = vmatpush1.msra.mxu0 %v618
    %3253 = vmatprep.subr.mxu0 %v627
    %3254 = vmatpush1.msra.mxu0 %v626
    %3255 = vmatprep.subr.mxu0 %v635
    %3256 = vmatpush1.msra.mxu0 %v634
    %3257 = vmatprep.subr.mxu0 %v643
    %3258 = vmatpush1.msra.mxu0 %v642
    %3259 = vmatprep.subr.mxu0 %v651
    %3260 = vmatpush1.msra.mxu0 %v650
    %3261 = vmatprep.subr.mxu0 %v659
    %3262 = vmatpush1.msra.mxu0 %v658
    %3263 = vmatprep.subr.mxu0 %v667
    %3264 = vmatpush1.msra.mxu0 %v666
    %3265 = vmatprep.subr.mxu0 %v675
    %3266 = vmatpush1.msra.mxu0 %v674
    %3267 = vmatprep.subr.mxu0 %v683
    %3268 = vmatpush1.msra.mxu0 %v682
    %3269 = vmatprep.subr.mxu0 %v691
    %3270 = vmatpush1.msra.mxu0 %v690
    %3271 = vmatprep.subr.mxu0 %v699
    %3272 = vmatpush1.msra.mxu0 %v698
    %3273 = vmatprep.subr.mxu0 %v707
    %3274 = vmatpush1.msra.mxu0 %v706
    %3275 = vmatprep.subr.mxu0 %v715
    %3276 = vmatpush1.msra.mxu0 %v714
    %3277 = vmatprep.subr.mxu0 %v723
    %3278 = vmatpush1.msra.mxu0 %v722
    %3279 = vmatprep.subr.mxu0 %v731
    %3280 = vmatpush1.msra.mxu0 %v730
    %3281 = vmatprep.subr.mxu0 %v739
    %3282 = vmatpush1.msra.mxu0 %v738
    %3283 = vmatprep.mubr.f32.mxu0 %v3115
    %3284 = vmatmul.mubr.f32.gmra.mrb[0].mxu0 %v3147
    %v3285 = vpop.f32.mrb[0].mxu0
    %v3286 = vadd.f32 0.0, %v3285
    %v3287 = vpop.f32.mrb[0].mxu0
    %v3288 = vadd.f32 0.0, %v3287
    %3289 = vdwg.mxu0
    %v3290 = vadd.f32 %v3215, %v439
    %v3291 = vadd.f32 %v3217, %v443
    %v3292 = vadd.f32 %v3286, %v447
    %v3293 = vadd.f32 %v3288, %v451
    %v3294 = vxor.u32 %v3290, 2147483648
    %v3295 = vxor.u32 %v3291, 2147483648
    %v3296 = vxor.u32 %v3292, 2147483648
    %v3297 = vmul.f32 %v3294, 1.442695
    %v3298 = vpow.pop %v3297
    %v3299 = vmul.f32 %v3295, 1.442695
    %v3300 = vpow.pop %v3299
    %v3301 = vmul.f32 %v3296, 1.442695
    %v3302 = vpow.pop %v3301
    %v3303 = vadd.f32 %v3298, 1.0
    %v3304 = vadd.f32 %v3300, 1.0
    %v3305 = vadd.f32 %v3302, 1.0
    %v3306 = vrcp.pop %v3303
    %v3307 = vmul.f32 1.0, %v3306
    %v3308 = vrcp.pop %v3304
    %v3309 = vmul.f32 1.0, %v3308
    %v3310 = vrcp.pop %v3305
    %v3311 = vmul.f32 1.0, %v3310
    %v3312 = vtanh.pop %v3293
    %v3313 = vmul.f32 %v3309, %v3113
    %v3314 = vmul.f32 %v3307, %v3312
    %v3315 = vadd.f32 %v3313, %v3314
    %v3316 = vtanh.pop %v3315
    %v3317 = vmul.f32 %v3311, %v3316
    %v3318 = vld [vmem:[#allocation9] sm:$0xff]
    %v3319 = vld [vmem:[#allocation9 + $0x8] sm:$0xff]
    %v3320 = vld [vmem:[#allocation9 + $0x10] sm:$0xff]
    %v3321 = vld [vmem:[#allocation9 + $0x18] sm:$0xff]
    %v3322 = vld [vmem:[#allocation9 + $0x20] sm:$0xff]
    %v3323 = vld [vmem:[#allocation9 + $0x28] sm:$0xff]
    %v3324 = vld [vmem:[#allocation9 + $0x30] sm:$0xff]
    %v3325 = vld [vmem:[#allocation9 + $0x38] sm:$0xff]
    %v3326 = vld [vmem:[#allocation9 + $0x40] sm:$0xff]
    %v3327 = vld [vmem:[#allocation9 + $0x48] sm:$0xff]
    %v3328 = vld [vmem:[#allocation9 + $0x50] sm:$0xff]
    %v3329 = vld [vmem:[#allocation9 + $0x58] sm:$0xff]
    %v3330 = vld [vmem:[#allocation9 + $0x60] sm:$0xff]
    %v3331 = vld [vmem:[#allocation9 + $0x68] sm:$0xff]
    %v3332 = vld [vmem:[#allocation9 + $0x70] sm:$0xff]
    %v3333 = vld [vmem:[#allocation9 + $0x78] sm:$0xff]
    %v3334 = vld [vmem:[%s6] sm:$0x1]
    %v3336 = vlaneseq
    %v3337 = vshrl.u32 %v3336, 7
    %v3338 = vsub.s32 0, %v3337
    %v3339 = vrot.slane %v3334, %v3338
    %3341 = vmatprep.subr.mxu0 0.0
    %3342 = vmatpush1.msra.mxu0 %v3318
    %3343 = vmatprep.subr.mxu0 0.0
    %3344 = vmatpush1.msra.mxu0 %v3319
    %3345 = vmatprep.subr.mxu0 0.0
    %3346 = vmatpush1.msra.mxu0 %v3320
    %3347 = vmatprep.subr.mxu0 0.0
    %3348 = vmatpush1.msra.mxu0 %v3321
    %3349 = vmatprep.subr.mxu0 0.0
    %3350 = vmatpush1.msra.mxu0 %v3322
    %3351 = vmatprep.subr.mxu0 0.0
    %3352 = vmatpush1.msra.mxu0 %v3323
    %3353 = vmatprep.subr.mxu0 0.0
    %3354 = vmatpush1.msra.mxu0 %v3324
    %3355 = vmatprep.subr.mxu0 0.0
    %3356 = vmatpush1.msra.mxu0 %v3325
    %3357 = vmatprep.subr.mxu0 0.0
    %3358 = vmatpush1.msra.mxu0 %v3326
    %3359 = vmatprep.subr.mxu0 0.0
    %3360 = vmatpush1.msra.mxu0 %v3327
    %3361 = vmatprep.subr.mxu0 0.0
    %3362 = vmatpush1.msra.mxu0 %v3328
    %3363 = vmatprep.subr.mxu0 0.0
    %3364 = vmatpush1.msra.mxu0 %v3329
    %3365 = vmatprep.subr.mxu0 0.0
    %3366 = vmatpush1.msra.mxu0 %v3330
    %3367 = vmatprep.subr.mxu0 0.0
    %3368 = vmatpush1.msra.mxu0 %v3331
    %3369 = vmatprep.subr.mxu0 0.0
    %3370 = vmatpush1.msra.mxu0 %v3332
    %3371 = vmatprep.subr.mxu0 0.0
    %3372 = vmatpush1.msra.mxu0 %v3333
    %3373 = vmatprep.subr.mxu0 0.0
    %3374 = vmatpush1.msra.mxu0 0.0
    %3375 = vmatprep.subr.mxu0 0.0
    %3376 = vmatpush1.msra.mxu0 0.0
    %3377 = vmatprep.subr.mxu0 0.0
    %3378 = vmatpush1.msra.mxu0 0.0
    %3379 = vmatprep.subr.mxu0 0.0
    %3380 = vmatpush1.msra.mxu0 0.0
    %3381 = vmatprep.subr.mxu0 0.0
    %3382 = vmatpush1.msra.mxu0 0.0
    %3383 = vmatprep.subr.mxu0 0.0
    %3384 = vmatpush1.msra.mxu0 0.0
    %3385 = vmatprep.subr.mxu0 0.0
    %3386 = vmatpush1.msra.mxu0 0.0
    %3387 = vmatprep.subr.mxu0 0.0
    %3388 = vmatpush1.msra.mxu0 0.0
    %3389 = vmatprep.subr.mxu0 0.0
    %3390 = vmatpush1.msra.mxu0 0.0
    %3391 = vmatprep.subr.mxu0 0.0
    %3392 = vmatpush1.msra.mxu0 0.0
    %3393 = vmatprep.subr.mxu0 0.0
    %3394 = vmatpush1.msra.mxu0 0.0
    %3395 = vmatprep.subr.mxu0 0.0
    %3396 = vmatpush1.msra.mxu0 0.0
    %3397 = vmatprep.subr.mxu0 0.0
    %3398 = vmatpush1.msra.mxu0 0.0
    %3399 = vmatprep.subr.mxu0 0.0
    %3400 = vmatpush1.msra.mxu0 0.0
    %3401 = vmatprep.subr.mxu0 0.0
    %3402 = vmatpush1.msra.mxu0 0.0
    %3403 = vmatprep.subr.mxu0 0.0
    %3404 = vmatpush1.msra.mxu0 0.0
    %3405 = vmatprep.mubr.f32.mxu0 0.0
    %3406 = vmatmul.mubr.f32.gmra.mrb[0].mxu0 %v3317
    %v3407 = vpop.f32.mrb[0].mxu0
    %v3408 = vadd.f32 %v3339, %v3407
    %v3409 = vpop.f32.mrb[0].mxu0
    %3410 = vdwg.mxu0
    %3411 = vst [vmem:[#allocation11] sm:$0xff] %v3408
    // Predicated region
    $region46: #{tpu_custom_call.1} parent=1 // pred_check
      _
    $region47: #{tpu_custom_call.1} parent=1 // pred_check_branch
      %3413 = sbr.rel (0) target = $region49
    $region48: #{tpu_custom_call.1} parent=1 // pred_region
      %s3415 = ssub.s32 128, 128
      %3416 = vsyncadd [#allocation5], %s3415
      %s3418 = sshll.u32 [#allocation11], 4
      %s3419 = int_to_ptr.vmem [resolvable:$true] %s3418
      %3421 = dma.vmem_to_hbm [thread:$0]  %s3419, 128, %s7, [#allocation5]
    $region49: #{tpu_custom_call.1} parent=1 // pred_fallthru
      _
    // Predicated region
    $region50: #{tpu_custom_call.1} parent=1 // pred_check
      _
    $region51: #{tpu_custom_call.1} parent=1 // pred_check_branch
      %3423 = sbr.rel (0) target = $region53
    $region52: #{tpu_custom_call.1} parent=1 // pred_region
      %3424 = dma.done [#allocation5], 128
    $region53: #{tpu_custom_call.1} parent=1 // pred_fallthru
      _
    %3425 = vsyncpa [#allocation4], 1
    %3426 = vsyncpa [#allocation7], 1
    %3427 = vsyncpa [#allocation10], 1
    %3428 = vsyncpa [#allocation5], 1

</llo_original>
